<compile_context>
chip_gen: v7x
topology: tpu7x:2x2x1
jax: 0.10.0
libtpu: 0.0.40
codegen_flags: <defaults>
</compile_context>

<pallas_src>
import functools

import jax
import jax.numpy as jnp
from jax import lax
from jax.experimental import pallas as pl
from jax.experimental.pallas import tpu as pltpu


def _fused_conv_stack_kernel(*refs, H, W, channels):
    """Whole embed-layer stack (3x3 conv + bias + ReLU per layer), fused.

    refs layout (n = number of layers):
      refs[0]          : x_ref VMEM (B, C0, H*W)          flattened NCHW image
      refs[1 : 1+2n]   : w_i VMEM (9*Ci, C(i+1), 1), b_i VMEM (C(i+1), 1)
      refs[1+2n]       : o_ref VMEM (B, Cn, H*W)
    """
    n_layers = len(channels) - 1
    x_ref = refs[0]
    wb_refs = refs[1:1 + 2 * n_layers]
    o_ref = refs[1 + 2 * n_layers]

    B = x_ref.shape[0]
    HW = H * W
    c_max = max(channels[:-1])

    # ---- per-tap validity masks over the flattened hw = h*W + w axis --------
    # Built ONCE at the widest (1, c_max, HW) sublane width; per layer we take
    # a static [:, :cin, :] sublane slice.  The remaining leading-B broadcast
    # inside jnp.where is register reuse, not a relayout.
    # (W is a power of two, so //W and %W are a shift and a bitwise-and.)
    hw = lax.broadcasted_iota(jnp.int32, (1, c_max, HW), 2)
    h_idx = hw >> (W.bit_length() - 1)      # hw // W
    w_idx = hw & (W - 1)                    # hw %  W
    taps = []                               # (flat lane offset, valid mask)
    for di in (-1, 0, 1):
        for dj in (-1, 0, 1):
            if di == 0 and dj == 0:
                taps.append((0, None))      # centre tap: always valid
                continue
            valid = ((h_idx + di >= 0) & (h_idx + di < H) &
                     (w_idx + dj >= 0) & (w_idx + dj < W))
            taps.append((di * W + dj, valid))

    act = x_ref[...]                        # (B, C0, HW) f32, lives in vregs

    # ---- run the layer stack -------------------------------------------------
    for layer in range(n_layers):
        cin, cout = channels[layer], channels[layer + 1]
        w_ref, b_ref = wb_refs[2 * layer], wb_refs[2 * layer + 1]

        # Sublane-dense accumulator (cout on sublanes), 3 partials for ILP,
        # bias folded into partial 0 (no extra vector adds).
        b_col = b_ref[...][None]            # (1, cout, 1)
        parts = [jnp.broadcast_to(b_col, (B, cout, HW)),
                 jnp.zeros((B, cout, HW), jnp.float32),
                 jnp.zeros((B, cout, HW), jnp.float32)]

        for t, (off, valid) in enumerate(taps):
            if off == 0:
                shifted = act
            else:
                # shifted[..., i] = act[..., i + off] (circular XLU lane roll);
                # the mask zeroes every wrapped / out-of-image lane, so the
                # result matches a zero-padded 3x3 conv exactly.  The select
                # only ever consumes real, finite activation data.
                shifted = pltpu.roll(act, shift=(-off) % HW, axis=2)
                shifted = jnp.where(valid[:, :cin, :], shifted, 0.0)
            part = parts[t // 3]
            for ci in range(cin):
                # (1, cout, 1) weight column -> one FMA updates all cout output
                # channels at full sublane density.
                w_col = w_ref[t * cin + ci][None]
                part = part + w_col * shifted[:, ci:ci + 1, :]
            parts[t // 3] = part

        act = jnp.maximum((parts[0] + parts[1]) + parts[2], 0.0)   # ReLU

    o_ref[...] = act                        # one dense, unmasked store


def custom_model_forward(image_nchw, params):
    """CustomModel.forward: apply each embed layer in sequence (one fused kernel).

    image_nchw: (B, C, H, W) to match the PyTorch NCHW convention.
    params: list of (w_hwio (3,3,Cin,Cout), b (Cout,)) per embed layer.
    """
    B, C_in, H, W = image_nchw.shape
    channels = [C_in] + [w.shape[-1] for w, _ in params]
    n_layers = len(params)
    HW = H * W

    assert W & (W - 1) == 0 and W >= 2, \
        "flattened-hw mask trick assumes W is a power of two"
    # TODO(synk): non-power-of-two W needs an integer-division mask path.

    # Pure flatten of the spatial axes (NCHW order preserved).  NOTE: this is a
    # minor-dim tiling change (W-lane -> HW-lane) so XLA inserts one small
    # relayout copy before the kernel; negligible at this size.
    x_flat = image_nchw.astype(jnp.float32).reshape(B, C_in, HW)

    flat_wb = []
    for w, b in params:
        cin, cout = w.shape[2], w.shape[3]
        # (3,3,cin,cout) -> (9*cin, cout, 1): tap-major rows, cout on the
        # sublane axis, so the kernel reads ready-made (cout,1) weight columns.
        flat_wb.append(w.astype(jnp.float32).reshape(9 * cin, cout)[:, :, None])
        flat_wb.append(b.astype(jnp.float32).reshape(cout, 1))

    kernel = functools.partial(
        _fused_conv_stack_kernel, H=H, W=W, channels=tuple(channels))

    out = pl.pallas_call(
        kernel,
        out_shape=jax.ShapeDtypeStruct((B, channels[-1], HW), jnp.float32),
        in_specs=[pl.BlockSpec(memory_space=pltpu.MemorySpace.VMEM)
                  for _ in range(1 + 2 * n_layers)],
        out_specs=pl.BlockSpec(memory_space=pltpu.MemorySpace.VMEM),
    )(x_flat, *flat_wb)

    return out.reshape(B, channels[-1], H, W)           # free reshape back to NCHW


def _reference_forward(image_nchw, params):
    """Plain-JAX reference (Conv2d 3x3 pad=1 + ReLU per layer)."""
    y = image_nchw
    for w, b in params:
        y = lax.conv_general_dilated(
            y, w, window_strides=(1, 1), padding="SAME",
            dimension_numbers=("NCHW", "HWIO", "NCHW"))
        y = jnp.maximum(y + b.reshape(1, -1, 1, 1), 0.0)
    return y


def init_params(key, channels):
    """Deterministic init of the embed-layer conv weights/biases (HWIO)."""
    params = []
    for cin, cout in zip(channels[:-1], channels[1:]):
        key, kw, kb = jax.random.split(key, 3)
        fan_in = 3 * 3 * cin
        w = jax.random.normal(kw, (3, 3, cin, cout), jnp.float32) / jnp.sqrt(fan_in)
        b = 0.01 * jax.random.normal(kb, (cout,), jnp.float32)
        params.append((w, b))
    return params


if __name__ == "__main__":
    key = jax.random.PRNGKey(0)
    k_img, k_par = jax.random.split(key)

    B, C, H, W = 2, 4, 16, 16
    image = jax.random.normal(k_img, (B, C, H, W), jnp.float32)   # NCHW input

    # Two embed layers: 4 -> 8 -> 4 channels.
    params = init_params(k_par, channels=[C, 8, 4])

    fwd = jax.jit(functools.partial(custom_model_forward, params=params))
    out = jax.block_until_ready(fwd(image))

    assert out.shape == (B, 4, H, W), out.shape
    assert bool(jnp.all(jnp.isfinite(out)))

    ref = _reference_forward(image, params)
    max_err = float(jnp.max(jnp.abs(out - ref)))
    assert jnp.allclose(out, ref, rtol=1e-4, atol=1e-4), max_err

    print("KERNEL_OK")
</pallas_src>

<mosaic_0001>
module attributes {stable_mosaic.version = 11 : i64} {
  func.func @_fused_conv_stack_kernel(%arg0: memref<2x4x256xf32, #tpu.memory_space<vmem>>, %arg1: memref<36x8x1xf32, #tpu.memory_space<vmem>>, %arg2: memref<8x1xf32, #tpu.memory_space<vmem>>, %arg3: memref<72x4x1xf32, #tpu.memory_space<vmem>>, %arg4: memref<4x1xf32, #tpu.memory_space<vmem>>, %arg5: memref<2x4x256xf32, #tpu.memory_space<vmem>>) attributes {dimension_semantics = [], scalar_prefetch = 0 : i64, scratch_operands = 0 : i64, tpu.core_type = #tpu.core_type<tc>} {
    %0 = tpu.iota {dimensions = array<i32: 2>} : vector<1x8x256xi32>
    %c4_i32 = arith.constant 4 : i32
    %1 = vector.broadcast %c4_i32 : i32 to vector<1x8x256xi32>
    %2 = arith.shrsi %0, %1 : vector<1x8x256xi32>
    %c15_i32 = arith.constant 15 : i32
    %3 = vector.broadcast %c15_i32 : i32 to vector<1x8x256xi32>
    %4 = arith.andi %0, %3 : vector<1x8x256xi32>
    %c-1_i32 = arith.constant -1 : i32
    %5 = vector.broadcast %c-1_i32 : i32 to vector<1x8x256xi32>
    %6 = arith.addi %2, %5 : vector<1x8x256xi32>
    %c0_i32 = arith.constant 0 : i32
    %7 = vector.broadcast %c0_i32 : i32 to vector<1x8x256xi32>
    %8 = arith.cmpi sge, %6, %7 : vector<1x8x256xi32>
    %c-1_i32_0 = arith.constant -1 : i32
    %9 = vector.broadcast %c-1_i32_0 : i32 to vector<1x8x256xi32>
    %10 = arith.addi %2, %9 : vector<1x8x256xi32>
    %c16_i32 = arith.constant 16 : i32
    %11 = vector.broadcast %c16_i32 : i32 to vector<1x8x256xi32>
    %12 = arith.cmpi slt, %10, %11 : vector<1x8x256xi32>
    %13 = arith.andi %8, %12 : vector<1x8x256xi1>
    %c-1_i32_1 = arith.constant -1 : i32
    %14 = vector.broadcast %c-1_i32_1 : i32 to vector<1x8x256xi32>
    %15 = arith.addi %4, %14 : vector<1x8x256xi32>
    %c0_i32_2 = arith.constant 0 : i32
    %16 = vector.broadcast %c0_i32_2 : i32 to vector<1x8x256xi32>
    %17 = arith.cmpi sge, %15, %16 : vector<1x8x256xi32>
    %18 = arith.andi %13, %17 : vector<1x8x256xi1>
    %c-1_i32_3 = arith.constant -1 : i32
    %19 = vector.broadcast %c-1_i32_3 : i32 to vector<1x8x256xi32>
    %20 = arith.addi %4, %19 : vector<1x8x256xi32>
    %c16_i32_4 = arith.constant 16 : i32
    %21 = vector.broadcast %c16_i32_4 : i32 to vector<1x8x256xi32>
    %22 = arith.cmpi slt, %20, %21 : vector<1x8x256xi32>
    %23 = arith.andi %18, %22 : vector<1x8x256xi1>
    %c-1_i32_5 = arith.constant -1 : i32
    %24 = vector.broadcast %c-1_i32_5 : i32 to vector<1x8x256xi32>
    %25 = arith.addi %2, %24 : vector<1x8x256xi32>
    %c0_i32_6 = arith.constant 0 : i32
    %26 = vector.broadcast %c0_i32_6 : i32 to vector<1x8x256xi32>
    %27 = arith.cmpi sge, %25, %26 : vector<1x8x256xi32>
    %c-1_i32_7 = arith.constant -1 : i32
    %28 = vector.broadcast %c-1_i32_7 : i32 to vector<1x8x256xi32>
    %29 = arith.addi %2, %28 : vector<1x8x256xi32>
    %c16_i32_8 = arith.constant 16 : i32
    %30 = vector.broadcast %c16_i32_8 : i32 to vector<1x8x256xi32>
    %31 = arith.cmpi slt, %29, %30 : vector<1x8x256xi32>
    %32 = arith.andi %27, %31 : vector<1x8x256xi1>
    %c0_i32_9 = arith.constant 0 : i32
    %33 = vector.broadcast %c0_i32_9 : i32 to vector<1x8x256xi32>
    %34 = arith.addi %4, %33 : vector<1x8x256xi32>
    %c0_i32_10 = arith.constant 0 : i32
    %35 = vector.broadcast %c0_i32_10 : i32 to vector<1x8x256xi32>
    %36 = arith.cmpi sge, %34, %35 : vector<1x8x256xi32>
    %37 = arith.andi %32, %36 : vector<1x8x256xi1>
    %c0_i32_11 = arith.constant 0 : i32
    %38 = vector.broadcast %c0_i32_11 : i32 to vector<1x8x256xi32>
    %39 = arith.addi %4, %38 : vector<1x8x256xi32>
    %c16_i32_12 = arith.constant 16 : i32
    %40 = vector.broadcast %c16_i32_12 : i32 to vector<1x8x256xi32>
    %41 = arith.cmpi slt, %39, %40 : vector<1x8x256xi32>
    %42 = arith.andi %37, %41 : vector<1x8x256xi1>
    %c-1_i32_13 = arith.constant -1 : i32
    %43 = vector.broadcast %c-1_i32_13 : i32 to vector<1x8x256xi32>
    %44 = arith.addi %2, %43 : vector<1x8x256xi32>
    %c0_i32_14 = arith.constant 0 : i32
    %45 = vector.broadcast %c0_i32_14 : i32 to vector<1x8x256xi32>
    %46 = arith.cmpi sge, %44, %45 : vector<1x8x256xi32>
    %c-1_i32_15 = arith.constant -1 : i32
    %47 = vector.broadcast %c-1_i32_15 : i32 to vector<1x8x256xi32>
    %48 = arith.addi %2, %47 : vector<1x8x256xi32>
    %c16_i32_16 = arith.constant 16 : i32
    %49 = vector.broadcast %c16_i32_16 : i32 to vector<1x8x256xi32>
    %50 = arith.cmpi slt, %48, %49 : vector<1x8x256xi32>
    %51 = arith.andi %46, %50 : vector<1x8x256xi1>
    %c1_i32 = arith.constant 1 : i32
    %52 = vector.broadcast %c1_i32 : i32 to vector<1x8x256xi32>
    %53 = arith.addi %4, %52 : vector<1x8x256xi32>
    %c0_i32_17 = arith.constant 0 : i32
    %54 = vector.broadcast %c0_i32_17 : i32 to vector<1x8x256xi32>
    %55 = arith.cmpi sge, %53, %54 : vector<1x8x256xi32>
    %56 = arith.andi %51, %55 : vector<1x8x256xi1>
    %c1_i32_18 = arith.constant 1 : i32
    %57 = vector.broadcast %c1_i32_18 : i32 to vector<1x8x256xi32>
    %58 = arith.addi %4, %57 : vector<1x8x256xi32>
    %c16_i32_19 = arith.constant 16 : i32
    %59 = vector.broadcast %c16_i32_19 : i32 to vector<1x8x256xi32>
    %60 = arith.cmpi slt, %58, %59 : vector<1x8x256xi32>
    %61 = arith.andi %56, %60 : vector<1x8x256xi1>
    %c0_i32_20 = arith.constant 0 : i32
    %62 = vector.broadcast %c0_i32_20 : i32 to vector<1x8x256xi32>
    %63 = arith.addi %2, %62 : vector<1x8x256xi32>
    %c0_i32_21 = arith.constant 0 : i32
    %64 = vector.broadcast %c0_i32_21 : i32 to vector<1x8x256xi32>
    %65 = arith.cmpi sge, %63, %64 : vector<1x8x256xi32>
    %c0_i32_22 = arith.constant 0 : i32
    %66 = vector.broadcast %c0_i32_22 : i32 to vector<1x8x256xi32>
    %67 = arith.addi %2, %66 : vector<1x8x256xi32>
    %c16_i32_23 = arith.constant 16 : i32
    %68 = vector.broadcast %c16_i32_23 : i32 to vector<1x8x256xi32>
    %69 = arith.cmpi slt, %67, %68 : vector<1x8x256xi32>
    %70 = arith.andi %65, %69 : vector<1x8x256xi1>
    %c-1_i32_24 = arith.constant -1 : i32
    %71 = vector.broadcast %c-1_i32_24 : i32 to vector<1x8x256xi32>
    %72 = arith.addi %4, %71 : vector<1x8x256xi32>
    %c0_i32_25 = arith.constant 0 : i32
    %73 = vector.broadcast %c0_i32_25 : i32 to vector<1x8x256xi32>
    %74 = arith.cmpi sge, %72, %73 : vector<1x8x256xi32>
    %75 = arith.andi %70, %74 : vector<1x8x256xi1>
    %c-1_i32_26 = arith.constant -1 : i32
    %76 = vector.broadcast %c-1_i32_26 : i32 to vector<1x8x256xi32>
    %77 = arith.addi %4, %76 : vector<1x8x256xi32>
    %c16_i32_27 = arith.constant 16 : i32
    %78 = vector.broadcast %c16_i32_27 : i32 to vector<1x8x256xi32>
    %79 = arith.cmpi slt, %77, %78 : vector<1x8x256xi32>
    %80 = arith.andi %75, %79 : vector<1x8x256xi1>
    %c0_i32_28 = arith.constant 0 : i32
    %81 = vector.broadcast %c0_i32_28 : i32 to vector<1x8x256xi32>
    %82 = arith.addi %2, %81 : vector<1x8x256xi32>
    %c0_i32_29 = arith.constant 0 : i32
    %83 = vector.broadcast %c0_i32_29 : i32 to vector<1x8x256xi32>
    %84 = arith.cmpi sge, %82, %83 : vector<1x8x256xi32>
    %c0_i32_30 = arith.constant 0 : i32
    %85 = vector.broadcast %c0_i32_30 : i32 to vector<1x8x256xi32>
    %86 = arith.addi %2, %85 : vector<1x8x256xi32>
    %c16_i32_31 = arith.constant 16 : i32
    %87 = vector.broadcast %c16_i32_31 : i32 to vector<1x8x256xi32>
    %88 = arith.cmpi slt, %86, %87 : vector<1x8x256xi32>
    %89 = arith.andi %84, %88 : vector<1x8x256xi1>
    %c1_i32_32 = arith.constant 1 : i32
    %90 = vector.broadcast %c1_i32_32 : i32 to vector<1x8x256xi32>
    %91 = arith.addi %4, %90 : vector<1x8x256xi32>
    %c0_i32_33 = arith.constant 0 : i32
    %92 = vector.broadcast %c0_i32_33 : i32 to vector<1x8x256xi32>
    %93 = arith.cmpi sge, %91, %92 : vector<1x8x256xi32>
    %94 = arith.andi %89, %93 : vector<1x8x256xi1>
    %c1_i32_34 = arith.constant 1 : i32
    %95 = vector.broadcast %c1_i32_34 : i32 to vector<1x8x256xi32>
    %96 = arith.addi %4, %95 : vector<1x8x256xi32>
    %c16_i32_35 = arith.constant 16 : i32
    %97 = vector.broadcast %c16_i32_35 : i32 to vector<1x8x256xi32>
    %98 = arith.cmpi slt, %96, %97 : vector<1x8x256xi32>
    %99 = arith.andi %94, %98 : vector<1x8x256xi1>
    %c1_i32_36 = arith.constant 1 : i32
    %100 = vector.broadcast %c1_i32_36 : i32 to vector<1x8x256xi32>
    %101 = arith.addi %2, %100 : vector<1x8x256xi32>
    %c0_i32_37 = arith.constant 0 : i32
    %102 = vector.broadcast %c0_i32_37 : i32 to vector<1x8x256xi32>
    %103 = arith.cmpi sge, %101, %102 : vector<1x8x256xi32>
    %c1_i32_38 = arith.constant 1 : i32
    %104 = vector.broadcast %c1_i32_38 : i32 to vector<1x8x256xi32>
    %105 = arith.addi %2, %104 : vector<1x8x256xi32>
    %c16_i32_39 = arith.constant 16 : i32
    %106 = vector.broadcast %c16_i32_39 : i32 to vector<1x8x256xi32>
    %107 = arith.cmpi slt, %105, %106 : vector<1x8x256xi32>
    %108 = arith.andi %103, %107 : vector<1x8x256xi1>
    %c-1_i32_40 = arith.constant -1 : i32
    %109 = vector.broadcast %c-1_i32_40 : i32 to vector<1x8x256xi32>
    %110 = arith.addi %4, %109 : vector<1x8x256xi32>
    %c0_i32_41 = arith.constant 0 : i32
    %111 = vector.broadcast %c0_i32_41 : i32 to vector<1x8x256xi32>
    %112 = arith.cmpi sge, %110, %111 : vector<1x8x256xi32>
    %113 = arith.andi %108, %112 : vector<1x8x256xi1>
    %c-1_i32_42 = arith.constant -1 : i32
    %114 = vector.broadcast %c-1_i32_42 : i32 to vector<1x8x256xi32>
    %115 = arith.addi %4, %114 : vector<1x8x256xi32>
    %c16_i32_43 = arith.constant 16 : i32
    %116 = vector.broadcast %c16_i32_43 : i32 to vector<1x8x256xi32>
    %117 = arith.cmpi slt, %115, %116 : vector<1x8x256xi32>
    %118 = arith.andi %113, %117 : vector<1x8x256xi1>
    %c1_i32_44 = arith.constant 1 : i32
    %119 = vector.broadcast %c1_i32_44 : i32 to vector<1x8x256xi32>
    %120 = arith.addi %2, %119 : vector<1x8x256xi32>
    %c0_i32_45 = arith.constant 0 : i32
    %121 = vector.broadcast %c0_i32_45 : i32 to vector<1x8x256xi32>
    %122 = arith.cmpi sge, %120, %121 : vector<1x8x256xi32>
    %c1_i32_46 = arith.constant 1 : i32
    %123 = vector.broadcast %c1_i32_46 : i32 to vector<1x8x256xi32>
    %124 = arith.addi %2, %123 : vector<1x8x256xi32>
    %c16_i32_47 = arith.constant 16 : i32
    %125 = vector.broadcast %c16_i32_47 : i32 to vector<1x8x256xi32>
    %126 = arith.cmpi slt, %124, %125 : vector<1x8x256xi32>
    %127 = arith.andi %122, %126 : vector<1x8x256xi1>
    %c0_i32_48 = arith.constant 0 : i32
    %128 = vector.broadcast %c0_i32_48 : i32 to vector<1x8x256xi32>
    %129 = arith.addi %4, %128 : vector<1x8x256xi32>
    %c0_i32_49 = arith.constant 0 : i32
    %130 = vector.broadcast %c0_i32_49 : i32 to vector<1x8x256xi32>
    %131 = arith.cmpi sge, %129, %130 : vector<1x8x256xi32>
    %132 = arith.andi %127, %131 : vector<1x8x256xi1>
    %c0_i32_50 = arith.constant 0 : i32
    %133 = vector.broadcast %c0_i32_50 : i32 to vector<1x8x256xi32>
    %134 = arith.addi %4, %133 : vector<1x8x256xi32>
    %c16_i32_51 = arith.constant 16 : i32
    %135 = vector.broadcast %c16_i32_51 : i32 to vector<1x8x256xi32>
    %136 = arith.cmpi slt, %134, %135 : vector<1x8x256xi32>
    %137 = arith.andi %132, %136 : vector<1x8x256xi1>
    %c1_i32_52 = arith.constant 1 : i32
    %138 = vector.broadcast %c1_i32_52 : i32 to vector<1x8x256xi32>
    %139 = arith.addi %2, %138 : vector<1x8x256xi32>
    %c0_i32_53 = arith.constant 0 : i32
    %140 = vector.broadcast %c0_i32_53 : i32 to vector<1x8x256xi32>
    %141 = arith.cmpi sge, %139, %140 : vector<1x8x256xi32>
    %c1_i32_54 = arith.constant 1 : i32
    %142 = vector.broadcast %c1_i32_54 : i32 to vector<1x8x256xi32>
    %143 = arith.addi %2, %142 : vector<1x8x256xi32>
    %c16_i32_55 = arith.constant 16 : i32
    %144 = vector.broadcast %c16_i32_55 : i32 to vector<1x8x256xi32>
    %145 = arith.cmpi slt, %143, %144 : vector<1x8x256xi32>
    %146 = arith.andi %141, %145 : vector<1x8x256xi1>
    %c1_i32_56 = arith.constant 1 : i32
    %147 = vector.broadcast %c1_i32_56 : i32 to vector<1x8x256xi32>
    %148 = arith.addi %4, %147 : vector<1x8x256xi32>
    %c0_i32_57 = arith.constant 0 : i32
    %149 = vector.broadcast %c0_i32_57 : i32 to vector<1x8x256xi32>
    %150 = arith.cmpi sge, %148, %149 : vector<1x8x256xi32>
    %151 = arith.andi %146, %150 : vector<1x8x256xi1>
    %c1_i32_58 = arith.constant 1 : i32
    %152 = vector.broadcast %c1_i32_58 : i32 to vector<1x8x256xi32>
    %153 = arith.addi %4, %152 : vector<1x8x256xi32>
    %c16_i32_59 = arith.constant 16 : i32
    %154 = vector.broadcast %c16_i32_59 : i32 to vector<1x8x256xi32>
    %155 = arith.cmpi slt, %153, %154 : vector<1x8x256xi32>
    %156 = arith.andi %151, %155 : vector<1x8x256xi1>
    %c0 = arith.constant 0 : index
    %c0_60 = arith.constant 0 : index
    %c0_61 = arith.constant 0 : index
    %157 = vector.load %arg0[%c0, %c0_60, %c0_61] : memref<2x4x256xf32, #tpu.memory_space<vmem>>, vector<2x4x256xf32>
    %c0_62 = arith.constant 0 : index
    %c0_63 = arith.constant 0 : index
    %158 = vector.load %arg2[%c0_62, %c0_63] : memref<8x1xf32, #tpu.memory_space<vmem>>, vector<8x1xf32>
    %159 = vector.shape_cast %158 : vector<8x1xf32> to vector<1x8x1xf32>
    %160 = vector.shape_cast %159 : vector<1x8x1xf32> to vector<1x8x1xf32>
    %161 = vector.broadcast %160 : vector<1x8x1xf32> to vector<2x8x256xf32>
    %cst = arith.constant 0.000000e+00 : f32
    %162 = vector.broadcast %cst : f32 to vector<2x8x256xf32>
    %cst_64 = arith.constant 0.000000e+00 : f32
    %163 = vector.broadcast %cst_64 : f32 to vector<2x8x256xf32>
    %c17_i32 = arith.constant 17 : i32
    %164 = tpu.dynamic_rotate %157 by %c17_i32 dim 2 : vector<2x4x256xf32>, i32 -> vector<2x4x256xf32>
    %165 = vector.extract_strided_slice %23 {offsets = [0, 0, 0], sizes = [1, 4, 256], strides = [1, 1, 1]} : vector<1x8x256xi1> to vector<1x4x256xi1>
    %cst_65 = arith.constant 0.000000e+00 : f32
    %166 = vector.shape_cast %165 : vector<1x4x256xi1> to vector<1x4x256xi1>
    %167 = vector.broadcast %166 : vector<1x4x256xi1> to vector<2x4x256xi1>
    %168 = vector.broadcast %cst_65 : f32 to vector<2x4x256xf32>
    %169 = arith.select %167, %164, %168 : vector<2x4x256xi1>, vector<2x4x256xf32>
    %c0_66 = arith.constant 0 : index
    %c0_67 = arith.constant 0 : index
    %c0_68 = arith.constant 0 : index
    %170 = vector.load %arg1[%c0_66, %c0_67, %c0_68] : memref<36x8x1xf32, #tpu.memory_space<vmem>>, vector<1x8x1xf32>
    %171 = vector.shape_cast %170 : vector<1x8x1xf32> to vector<8x1xf32>
    %172 = vector.shape_cast %171 : vector<8x1xf32> to vector<1x8x1xf32>
    %173 = vector.extract_strided_slice %169 {offsets = [0, 0, 0], sizes = [2, 1, 256], strides = [1, 1, 1]} : vector<2x4x256xf32> to vector<2x1x256xf32>
    %174 = vector.broadcast %172 : vector<1x8x1xf32> to vector<2x8x256xf32>
    %175 = vector.broadcast %173 : vector<2x1x256xf32> to vector<2x8x256xf32>
    %176 = arith.mulf %174, %175 : vector<2x8x256xf32>
    %177 = arith.addf %161, %176 : vector<2x8x256xf32>
    %c1 = arith.constant 1 : index
    %c0_69 = arith.constant 0 : index
    %c0_70 = arith.constant 0 : index
    %178 = vector.load %arg1[%c1, %c0_69, %c0_70] : memref<36x8x1xf32, #tpu.memory_space<vmem>>, vector<1x8x1xf32>
    %179 = vector.shape_cast %178 : vector<1x8x1xf32> to vector<8x1xf32>
    %180 = vector.shape_cast %179 : vector<8x1xf32> to vector<1x8x1xf32>
    %181 = vector.extract_strided_slice %169 {offsets = [0, 1, 0], sizes = [2, 1, 256], strides = [1, 1, 1]} : vector<2x4x256xf32> to vector<2x1x256xf32>
    %182 = vector.broadcast %180 : vector<1x8x1xf32> to vector<2x8x256xf32>
    %183 = vector.broadcast %181 : vector<2x1x256xf32> to vector<2x8x256xf32>
    %184 = arith.mulf %182, %183 : vector<2x8x256xf32>
    %185 = arith.addf %177, %184 : vector<2x8x256xf32>
    %c2 = arith.constant 2 : index
    %c0_71 = arith.constant 0 : index
    %c0_72 = arith.constant 0 : index
    %186 = vector.load %arg1[%c2, %c0_71, %c0_72] : memref<36x8x1xf32, #tpu.memory_space<vmem>>, vector<1x8x1xf32>
    %187 = vector.shape_cast %186 : vector<1x8x1xf32> to vector<8x1xf32>
    %188 = vector.shape_cast %187 : vector<8x1xf32> to vector<1x8x1xf32>
    %189 = vector.extract_strided_slice %169 {offsets = [0, 2, 0], sizes = [2, 1, 256], strides = [1, 1, 1]} : vector<2x4x256xf32> to vector<2x1x256xf32>
    %190 = vector.broadcast %188 : vector<1x8x1xf32> to vector<2x8x256xf32>
    %191 = vector.broadcast %189 : vector<2x1x256xf32> to vector<2x8x256xf32>
    %192 = arith.mulf %190, %191 : vector<2x8x256xf32>
    %193 = arith.addf %185, %192 : vector<2x8x256xf32>
    %c3 = arith.constant 3 : index
    %c0_73 = arith.constant 0 : index
    %c0_74 = arith.constant 0 : index
    %194 = vector.load %arg1[%c3, %c0_73, %c0_74] : memref<36x8x1xf32, #tpu.memory_space<vmem>>, vector<1x8x1xf32>
    %195 = vector.shape_cast %194 : vector<1x8x1xf32> to vector<8x1xf32>
    %196 = vector.shape_cast %195 : vector<8x1xf32> to vector<1x8x1xf32>
    %197 = vector.extract_strided_slice %169 {offsets = [0, 3, 0], sizes = [2, 1, 256], strides = [1, 1, 1]} : vector<2x4x256xf32> to vector<2x1x256xf32>
    %198 = vector.broadcast %196 : vector<1x8x1xf32> to vector<2x8x256xf32>
    %199 = vector.broadcast %197 : vector<2x1x256xf32> to vector<2x8x256xf32>
    %200 = arith.mulf %198, %199 : vector<2x8x256xf32>
    %201 = arith.addf %193, %200 : vector<2x8x256xf32>
    %c16_i32_75 = arith.constant 16 : i32
    %202 = tpu.dynamic_rotate %157 by %c16_i32_75 dim 2 : vector<2x4x256xf32>, i32 -> vector<2x4x256xf32>
    %203 = vector.extract_strided_slice %42 {offsets = [0, 0, 0], sizes = [1, 4, 256], strides = [1, 1, 1]} : vector<1x8x256xi1> to vector<1x4x256xi1>
    %cst_76 = arith.constant 0.000000e+00 : f32
    %204 = vector.shape_cast %203 : vector<1x4x256xi1> to vector<1x4x256xi1>
    %205 = vector.broadcast %204 : vector<1x4x256xi1> to vector<2x4x256xi1>
    %206 = vector.broadcast %cst_76 : f32 to vector<2x4x256xf32>
    %207 = arith.select %205, %202, %206 : vector<2x4x256xi1>, vector<2x4x256xf32>
    %c4 = arith.constant 4 : index
    %c0_77 = arith.constant 0 : index
    %c0_78 = arith.constant 0 : index
    %208 = vector.load %arg1[%c4, %c0_77, %c0_78] : memref<36x8x1xf32, #tpu.memory_space<vmem>>, vector<1x8x1xf32>
    %209 = vector.shape_cast %208 : vector<1x8x1xf32> to vector<8x1xf32>
    %210 = vector.shape_cast %209 : vector<8x1xf32> to vector<1x8x1xf32>
    %211 = vector.extract_strided_slice %207 {offsets = [0, 0, 0], sizes = [2, 1, 256], strides = [1, 1, 1]} : vector<2x4x256xf32> to vector<2x1x256xf32>
    %212 = vector.broadcast %210 : vector<1x8x1xf32> to vector<2x8x256xf32>
    %213 = vector.broadcast %211 : vector<2x1x256xf32> to vector<2x8x256xf32>
    %214 = arith.mulf %212, %213 : vector<2x8x256xf32>
    %215 = arith.addf %201, %214 : vector<2x8x256xf32>
    %c5 = arith.constant 5 : index
    %c0_79 = arith.constant 0 : index
    %c0_80 = arith.constant 0 : index
    %216 = vector.load %arg1[%c5, %c0_79, %c0_80] : memref<36x8x1xf32, #tpu.memory_space<vmem>>, vector<1x8x1xf32>
    %217 = vector.shape_cast %216 : vector<1x8x1xf32> to vector<8x1xf32>
    %218 = vector.shape_cast %217 : vector<8x1xf32> to vector<1x8x1xf32>
    %219 = vector.extract_strided_slice %207 {offsets = [0, 1, 0], sizes = [2, 1, 256], strides = [1, 1, 1]} : vector<2x4x256xf32> to vector<2x1x256xf32>
    %220 = vector.broadcast %218 : vector<1x8x1xf32> to vector<2x8x256xf32>
    %221 = vector.broadcast %219 : vector<2x1x256xf32> to vector<2x8x256xf32>
    %222 = arith.mulf %220, %221 : vector<2x8x256xf32>
    %223 = arith.addf %215, %222 : vector<2x8x256xf32>
    %c6 = arith.constant 6 : index
    %c0_81 = arith.constant 0 : index
    %c0_82 = arith.constant 0 : index
    %224 = vector.load %arg1[%c6, %c0_81, %c0_82] : memref<36x8x1xf32, #tpu.memory_space<vmem>>, vector<1x8x1xf32>
    %225 = vector.shape_cast %224 : vector<1x8x1xf32> to vector<8x1xf32>
    %226 = vector.shape_cast %225 : vector<8x1xf32> to vector<1x8x1xf32>
    %227 = vector.extract_strided_slice %207 {offsets = [0, 2, 0], sizes = [2, 1, 256], strides = [1, 1, 1]} : vector<2x4x256xf32> to vector<2x1x256xf32>
    %228 = vector.broadcast %226 : vector<1x8x1xf32> to vector<2x8x256xf32>
    %229 = vector.broadcast %227 : vector<2x1x256xf32> to vector<2x8x256xf32>
    %230 = arith.mulf %228, %229 : vector<2x8x256xf32>
    %231 = arith.addf %223, %230 : vector<2x8x256xf32>
    %c7 = arith.constant 7 : index
    %c0_83 = arith.constant 0 : index
    %c0_84 = arith.constant 0 : index
    %232 = vector.load %arg1[%c7, %c0_83, %c0_84] : memref<36x8x1xf32, #tpu.memory_space<vmem>>, vector<1x8x1xf32>
    %233 = vector.shape_cast %232 : vector<1x8x1xf32> to vector<8x1xf32>
    %234 = vector.shape_cast %233 : vector<8x1xf32> to vector<1x8x1xf32>
    %235 = vector.extract_strided_slice %207 {offsets = [0, 3, 0], sizes = [2, 1, 256], strides = [1, 1, 1]} : vector<2x4x256xf32> to vector<2x1x256xf32>
    %236 = vector.broadcast %234 : vector<1x8x1xf32> to vector<2x8x256xf32>
    %237 = vector.broadcast %235 : vector<2x1x256xf32> to vector<2x8x256xf32>
    %238 = arith.mulf %236, %237 : vector<2x8x256xf32>
    %239 = arith.addf %231, %238 : vector<2x8x256xf32>
    %c15_i32_85 = arith.constant 15 : i32
    %240 = tpu.dynamic_rotate %157 by %c15_i32_85 dim 2 : vector<2x4x256xf32>, i32 -> vector<2x4x256xf32>
    %241 = vector.extract_strided_slice %61 {offsets = [0, 0, 0], sizes = [1, 4, 256], strides = [1, 1, 1]} : vector<1x8x256xi1> to vector<1x4x256xi1>
    %cst_86 = arith.constant 0.000000e+00 : f32
    %242 = vector.shape_cast %241 : vector<1x4x256xi1> to vector<1x4x256xi1>
    %243 = vector.broadcast %242 : vector<1x4x256xi1> to vector<2x4x256xi1>
    %244 = vector.broadcast %cst_86 : f32 to vector<2x4x256xf32>
    %245 = arith.select %243, %240, %244 : vector<2x4x256xi1>, vector<2x4x256xf32>
    %c8 = arith.constant 8 : index
    %c0_87 = arith.constant 0 : index
    %c0_88 = arith.constant 0 : index
    %246 = vector.load %arg1[%c8, %c0_87, %c0_88] : memref<36x8x1xf32, #tpu.memory_space<vmem>>, vector<1x8x1xf32>
    %247 = vector.shape_cast %246 : vector<1x8x1xf32> to vector<8x1xf32>
    %248 = vector.shape_cast %247 : vector<8x1xf32> to vector<1x8x1xf32>
    %249 = vector.extract_strided_slice %245 {offsets = [0, 0, 0], sizes = [2, 1, 256], strides = [1, 1, 1]} : vector<2x4x256xf32> to vector<2x1x256xf32>
    %250 = vector.broadcast %248 : vector<1x8x1xf32> to vector<2x8x256xf32>
    %251 = vector.broadcast %249 : vector<2x1x256xf32> to vector<2x8x256xf32>
    %252 = arith.mulf %250, %251 : vector<2x8x256xf32>
    %253 = arith.addf %239, %252 : vector<2x8x256xf32>
    %c9 = arith.constant 9 : index
    %c0_89 = arith.constant 0 : index
    %c0_90 = arith.constant 0 : index
    %254 = vector.load %arg1[%c9, %c0_89, %c0_90] : memref<36x8x1xf32, #tpu.memory_space<vmem>>, vector<1x8x1xf32>
    %255 = vector.shape_cast %254 : vector<1x8x1xf32> to vector<8x1xf32>
    %256 = vector.shape_cast %255 : vector<8x1xf32> to vector<1x8x1xf32>
    %257 = vector.extract_strided_slice %245 {offsets = [0, 1, 0], sizes = [2, 1, 256], strides = [1, 1, 1]} : vector<2x4x256xf32> to vector<2x1x256xf32>
    %258 = vector.broadcast %256 : vector<1x8x1xf32> to vector<2x8x256xf32>
    %259 = vector.broadcast %257 : vector<2x1x256xf32> to vector<2x8x256xf32>
    %260 = arith.mulf %258, %259 : vector<2x8x256xf32>
    %261 = arith.addf %253, %260 : vector<2x8x256xf32>
    %c10 = arith.constant 10 : index
    %c0_91 = arith.constant 0 : index
    %c0_92 = arith.constant 0 : index
    %262 = vector.load %arg1[%c10, %c0_91, %c0_92] : memref<36x8x1xf32, #tpu.memory_space<vmem>>, vector<1x8x1xf32>
    %263 = vector.shape_cast %262 : vector<1x8x1xf32> to vector<8x1xf32>
    %264 = vector.shape_cast %263 : vector<8x1xf32> to vector<1x8x1xf32>
    %265 = vector.extract_strided_slice %245 {offsets = [0, 2, 0], sizes = [2, 1, 256], strides = [1, 1, 1]} : vector<2x4x256xf32> to vector<2x1x256xf32>
    %266 = vector.broadcast %264 : vector<1x8x1xf32> to vector<2x8x256xf32>
    %267 = vector.broadcast %265 : vector<2x1x256xf32> to vector<2x8x256xf32>
    %268 = arith.mulf %266, %267 : vector<2x8x256xf32>
    %269 = arith.addf %261, %268 : vector<2x8x256xf32>
    %c11 = arith.constant 11 : index
    %c0_93 = arith.constant 0 : index
    %c0_94 = arith.constant 0 : index
    %270 = vector.load %arg1[%c11, %c0_93, %c0_94] : memref<36x8x1xf32, #tpu.memory_space<vmem>>, vector<1x8x1xf32>
    %271 = vector.shape_cast %270 : vector<1x8x1xf32> to vector<8x1xf32>
    %272 = vector.shape_cast %271 : vector<8x1xf32> to vector<1x8x1xf32>
    %273 = vector.extract_strided_slice %245 {offsets = [0, 3, 0], sizes = [2, 1, 256], strides = [1, 1, 1]} : vector<2x4x256xf32> to vector<2x1x256xf32>
    %274 = vector.broadcast %272 : vector<1x8x1xf32> to vector<2x8x256xf32>
    %275 = vector.broadcast %273 : vector<2x1x256xf32> to vector<2x8x256xf32>
    %276 = arith.mulf %274, %275 : vector<2x8x256xf32>
    %277 = arith.addf %269, %276 : vector<2x8x256xf32>
    %c1_i32_95 = arith.constant 1 : i32
    %278 = tpu.dynamic_rotate %157 by %c1_i32_95 dim 2 : vector<2x4x256xf32>, i32 -> vector<2x4x256xf32>
    %279 = vector.extract_strided_slice %80 {offsets = [0, 0, 0], sizes = [1, 4, 256], strides = [1, 1, 1]} : vector<1x8x256xi1> to vector<1x4x256xi1>
    %cst_96 = arith.constant 0.000000e+00 : f32
    %280 = vector.shape_cast %279 : vector<1x4x256xi1> to vector<1x4x256xi1>
    %281 = vector.broadcast %280 : vector<1x4x256xi1> to vector<2x4x256xi1>
    %282 = vector.broadcast %cst_96 : f32 to vector<2x4x256xf32>
    %283 = arith.select %281, %278, %282 : vector<2x4x256xi1>, vector<2x4x256xf32>
    %c12 = arith.constant 12 : index
    %c0_97 = arith.constant 0 : index
    %c0_98 = arith.constant 0 : index
    %284 = vector.load %arg1[%c12, %c0_97, %c0_98] : memref<36x8x1xf32, #tpu.memory_space<vmem>>, vector<1x8x1xf32>
    %285 = vector.shape_cast %284 : vector<1x8x1xf32> to vector<8x1xf32>
    %286 = vector.shape_cast %285 : vector<8x1xf32> to vector<1x8x1xf32>
    %287 = vector.extract_strided_slice %283 {offsets = [0, 0, 0], sizes = [2, 1, 256], strides = [1, 1, 1]} : vector<2x4x256xf32> to vector<2x1x256xf32>
    %288 = vector.broadcast %286 : vector<1x8x1xf32> to vector<2x8x256xf32>
    %289 = vector.broadcast %287 : vector<2x1x256xf32> to vector<2x8x256xf32>
    %290 = arith.mulf %288, %289 : vector<2x8x256xf32>
    %291 = arith.addf %162, %290 : vector<2x8x256xf32>
    %c13 = arith.constant 13 : index
    %c0_99 = arith.constant 0 : index
    %c0_100 = arith.constant 0 : index
    %292 = vector.load %arg1[%c13, %c0_99, %c0_100] : memref<36x8x1xf32, #tpu.memory_space<vmem>>, vector<1x8x1xf32>
    %293 = vector.shape_cast %292 : vector<1x8x1xf32> to vector<8x1xf32>
    %294 = vector.shape_cast %293 : vector<8x1xf32> to vector<1x8x1xf32>
    %295 = vector.extract_strided_slice %283 {offsets = [0, 1, 0], sizes = [2, 1, 256], strides = [1, 1, 1]} : vector<2x4x256xf32> to vector<2x1x256xf32>
    %296 = vector.broadcast %294 : vector<1x8x1xf32> to vector<2x8x256xf32>
    %297 = vector.broadcast %295 : vector<2x1x256xf32> to vector<2x8x256xf32>
    %298 = arith.mulf %296, %297 : vector<2x8x256xf32>
    %299 = arith.addf %291, %298 : vector<2x8x256xf32>
    %c14 = arith.constant 14 : index
    %c0_101 = arith.constant 0 : index
    %c0_102 = arith.constant 0 : index
    %300 = vector.load %arg1[%c14, %c0_101, %c0_102] : memref<36x8x1xf32, #tpu.memory_space<vmem>>, vector<1x8x1xf32>
    %301 = vector.shape_cast %300 : vector<1x8x1xf32> to vector<8x1xf32>
    %302 = vector.shape_cast %301 : vector<8x1xf32> to vector<1x8x1xf32>
    %303 = vector.extract_strided_slice %283 {offsets = [0, 2, 0], sizes = [2, 1, 256], strides = [1, 1, 1]} : vector<2x4x256xf32> to vector<2x1x256xf32>
    %304 = vector.broadcast %302 : vector<1x8x1xf32> to vector<2x8x256xf32>
    %305 = vector.broadcast %303 : vector<2x1x256xf32> to vector<2x8x256xf32>
    %306 = arith.mulf %304, %305 : vector<2x8x256xf32>
    %307 = arith.addf %299, %306 : vector<2x8x256xf32>
    %c15 = arith.constant 15 : index
    %c0_103 = arith.constant 0 : index
    %c0_104 = arith.constant 0 : index
    %308 = vector.load %arg1[%c15, %c0_103, %c0_104] : memref<36x8x1xf32, #tpu.memory_space<vmem>>, vector<1x8x1xf32>
    %309 = vector.shape_cast %308 : vector<1x8x1xf32> to vector<8x1xf32>
    %310 = vector.shape_cast %309 : vector<8x1xf32> to vector<1x8x1xf32>
    %311 = vector.extract_strided_slice %283 {offsets = [0, 3, 0], sizes = [2, 1, 256], strides = [1, 1, 1]} : vector<2x4x256xf32> to vector<2x1x256xf32>
    %312 = vector.broadcast %310 : vector<1x8x1xf32> to vector<2x8x256xf32>
    %313 = vector.broadcast %311 : vector<2x1x256xf32> to vector<2x8x256xf32>
    %314 = arith.mulf %312, %313 : vector<2x8x256xf32>
    %315 = arith.addf %307, %314 : vector<2x8x256xf32>
    %c16 = arith.constant 16 : index
    %c0_105 = arith.constant 0 : index
    %c0_106 = arith.constant 0 : index
    %316 = vector.load %arg1[%c16, %c0_105, %c0_106] : memref<36x8x1xf32, #tpu.memory_space<vmem>>, vector<1x8x1xf32>
    %317 = vector.shape_cast %316 : vector<1x8x1xf32> to vector<8x1xf32>
    %318 = vector.shape_cast %317 : vector<8x1xf32> to vector<1x8x1xf32>
    %319 = vector.extract_strided_slice %157 {offsets = [0, 0, 0], sizes = [2, 1, 256], strides = [1, 1, 1]} : vector<2x4x256xf32> to vector<2x1x256xf32>
    %320 = vector.broadcast %318 : vector<1x8x1xf32> to vector<2x8x256xf32>
    %321 = vector.broadcast %319 : vector<2x1x256xf32> to vector<2x8x256xf32>
    %322 = arith.mulf %320, %321 : vector<2x8x256xf32>
    %323 = arith.addf %315, %322 : vector<2x8x256xf32>
    %c17 = arith.constant 17 : index
    %c0_107 = arith.constant 0 : index
    %c0_108 = arith.constant 0 : index
    %324 = vector.load %arg1[%c17, %c0_107, %c0_108] : memref<36x8x1xf32, #tpu.memory_space<vmem>>, vector<1x8x1xf32>
    %325 = vector.shape_cast %324 : vector<1x8x1xf32> to vector<8x1xf32>
    %326 = vector.shape_cast %325 : vector<8x1xf32> to vector<1x8x1xf32>
    %327 = vector.extract_strided_slice %157 {offsets = [0, 1, 0], sizes = [2, 1, 256], strides = [1, 1, 1]} : vector<2x4x256xf32> to vector<2x1x256xf32>
    %328 = vector.broadcast %326 : vector<1x8x1xf32> to vector<2x8x256xf32>
    %329 = vector.broadcast %327 : vector<2x1x256xf32> to vector<2x8x256xf32>
    %330 = arith.mulf %328, %329 : vector<2x8x256xf32>
    %331 = arith.addf %323, %330 : vector<2x8x256xf32>
    %c18 = arith.constant 18 : index
    %c0_109 = arith.constant 0 : index
    %c0_110 = arith.constant 0 : index
    %332 = vector.load %arg1[%c18, %c0_109, %c0_110] : memref<36x8x1xf32, #tpu.memory_space<vmem>>, vector<1x8x1xf32>
    %333 = vector.shape_cast %332 : vector<1x8x1xf32> to vector<8x1xf32>
    %334 = vector.shape_cast %333 : vector<8x1xf32> to vector<1x8x1xf32>
    %335 = vector.extract_strided_slice %157 {offsets = [0, 2, 0], sizes = [2, 1, 256], strides = [1, 1, 1]} : vector<2x4x256xf32> to vector<2x1x256xf32>
    %336 = vector.broadcast %334 : vector<1x8x1xf32> to vector<2x8x256xf32>
    %337 = vector.broadcast %335 : vector<2x1x256xf32> to vector<2x8x256xf32>
    %338 = arith.mulf %336, %337 : vector<2x8x256xf32>
    %339 = arith.addf %331, %338 : vector<2x8x256xf32>
    %c19 = arith.constant 19 : index
    %c0_111 = arith.constant 0 : index
    %c0_112 = arith.constant 0 : index
    %340 = vector.load %arg1[%c19, %c0_111, %c0_112] : memref<36x8x1xf32, #tpu.memory_space<vmem>>, vector<1x8x1xf32>
    %341 = vector.shape_cast %340 : vector<1x8x1xf32> to vector<8x1xf32>
    %342 = vector.shape_cast %341 : vector<8x1xf32> to vector<1x8x1xf32>
    %343 = vector.extract_strided_slice %157 {offsets = [0, 3, 0], sizes = [2, 1, 256], strides = [1, 1, 1]} : vector<2x4x256xf32> to vector<2x1x256xf32>
    %344 = vector.broadcast %342 : vector<1x8x1xf32> to vector<2x8x256xf32>
    %345 = vector.broadcast %343 : vector<2x1x256xf32> to vector<2x8x256xf32>
    %346 = arith.mulf %344, %345 : vector<2x8x256xf32>
    %347 = arith.addf %339, %346 : vector<2x8x256xf32>
    %c255_i32 = arith.constant 255 : i32
    %348 = tpu.dynamic_rotate %157 by %c255_i32 dim 2 : vector<2x4x256xf32>, i32 -> vector<2x4x256xf32>
    %349 = vector.extract_strided_slice %99 {offsets = [0, 0, 0], sizes = [1, 4, 256], strides = [1, 1, 1]} : vector<1x8x256xi1> to vector<1x4x256xi1>
    %cst_113 = arith.constant 0.000000e+00 : f32
    %350 = vector.shape_cast %349 : vector<1x4x256xi1> to vector<1x4x256xi1>
    %351 = vector.broadcast %350 : vector<1x4x256xi1> to vector<2x4x256xi1>
    %352 = vector.broadcast %cst_113 : f32 to vector<2x4x256xf32>
    %353 = arith.select %351, %348, %352 : vector<2x4x256xi1>, vector<2x4x256xf32>
    %c20 = arith.constant 20 : index
    %c0_114 = arith.constant 0 : index
    %c0_115 = arith.constant 0 : index
    %354 = vector.load %arg1[%c20, %c0_114, %c0_115] : memref<36x8x1xf32, #tpu.memory_space<vmem>>, vector<1x8x1xf32>
    %355 = vector.shape_cast %354 : vector<1x8x1xf32> to vector<8x1xf32>
    %356 = vector.shape_cast %355 : vector<8x1xf32> to vector<1x8x1xf32>
    %357 = vector.extract_strided_slice %353 {offsets = [0, 0, 0], sizes = [2, 1, 256], strides = [1, 1, 1]} : vector<2x4x256xf32> to vector<2x1x256xf32>
    %358 = vector.broadcast %356 : vector<1x8x1xf32> to vector<2x8x256xf32>
    %359 = vector.broadcast %357 : vector<2x1x256xf32> to vector<2x8x256xf32>
    %360 = arith.mulf %358, %359 : vector<2x8x256xf32>
    %361 = arith.addf %347, %360 : vector<2x8x256xf32>
    %c21 = arith.constant 21 : index
    %c0_116 = arith.constant 0 : index
    %c0_117 = arith.constant 0 : index
    %362 = vector.load %arg1[%c21, %c0_116, %c0_117] : memref<36x8x1xf32, #tpu.memory_space<vmem>>, vector<1x8x1xf32>
    %363 = vector.shape_cast %362 : vector<1x8x1xf32> to vector<8x1xf32>
    %364 = vector.shape_cast %363 : vector<8x1xf32> to vector<1x8x1xf32>
    %365 = vector.extract_strided_slice %353 {offsets = [0, 1, 0], sizes = [2, 1, 256], strides = [1, 1, 1]} : vector<2x4x256xf32> to vector<2x1x256xf32>
    %366 = vector.broadcast %364 : vector<1x8x1xf32> to vector<2x8x256xf32>
    %367 = vector.broadcast %365 : vector<2x1x256xf32> to vector<2x8x256xf32>
    %368 = arith.mulf %366, %367 : vector<2x8x256xf32>
    %369 = arith.addf %361, %368 : vector<2x8x256xf32>
    %c22 = arith.constant 22 : index
    %c0_118 = arith.constant 0 : index
    %c0_119 = arith.constant 0 : index
    %370 = vector.load %arg1[%c22, %c0_118, %c0_119] : memref<36x8x1xf32, #tpu.memory_space<vmem>>, vector<1x8x1xf32>
    %371 = vector.shape_cast %370 : vector<1x8x1xf32> to vector<8x1xf32>
    %372 = vector.shape_cast %371 : vector<8x1xf32> to vector<1x8x1xf32>
    %373 = vector.extract_strided_slice %353 {offsets = [0, 2, 0], sizes = [2, 1, 256], strides = [1, 1, 1]} : vector<2x4x256xf32> to vector<2x1x256xf32>
    %374 = vector.broadcast %372 : vector<1x8x1xf32> to vector<2x8x256xf32>
    %375 = vector.broadcast %373 : vector<2x1x256xf32> to vector<2x8x256xf32>
    %376 = arith.mulf %374, %375 : vector<2x8x256xf32>
    %377 = arith.addf %369, %376 : vector<2x8x256xf32>
    %c23 = arith.constant 23 : index
    %c0_120 = arith.constant 0 : index
    %c0_121 = arith.constant 0 : index
    %378 = vector.load %arg1[%c23, %c0_120, %c0_121] : memref<36x8x1xf32, #tpu.memory_space<vmem>>, vector<1x8x1xf32>
    %379 = vector.shape_cast %378 : vector<1x8x1xf32> to vector<8x1xf32>
    %380 = vector.shape_cast %379 : vector<8x1xf32> to vector<1x8x1xf32>
    %381 = vector.extract_strided_slice %353 {offsets = [0, 3, 0], sizes = [2, 1, 256], strides = [1, 1, 1]} : vector<2x4x256xf32> to vector<2x1x256xf32>
    %382 = vector.broadcast %380 : vector<1x8x1xf32> to vector<2x8x256xf32>
    %383 = vector.broadcast %381 : vector<2x1x256xf32> to vector<2x8x256xf32>
    %384 = arith.mulf %382, %383 : vector<2x8x256xf32>
    %385 = arith.addf %377, %384 : vector<2x8x256xf32>
    %c241_i32 = arith.constant 241 : i32
    %386 = tpu.dynamic_rotate %157 by %c241_i32 dim 2 : vector<2x4x256xf32>, i32 -> vector<2x4x256xf32>
    %387 = vector.extract_strided_slice %118 {offsets = [0, 0, 0], sizes = [1, 4, 256], strides = [1, 1, 1]} : vector<1x8x256xi1> to vector<1x4x256xi1>
    %cst_122 = arith.constant 0.000000e+00 : f32
    %388 = vector.shape_cast %387 : vector<1x4x256xi1> to vector<1x4x256xi1>
    %389 = vector.broadcast %388 : vector<1x4x256xi1> to vector<2x4x256xi1>
    %390 = vector.broadcast %cst_122 : f32 to vector<2x4x256xf32>
    %391 = arith.select %389, %386, %390 : vector<2x4x256xi1>, vector<2x4x256xf32>
    %c24 = arith.constant 24 : index
    %c0_123 = arith.constant 0 : index
    %c0_124 = arith.constant 0 : index
    %392 = vector.load %arg1[%c24, %c0_123, %c0_124] : memref<36x8x1xf32, #tpu.memory_space<vmem>>, vector<1x8x1xf32>
    %393 = vector.shape_cast %392 : vector<1x8x1xf32> to vector<8x1xf32>
    %394 = vector.shape_cast %393 : vector<8x1xf32> to vector<1x8x1xf32>
    %395 = vector.extract_strided_slice %391 {offsets = [0, 0, 0], sizes = [2, 1, 256], strides = [1, 1, 1]} : vector<2x4x256xf32> to vector<2x1x256xf32>
    %396 = vector.broadcast %394 : vector<1x8x1xf32> to vector<2x8x256xf32>
    %397 = vector.broadcast %395 : vector<2x1x256xf32> to vector<2x8x256xf32>
    %398 = arith.mulf %396, %397 : vector<2x8x256xf32>
    %399 = arith.addf %163, %398 : vector<2x8x256xf32>
    %c25 = arith.constant 25 : index
    %c0_125 = arith.constant 0 : index
    %c0_126 = arith.constant 0 : index
    %400 = vector.load %arg1[%c25, %c0_125, %c0_126] : memref<36x8x1xf32, #tpu.memory_space<vmem>>, vector<1x8x1xf32>
    %401 = vector.shape_cast %400 : vector<1x8x1xf32> to vector<8x1xf32>
    %402 = vector.shape_cast %401 : vector<8x1xf32> to vector<1x8x1xf32>
    %403 = vector.extract_strided_slice %391 {offsets = [0, 1, 0], sizes = [2, 1, 256], strides = [1, 1, 1]} : vector<2x4x256xf32> to vector<2x1x256xf32>
    %404 = vector.broadcast %402 : vector<1x8x1xf32> to vector<2x8x256xf32>
    %405 = vector.broadcast %403 : vector<2x1x256xf32> to vector<2x8x256xf32>
    %406 = arith.mulf %404, %405 : vector<2x8x256xf32>
    %407 = arith.addf %399, %406 : vector<2x8x256xf32>
    %c26 = arith.constant 26 : index
    %c0_127 = arith.constant 0 : index
    %c0_128 = arith.constant 0 : index
    %408 = vector.load %arg1[%c26, %c0_127, %c0_128] : memref<36x8x1xf32, #tpu.memory_space<vmem>>, vector<1x8x1xf32>
    %409 = vector.shape_cast %408 : vector<1x8x1xf32> to vector<8x1xf32>
    %410 = vector.shape_cast %409 : vector<8x1xf32> to vector<1x8x1xf32>
    %411 = vector.extract_strided_slice %391 {offsets = [0, 2, 0], sizes = [2, 1, 256], strides = [1, 1, 1]} : vector<2x4x256xf32> to vector<2x1x256xf32>
    %412 = vector.broadcast %410 : vector<1x8x1xf32> to vector<2x8x256xf32>
    %413 = vector.broadcast %411 : vector<2x1x256xf32> to vector<2x8x256xf32>
    %414 = arith.mulf %412, %413 : vector<2x8x256xf32>
    %415 = arith.addf %407, %414 : vector<2x8x256xf32>
    %c27 = arith.constant 27 : index
    %c0_129 = arith.constant 0 : index
    %c0_130 = arith.constant 0 : index
    %416 = vector.load %arg1[%c27, %c0_129, %c0_130] : memref<36x8x1xf32, #tpu.memory_space<vmem>>, vector<1x8x1xf32>
    %417 = vector.shape_cast %416 : vector<1x8x1xf32> to vector<8x1xf32>
    %418 = vector.shape_cast %417 : vector<8x1xf32> to vector<1x8x1xf32>
    %419 = vector.extract_strided_slice %391 {offsets = [0, 3, 0], sizes = [2, 1, 256], strides = [1, 1, 1]} : vector<2x4x256xf32> to vector<2x1x256xf32>
    %420 = vector.broadcast %418 : vector<1x8x1xf32> to vector<2x8x256xf32>
    %421 = vector.broadcast %419 : vector<2x1x256xf32> to vector<2x8x256xf32>
    %422 = arith.mulf %420, %421 : vector<2x8x256xf32>
    %423 = arith.addf %415, %422 : vector<2x8x256xf32>
    %c240_i32 = arith.constant 240 : i32
    %424 = tpu.dynamic_rotate %157 by %c240_i32 dim 2 : vector<2x4x256xf32>, i32 -> vector<2x4x256xf32>
    %425 = vector.extract_strided_slice %137 {offsets = [0, 0, 0], sizes = [1, 4, 256], strides = [1, 1, 1]} : vector<1x8x256xi1> to vector<1x4x256xi1>
    %cst_131 = arith.constant 0.000000e+00 : f32
    %426 = vector.shape_cast %425 : vector<1x4x256xi1> to vector<1x4x256xi1>
    %427 = vector.broadcast %426 : vector<1x4x256xi1> to vector<2x4x256xi1>
    %428 = vector.broadcast %cst_131 : f32 to vector<2x4x256xf32>
    %429 = arith.select %427, %424, %428 : vector<2x4x256xi1>, vector<2x4x256xf32>
    %c28 = arith.constant 28 : index
    %c0_132 = arith.constant 0 : index
    %c0_133 = arith.constant 0 : index
    %430 = vector.load %arg1[%c28, %c0_132, %c0_133] : memref<36x8x1xf32, #tpu.memory_space<vmem>>, vector<1x8x1xf32>
    %431 = vector.shape_cast %430 : vector<1x8x1xf32> to vector<8x1xf32>
    %432 = vector.shape_cast %431 : vector<8x1xf32> to vector<1x8x1xf32>
    %433 = vector.extract_strided_slice %429 {offsets = [0, 0, 0], sizes = [2, 1, 256], strides = [1, 1, 1]} : vector<2x4x256xf32> to vector<2x1x256xf32>
    %434 = vector.broadcast %432 : vector<1x8x1xf32> to vector<2x8x256xf32>
    %435 = vector.broadcast %433 : vector<2x1x256xf32> to vector<2x8x256xf32>
    %436 = arith.mulf %434, %435 : vector<2x8x256xf32>
    %437 = arith.addf %423, %436 : vector<2x8x256xf32>
    %c29 = arith.constant 29 : index
    %c0_134 = arith.constant 0 : index
    %c0_135 = arith.constant 0 : index
    %438 = vector.load %arg1[%c29, %c0_134, %c0_135] : memref<36x8x1xf32, #tpu.memory_space<vmem>>, vector<1x8x1xf32>
    %439 = vector.shape_cast %438 : vector<1x8x1xf32> to vector<8x1xf32>
    %440 = vector.shape_cast %439 : vector<8x1xf32> to vector<1x8x1xf32>
    %441 = vector.extract_strided_slice %429 {offsets = [0, 1, 0], sizes = [2, 1, 256], strides = [1, 1, 1]} : vector<2x4x256xf32> to vector<2x1x256xf32>
    %442 = vector.broadcast %440 : vector<1x8x1xf32> to vector<2x8x256xf32>
    %443 = vector.broadcast %441 : vector<2x1x256xf32> to vector<2x8x256xf32>
    %444 = arith.mulf %442, %443 : vector<2x8x256xf32>
    %445 = arith.addf %437, %444 : vector<2x8x256xf32>
    %c30 = arith.constant 30 : index
    %c0_136 = arith.constant 0 : index
    %c0_137 = arith.constant 0 : index
    %446 = vector.load %arg1[%c30, %c0_136, %c0_137] : memref<36x8x1xf32, #tpu.memory_space<vmem>>, vector<1x8x1xf32>
    %447 = vector.shape_cast %446 : vector<1x8x1xf32> to vector<8x1xf32>
    %448 = vector.shape_cast %447 : vector<8x1xf32> to vector<1x8x1xf32>
    %449 = vector.extract_strided_slice %429 {offsets = [0, 2, 0], sizes = [2, 1, 256], strides = [1, 1, 1]} : vector<2x4x256xf32> to vector<2x1x256xf32>
    %450 = vector.broadcast %448 : vector<1x8x1xf32> to vector<2x8x256xf32>
    %451 = vector.broadcast %449 : vector<2x1x256xf32> to vector<2x8x256xf32>
    %452 = arith.mulf %450, %451 : vector<2x8x256xf32>
    %453 = arith.addf %445, %452 : vector<2x8x256xf32>
    %c31 = arith.constant 31 : index
    %c0_138 = arith.constant 0 : index
    %c0_139 = arith.constant 0 : index
    %454 = vector.load %arg1[%c31, %c0_138, %c0_139] : memref<36x8x1xf32, #tpu.memory_space<vmem>>, vector<1x8x1xf32>
    %455 = vector.shape_cast %454 : vector<1x8x1xf32> to vector<8x1xf32>
    %456 = vector.shape_cast %455 : vector<8x1xf32> to vector<1x8x1xf32>
    %457 = vector.extract_strided_slice %429 {offsets = [0, 3, 0], sizes = [2, 1, 256], strides = [1, 1, 1]} : vector<2x4x256xf32> to vector<2x1x256xf32>
    %458 = vector.broadcast %456 : vector<1x8x1xf32> to vector<2x8x256xf32>
    %459 = vector.broadcast %457 : vector<2x1x256xf32> to vector<2x8x256xf32>
    %460 = arith.mulf %458, %459 : vector<2x8x256xf32>
    %461 = arith.addf %453, %460 : vector<2x8x256xf32>
    %c239_i32 = arith.constant 239 : i32
    %462 = tpu.dynamic_rotate %157 by %c239_i32 dim 2 : vector<2x4x256xf32>, i32 -> vector<2x4x256xf32>
    %463 = vector.extract_strided_slice %156 {offsets = [0, 0, 0], sizes = [1, 4, 256], strides = [1, 1, 1]} : vector<1x8x256xi1> to vector<1x4x256xi1>
    %cst_140 = arith.constant 0.000000e+00 : f32
    %464 = vector.shape_cast %463 : vector<1x4x256xi1> to vector<1x4x256xi1>
    %465 = vector.broadcast %464 : vector<1x4x256xi1> to vector<2x4x256xi1>
    %466 = vector.broadcast %cst_140 : f32 to vector<2x4x256xf32>
    %467 = arith.select %465, %462, %466 : vector<2x4x256xi1>, vector<2x4x256xf32>
    %c32 = arith.constant 32 : index
    %c0_141 = arith.constant 0 : index
    %c0_142 = arith.constant 0 : index
    %468 = vector.load %arg1[%c32, %c0_141, %c0_142] : memref<36x8x1xf32, #tpu.memory_space<vmem>>, vector<1x8x1xf32>
    %469 = vector.shape_cast %468 : vector<1x8x1xf32> to vector<8x1xf32>
    %470 = vector.shape_cast %469 : vector<8x1xf32> to vector<1x8x1xf32>
    %471 = vector.extract_strided_slice %467 {offsets = [0, 0, 0], sizes = [2, 1, 256], strides = [1, 1, 1]} : vector<2x4x256xf32> to vector<2x1x256xf32>
    %472 = vector.broadcast %470 : vector<1x8x1xf32> to vector<2x8x256xf32>
    %473 = vector.broadcast %471 : vector<2x1x256xf32> to vector<2x8x256xf32>
    %474 = arith.mulf %472, %473 : vector<2x8x256xf32>
    %475 = arith.addf %461, %474 : vector<2x8x256xf32>
    %c33 = arith.constant 33 : index
    %c0_143 = arith.constant 0 : index
    %c0_144 = arith.constant 0 : index
    %476 = vector.load %arg1[%c33, %c0_143, %c0_144] : memref<36x8x1xf32, #tpu.memory_space<vmem>>, vector<1x8x1xf32>
    %477 = vector.shape_cast %476 : vector<1x8x1xf32> to vector<8x1xf32>
    %478 = vector.shape_cast %477 : vector<8x1xf32> to vector<1x8x1xf32>
    %479 = vector.extract_strided_slice %467 {offsets = [0, 1, 0], sizes = [2, 1, 256], strides = [1, 1, 1]} : vector<2x4x256xf32> to vector<2x1x256xf32>
    %480 = vector.broadcast %478 : vector<1x8x1xf32> to vector<2x8x256xf32>
    %481 = vector.broadcast %479 : vector<2x1x256xf32> to vector<2x8x256xf32>
    %482 = arith.mulf %480, %481 : vector<2x8x256xf32>
    %483 = arith.addf %475, %482 : vector<2x8x256xf32>
    %c34 = arith.constant 34 : index
    %c0_145 = arith.constant 0 : index
    %c0_146 = arith.constant 0 : index
    %484 = vector.load %arg1[%c34, %c0_145, %c0_146] : memref<36x8x1xf32, #tpu.memory_space<vmem>>, vector<1x8x1xf32>
    %485 = vector.shape_cast %484 : vector<1x8x1xf32> to vector<8x1xf32>
    %486 = vector.shape_cast %485 : vector<8x1xf32> to vector<1x8x1xf32>
    %487 = vector.extract_strided_slice %467 {offsets = [0, 2, 0], sizes = [2, 1, 256], strides = [1, 1, 1]} : vector<2x4x256xf32> to vector<2x1x256xf32>
    %488 = vector.broadcast %486 : vector<1x8x1xf32> to vector<2x8x256xf32>
    %489 = vector.broadcast %487 : vector<2x1x256xf32> to vector<2x8x256xf32>
    %490 = arith.mulf %488, %489 : vector<2x8x256xf32>
    %491 = arith.addf %483, %490 : vector<2x8x256xf32>
    %c35 = arith.constant 35 : index
    %c0_147 = arith.constant 0 : index
    %c0_148 = arith.constant 0 : index
    %492 = vector.load %arg1[%c35, %c0_147, %c0_148] : memref<36x8x1xf32, #tpu.memory_space<vmem>>, vector<1x8x1xf32>
    %493 = vector.shape_cast %492 : vector<1x8x1xf32> to vector<8x1xf32>
    %494 = vector.shape_cast %493 : vector<8x1xf32> to vector<1x8x1xf32>
    %495 = vector.extract_strided_slice %467 {offsets = [0, 3, 0], sizes = [2, 1, 256], strides = [1, 1, 1]} : vector<2x4x256xf32> to vector<2x1x256xf32>
    %496 = vector.broadcast %494 : vector<1x8x1xf32> to vector<2x8x256xf32>
    %497 = vector.broadcast %495 : vector<2x1x256xf32> to vector<2x8x256xf32>
    %498 = arith.mulf %496, %497 : vector<2x8x256xf32>
    %499 = arith.addf %491, %498 : vector<2x8x256xf32>
    %500 = arith.addf %277, %385 : vector<2x8x256xf32>
    %501 = arith.addf %500, %499 : vector<2x8x256xf32>
    %cst_149 = arith.constant 0.000000e+00 : f32
    %502 = vector.broadcast %cst_149 : f32 to vector<2x8x256xf32>
    %503 = arith.maximumf %501, %502 : vector<2x8x256xf32>
    %c0_150 = arith.constant 0 : index
    %c0_151 = arith.constant 0 : index
    %504 = vector.load %arg4[%c0_150, %c0_151] : memref<4x1xf32, #tpu.memory_space<vmem>>, vector<4x1xf32>
    %505 = vector.shape_cast %504 : vector<4x1xf32> to vector<1x4x1xf32>
    %506 = vector.shape_cast %505 : vector<1x4x1xf32> to vector<1x4x1xf32>
    %507 = vector.broadcast %506 : vector<1x4x1xf32> to vector<2x4x256xf32>
    %cst_152 = arith.constant 0.000000e+00 : f32
    %508 = vector.broadcast %cst_152 : f32 to vector<2x4x256xf32>
    %cst_153 = arith.constant 0.000000e+00 : f32
    %509 = vector.broadcast %cst_153 : f32 to vector<2x4x256xf32>
    %c17_i32_154 = arith.constant 17 : i32
    %510 = tpu.dynamic_rotate %503 by %c17_i32_154 dim 2 : vector<2x8x256xf32>, i32 -> vector<2x8x256xf32>
    %cst_155 = arith.constant 0.000000e+00 : f32
    %511 = vector.shape_cast %23 : vector<1x8x256xi1> to vector<1x8x256xi1>
    %512 = vector.broadcast %511 : vector<1x8x256xi1> to vector<2x8x256xi1>
    %513 = vector.broadcast %cst_155 : f32 to vector<2x8x256xf32>
    %514 = arith.select %512, %510, %513 : vector<2x8x256xi1>, vector<2x8x256xf32>
    %c0_156 = arith.constant 0 : index
    %c0_157 = arith.constant 0 : index
    %c0_158 = arith.constant 0 : index
    %515 = vector.load %arg3[%c0_156, %c0_157, %c0_158] : memref<72x4x1xf32, #tpu.memory_space<vmem>>, vector<1x4x1xf32>
    %516 = vector.shape_cast %515 : vector<1x4x1xf32> to vector<4x1xf32>
    %517 = vector.shape_cast %516 : vector<4x1xf32> to vector<1x4x1xf32>
    %518 = vector.extract_strided_slice %514 {offsets = [0, 0, 0], sizes = [2, 1, 256], strides = [1, 1, 1]} : vector<2x8x256xf32> to vector<2x1x256xf32>
    %519 = vector.broadcast %517 : vector<1x4x1xf32> to vector<2x4x256xf32>
    %520 = vector.broadcast %518 : vector<2x1x256xf32> to vector<2x4x256xf32>
    %521 = arith.mulf %519, %520 : vector<2x4x256xf32>
    %522 = arith.addf %507, %521 : vector<2x4x256xf32>
    %c1_159 = arith.constant 1 : index
    %c0_160 = arith.constant 0 : index
    %c0_161 = arith.constant 0 : index
    %523 = vector.load %arg3[%c1_159, %c0_160, %c0_161] : memref<72x4x1xf32, #tpu.memory_space<vmem>>, vector<1x4x1xf32>
    %524 = vector.shape_cast %523 : vector<1x4x1xf32> to vector<4x1xf32>
    %525 = vector.shape_cast %524 : vector<4x1xf32> to vector<1x4x1xf32>
    %526 = vector.extract_strided_slice %514 {offsets = [0, 1, 0], sizes = [2, 1, 256], strides = [1, 1, 1]} : vector<2x8x256xf32> to vector<2x1x256xf32>
    %527 = vector.broadcast %525 : vector<1x4x1xf32> to vector<2x4x256xf32>
    %528 = vector.broadcast %526 : vector<2x1x256xf32> to vector<2x4x256xf32>
    %529 = arith.mulf %527, %528 : vector<2x4x256xf32>
    %530 = arith.addf %522, %529 : vector<2x4x256xf32>
    %c2_162 = arith.constant 2 : index
    %c0_163 = arith.constant 0 : index
    %c0_164 = arith.constant 0 : index
    %531 = vector.load %arg3[%c2_162, %c0_163, %c0_164] : memref<72x4x1xf32, #tpu.memory_space<vmem>>, vector<1x4x1xf32>
    %532 = vector.shape_cast %531 : vector<1x4x1xf32> to vector<4x1xf32>
    %533 = vector.shape_cast %532 : vector<4x1xf32> to vector<1x4x1xf32>
    %534 = vector.extract_strided_slice %514 {offsets = [0, 2, 0], sizes = [2, 1, 256], strides = [1, 1, 1]} : vector<2x8x256xf32> to vector<2x1x256xf32>
    %535 = vector.broadcast %533 : vector<1x4x1xf32> to vector<2x4x256xf32>
    %536 = vector.broadcast %534 : vector<2x1x256xf32> to vector<2x4x256xf32>
    %537 = arith.mulf %535, %536 : vector<2x4x256xf32>
    %538 = arith.addf %530, %537 : vector<2x4x256xf32>
    %c3_165 = arith.constant 3 : index
    %c0_166 = arith.constant 0 : index
    %c0_167 = arith.constant 0 : index
    %539 = vector.load %arg3[%c3_165, %c0_166, %c0_167] : memref<72x4x1xf32, #tpu.memory_space<vmem>>, vector<1x4x1xf32>
    %540 = vector.shape_cast %539 : vector<1x4x1xf32> to vector<4x1xf32>
    %541 = vector.shape_cast %540 : vector<4x1xf32> to vector<1x4x1xf32>
    %542 = vector.extract_strided_slice %514 {offsets = [0, 3, 0], sizes = [2, 1, 256], strides = [1, 1, 1]} : vector<2x8x256xf32> to vector<2x1x256xf32>
    %543 = vector.broadcast %541 : vector<1x4x1xf32> to vector<2x4x256xf32>
    %544 = vector.broadcast %542 : vector<2x1x256xf32> to vector<2x4x256xf32>
    %545 = arith.mulf %543, %544 : vector<2x4x256xf32>
    %546 = arith.addf %538, %545 : vector<2x4x256xf32>
    %c4_168 = arith.constant 4 : index
    %c0_169 = arith.constant 0 : index
    %c0_170 = arith.constant 0 : index
    %547 = vector.load %arg3[%c4_168, %c0_169, %c0_170] : memref<72x4x1xf32, #tpu.memory_space<vmem>>, vector<1x4x1xf32>
    %548 = vector.shape_cast %547 : vector<1x4x1xf32> to vector<4x1xf32>
    %549 = vector.shape_cast %548 : vector<4x1xf32> to vector<1x4x1xf32>
    %550 = vector.extract_strided_slice %514 {offsets = [0, 4, 0], sizes = [2, 1, 256], strides = [1, 1, 1]} : vector<2x8x256xf32> to vector<2x1x256xf32>
    %551 = vector.broadcast %549 : vector<1x4x1xf32> to vector<2x4x256xf32>
    %552 = vector.broadcast %550 : vector<2x1x256xf32> to vector<2x4x256xf32>
    %553 = arith.mulf %551, %552 : vector<2x4x256xf32>
    %554 = arith.addf %546, %553 : vector<2x4x256xf32>
    %c5_171 = arith.constant 5 : index
    %c0_172 = arith.constant 0 : index
    %c0_173 = arith.constant 0 : index
    %555 = vector.load %arg3[%c5_171, %c0_172, %c0_173] : memref<72x4x1xf32, #tpu.memory_space<vmem>>, vector<1x4x1xf32>
    %556 = vector.shape_cast %555 : vector<1x4x1xf32> to vector<4x1xf32>
    %557 = vector.shape_cast %556 : vector<4x1xf32> to vector<1x4x1xf32>
    %558 = vector.extract_strided_slice %514 {offsets = [0, 5, 0], sizes = [2, 1, 256], strides = [1, 1, 1]} : vector<2x8x256xf32> to vector<2x1x256xf32>
    %559 = vector.broadcast %557 : vector<1x4x1xf32> to vector<2x4x256xf32>
    %560 = vector.broadcast %558 : vector<2x1x256xf32> to vector<2x4x256xf32>
    %561 = arith.mulf %559, %560 : vector<2x4x256xf32>
    %562 = arith.addf %554, %561 : vector<2x4x256xf32>
    %c6_174 = arith.constant 6 : index
    %c0_175 = arith.constant 0 : index
    %c0_176 = arith.constant 0 : index
    %563 = vector.load %arg3[%c6_174, %c0_175, %c0_176] : memref<72x4x1xf32, #tpu.memory_space<vmem>>, vector<1x4x1xf32>
    %564 = vector.shape_cast %563 : vector<1x4x1xf32> to vector<4x1xf32>
    %565 = vector.shape_cast %564 : vector<4x1xf32> to vector<1x4x1xf32>
    %566 = vector.extract_strided_slice %514 {offsets = [0, 6, 0], sizes = [2, 1, 256], strides = [1, 1, 1]} : vector<2x8x256xf32> to vector<2x1x256xf32>
    %567 = vector.broadcast %565 : vector<1x4x1xf32> to vector<2x4x256xf32>
    %568 = vector.broadcast %566 : vector<2x1x256xf32> to vector<2x4x256xf32>
    %569 = arith.mulf %567, %568 : vector<2x4x256xf32>
    %570 = arith.addf %562, %569 : vector<2x4x256xf32>
    %c7_177 = arith.constant 7 : index
    %c0_178 = arith.constant 0 : index
    %c0_179 = arith.constant 0 : index
    %571 = vector.load %arg3[%c7_177, %c0_178, %c0_179] : memref<72x4x1xf32, #tpu.memory_space<vmem>>, vector<1x4x1xf32>
    %572 = vector.shape_cast %571 : vector<1x4x1xf32> to vector<4x1xf32>
    %573 = vector.shape_cast %572 : vector<4x1xf32> to vector<1x4x1xf32>
    %574 = vector.extract_strided_slice %514 {offsets = [0, 7, 0], sizes = [2, 1, 256], strides = [1, 1, 1]} : vector<2x8x256xf32> to vector<2x1x256xf32>
    %575 = vector.broadcast %573 : vector<1x4x1xf32> to vector<2x4x256xf32>
    %576 = vector.broadcast %574 : vector<2x1x256xf32> to vector<2x4x256xf32>
    %577 = arith.mulf %575, %576 : vector<2x4x256xf32>
    %578 = arith.addf %570, %577 : vector<2x4x256xf32>
    %c16_i32_180 = arith.constant 16 : i32
    %579 = tpu.dynamic_rotate %503 by %c16_i32_180 dim 2 : vector<2x8x256xf32>, i32 -> vector<2x8x256xf32>
    %cst_181 = arith.constant 0.000000e+00 : f32
    %580 = vector.shape_cast %42 : vector<1x8x256xi1> to vector<1x8x256xi1>
    %581 = vector.broadcast %580 : vector<1x8x256xi1> to vector<2x8x256xi1>
    %582 = vector.broadcast %cst_181 : f32 to vector<2x8x256xf32>
    %583 = arith.select %581, %579, %582 : vector<2x8x256xi1>, vector<2x8x256xf32>
    %c8_182 = arith.constant 8 : index
    %c0_183 = arith.constant 0 : index
    %c0_184 = arith.constant 0 : index
    %584 = vector.load %arg3[%c8_182, %c0_183, %c0_184] : memref<72x4x1xf32, #tpu.memory_space<vmem>>, vector<1x4x1xf32>
    %585 = vector.shape_cast %584 : vector<1x4x1xf32> to vector<4x1xf32>
    %586 = vector.shape_cast %585 : vector<4x1xf32> to vector<1x4x1xf32>
    %587 = vector.extract_strided_slice %583 {offsets = [0, 0, 0], sizes = [2, 1, 256], strides = [1, 1, 1]} : vector<2x8x256xf32> to vector<2x1x256xf32>
    %588 = vector.broadcast %586 : vector<1x4x1xf32> to vector<2x4x256xf32>
    %589 = vector.broadcast %587 : vector<2x1x256xf32> to vector<2x4x256xf32>
    %590 = arith.mulf %588, %589 : vector<2x4x256xf32>
    %591 = arith.addf %578, %590 : vector<2x4x256xf32>
    %c9_185 = arith.constant 9 : index
    %c0_186 = arith.constant 0 : index
    %c0_187 = arith.constant 0 : index
    %592 = vector.load %arg3[%c9_185, %c0_186, %c0_187] : memref<72x4x1xf32, #tpu.memory_space<vmem>>, vector<1x4x1xf32>
    %593 = vector.shape_cast %592 : vector<1x4x1xf32> to vector<4x1xf32>
    %594 = vector.shape_cast %593 : vector<4x1xf32> to vector<1x4x1xf32>
    %595 = vector.extract_strided_slice %583 {offsets = [0, 1, 0], sizes = [2, 1, 256], strides = [1, 1, 1]} : vector<2x8x256xf32> to vector<2x1x256xf32>
    %596 = vector.broadcast %594 : vector<1x4x1xf32> to vector<2x4x256xf32>
    %597 = vector.broadcast %595 : vector<2x1x256xf32> to vector<2x4x256xf32>
    %598 = arith.mulf %596, %597 : vector<2x4x256xf32>
    %599 = arith.addf %591, %598 : vector<2x4x256xf32>
    %c10_188 = arith.constant 10 : index
    %c0_189 = arith.constant 0 : index
    %c0_190 = arith.constant 0 : index
    %600 = vector.load %arg3[%c10_188, %c0_189, %c0_190] : memref<72x4x1xf32, #tpu.memory_space<vmem>>, vector<1x4x1xf32>
    %601 = vector.shape_cast %600 : vector<1x4x1xf32> to vector<4x1xf32>
    %602 = vector.shape_cast %601 : vector<4x1xf32> to vector<1x4x1xf32>
    %603 = vector.extract_strided_slice %583 {offsets = [0, 2, 0], sizes = [2, 1, 256], strides = [1, 1, 1]} : vector<2x8x256xf32> to vector<2x1x256xf32>
    %604 = vector.broadcast %602 : vector<1x4x1xf32> to vector<2x4x256xf32>
    %605 = vector.broadcast %603 : vector<2x1x256xf32> to vector<2x4x256xf32>
    %606 = arith.mulf %604, %605 : vector<2x4x256xf32>
    %607 = arith.addf %599, %606 : vector<2x4x256xf32>
    %c11_191 = arith.constant 11 : index
    %c0_192 = arith.constant 0 : index
    %c0_193 = arith.constant 0 : index
    %608 = vector.load %arg3[%c11_191, %c0_192, %c0_193] : memref<72x4x1xf32, #tpu.memory_space<vmem>>, vector<1x4x1xf32>
    %609 = vector.shape_cast %608 : vector<1x4x1xf32> to vector<4x1xf32>
    %610 = vector.shape_cast %609 : vector<4x1xf32> to vector<1x4x1xf32>
    %611 = vector.extract_strided_slice %583 {offsets = [0, 3, 0], sizes = [2, 1, 256], strides = [1, 1, 1]} : vector<2x8x256xf32> to vector<2x1x256xf32>
    %612 = vector.broadcast %610 : vector<1x4x1xf32> to vector<2x4x256xf32>
    %613 = vector.broadcast %611 : vector<2x1x256xf32> to vector<2x4x256xf32>
    %614 = arith.mulf %612, %613 : vector<2x4x256xf32>
    %615 = arith.addf %607, %614 : vector<2x4x256xf32>
    %c12_194 = arith.constant 12 : index
    %c0_195 = arith.constant 0 : index
    %c0_196 = arith.constant 0 : index
    %616 = vector.load %arg3[%c12_194, %c0_195, %c0_196] : memref<72x4x1xf32, #tpu.memory_space<vmem>>, vector<1x4x1xf32>
    %617 = vector.shape_cast %616 : vector<1x4x1xf32> to vector<4x1xf32>
    %618 = vector.shape_cast %617 : vector<4x1xf32> to vector<1x4x1xf32>
    %619 = vector.extract_strided_slice %583 {offsets = [0, 4, 0], sizes = [2, 1, 256], strides = [1, 1, 1]} : vector<2x8x256xf32> to vector<2x1x256xf32>
    %620 = vector.broadcast %618 : vector<1x4x1xf32> to vector<2x4x256xf32>
    %621 = vector.broadcast %619 : vector<2x1x256xf32> to vector<2x4x256xf32>
    %622 = arith.mulf %620, %621 : vector<2x4x256xf32>
    %623 = arith.addf %615, %622 : vector<2x4x256xf32>
    %c13_197 = arith.constant 13 : index
    %c0_198 = arith.constant 0 : index
    %c0_199 = arith.constant 0 : index
    %624 = vector.load %arg3[%c13_197, %c0_198, %c0_199] : memref<72x4x1xf32, #tpu.memory_space<vmem>>, vector<1x4x1xf32>
    %625 = vector.shape_cast %624 : vector<1x4x1xf32> to vector<4x1xf32>
    %626 = vector.shape_cast %625 : vector<4x1xf32> to vector<1x4x1xf32>
    %627 = vector.extract_strided_slice %583 {offsets = [0, 5, 0], sizes = [2, 1, 256], strides = [1, 1, 1]} : vector<2x8x256xf32> to vector<2x1x256xf32>
    %628 = vector.broadcast %626 : vector<1x4x1xf32> to vector<2x4x256xf32>
    %629 = vector.broadcast %627 : vector<2x1x256xf32> to vector<2x4x256xf32>
    %630 = arith.mulf %628, %629 : vector<2x4x256xf32>
    %631 = arith.addf %623, %630 : vector<2x4x256xf32>
    %c14_200 = arith.constant 14 : index
    %c0_201 = arith.constant 0 : index
    %c0_202 = arith.constant 0 : index
    %632 = vector.load %arg3[%c14_200, %c0_201, %c0_202] : memref<72x4x1xf32, #tpu.memory_space<vmem>>, vector<1x4x1xf32>
    %633 = vector.shape_cast %632 : vector<1x4x1xf32> to vector<4x1xf32>
    %634 = vector.shape_cast %633 : vector<4x1xf32> to vector<1x4x1xf32>
    %635 = vector.extract_strided_slice %583 {offsets = [0, 6, 0], sizes = [2, 1, 256], strides = [1, 1, 1]} : vector<2x8x256xf32> to vector<2x1x256xf32>
    %636 = vector.broadcast %634 : vector<1x4x1xf32> to vector<2x4x256xf32>
    %637 = vector.broadcast %635 : vector<2x1x256xf32> to vector<2x4x256xf32>
    %638 = arith.mulf %636, %637 : vector<2x4x256xf32>
    %639 = arith.addf %631, %638 : vector<2x4x256xf32>
    %c15_203 = arith.constant 15 : index
    %c0_204 = arith.constant 0 : index
    %c0_205 = arith.constant 0 : index
    %640 = vector.load %arg3[%c15_203, %c0_204, %c0_205] : memref<72x4x1xf32, #tpu.memory_space<vmem>>, vector<1x4x1xf32>
    %641 = vector.shape_cast %640 : vector<1x4x1xf32> to vector<4x1xf32>
    %642 = vector.shape_cast %641 : vector<4x1xf32> to vector<1x4x1xf32>
    %643 = vector.extract_strided_slice %583 {offsets = [0, 7, 0], sizes = [2, 1, 256], strides = [1, 1, 1]} : vector<2x8x256xf32> to vector<2x1x256xf32>
    %644 = vector.broadcast %642 : vector<1x4x1xf32> to vector<2x4x256xf32>
    %645 = vector.broadcast %643 : vector<2x1x256xf32> to vector<2x4x256xf32>
    %646 = arith.mulf %644, %645 : vector<2x4x256xf32>
    %647 = arith.addf %639, %646 : vector<2x4x256xf32>
    %c15_i32_206 = arith.constant 15 : i32
    %648 = tpu.dynamic_rotate %503 by %c15_i32_206 dim 2 : vector<2x8x256xf32>, i32 -> vector<2x8x256xf32>
    %cst_207 = arith.constant 0.000000e+00 : f32
    %649 = vector.shape_cast %61 : vector<1x8x256xi1> to vector<1x8x256xi1>
    %650 = vector.broadcast %649 : vector<1x8x256xi1> to vector<2x8x256xi1>
    %651 = vector.broadcast %cst_207 : f32 to vector<2x8x256xf32>
    %652 = arith.select %650, %648, %651 : vector<2x8x256xi1>, vector<2x8x256xf32>
    %c16_208 = arith.constant 16 : index
    %c0_209 = arith.constant 0 : index
    %c0_210 = arith.constant 0 : index
    %653 = vector.load %arg3[%c16_208, %c0_209, %c0_210] : memref<72x4x1xf32, #tpu.memory_space<vmem>>, vector<1x4x1xf32>
    %654 = vector.shape_cast %653 : vector<1x4x1xf32> to vector<4x1xf32>
    %655 = vector.shape_cast %654 : vector<4x1xf32> to vector<1x4x1xf32>
    %656 = vector.extract_strided_slice %652 {offsets = [0, 0, 0], sizes = [2, 1, 256], strides = [1, 1, 1]} : vector<2x8x256xf32> to vector<2x1x256xf32>
    %657 = vector.broadcast %655 : vector<1x4x1xf32> to vector<2x4x256xf32>
    %658 = vector.broadcast %656 : vector<2x1x256xf32> to vector<2x4x256xf32>
    %659 = arith.mulf %657, %658 : vector<2x4x256xf32>
    %660 = arith.addf %647, %659 : vector<2x4x256xf32>
    %c17_211 = arith.constant 17 : index
    %c0_212 = arith.constant 0 : index
    %c0_213 = arith.constant 0 : index
    %661 = vector.load %arg3[%c17_211, %c0_212, %c0_213] : memref<72x4x1xf32, #tpu.memory_space<vmem>>, vector<1x4x1xf32>
    %662 = vector.shape_cast %661 : vector<1x4x1xf32> to vector<4x1xf32>
    %663 = vector.shape_cast %662 : vector<4x1xf32> to vector<1x4x1xf32>
    %664 = vector.extract_strided_slice %652 {offsets = [0, 1, 0], sizes = [2, 1, 256], strides = [1, 1, 1]} : vector<2x8x256xf32> to vector<2x1x256xf32>
    %665 = vector.broadcast %663 : vector<1x4x1xf32> to vector<2x4x256xf32>
    %666 = vector.broadcast %664 : vector<2x1x256xf32> to vector<2x4x256xf32>
    %667 = arith.mulf %665, %666 : vector<2x4x256xf32>
    %668 = arith.addf %660, %667 : vector<2x4x256xf32>
    %c18_214 = arith.constant 18 : index
    %c0_215 = arith.constant 0 : index
    %c0_216 = arith.constant 0 : index
    %669 = vector.load %arg3[%c18_214, %c0_215, %c0_216] : memref<72x4x1xf32, #tpu.memory_space<vmem>>, vector<1x4x1xf32>
    %670 = vector.shape_cast %669 : vector<1x4x1xf32> to vector<4x1xf32>
    %671 = vector.shape_cast %670 : vector<4x1xf32> to vector<1x4x1xf32>
    %672 = vector.extract_strided_slice %652 {offsets = [0, 2, 0], sizes = [2, 1, 256], strides = [1, 1, 1]} : vector<2x8x256xf32> to vector<2x1x256xf32>
    %673 = vector.broadcast %671 : vector<1x4x1xf32> to vector<2x4x256xf32>
    %674 = vector.broadcast %672 : vector<2x1x256xf32> to vector<2x4x256xf32>
    %675 = arith.mulf %673, %674 : vector<2x4x256xf32>
    %676 = arith.addf %668, %675 : vector<2x4x256xf32>
    %c19_217 = arith.constant 19 : index
    %c0_218 = arith.constant 0 : index
    %c0_219 = arith.constant 0 : index
    %677 = vector.load %arg3[%c19_217, %c0_218, %c0_219] : memref<72x4x1xf32, #tpu.memory_space<vmem>>, vector<1x4x1xf32>
    %678 = vector.shape_cast %677 : vector<1x4x1xf32> to vector<4x1xf32>
    %679 = vector.shape_cast %678 : vector<4x1xf32> to vector<1x4x1xf32>
    %680 = vector.extract_strided_slice %652 {offsets = [0, 3, 0], sizes = [2, 1, 256], strides = [1, 1, 1]} : vector<2x8x256xf32> to vector<2x1x256xf32>
    %681 = vector.broadcast %679 : vector<1x4x1xf32> to vector<2x4x256xf32>
    %682 = vector.broadcast %680 : vector<2x1x256xf32> to vector<2x4x256xf32>
    %683 = arith.mulf %681, %682 : vector<2x4x256xf32>
    %684 = arith.addf %676, %683 : vector<2x4x256xf32>
    %c20_220 = arith.constant 20 : index
    %c0_221 = arith.constant 0 : index
    %c0_222 = arith.constant 0 : index
    %685 = vector.load %arg3[%c20_220, %c0_221, %c0_222] : memref<72x4x1xf32, #tpu.memory_space<vmem>>, vector<1x4x1xf32>
    %686 = vector.shape_cast %685 : vector<1x4x1xf32> to vector<4x1xf32>
    %687 = vector.shape_cast %686 : vector<4x1xf32> to vector<1x4x1xf32>
    %688 = vector.extract_strided_slice %652 {offsets = [0, 4, 0], sizes = [2, 1, 256], strides = [1, 1, 1]} : vector<2x8x256xf32> to vector<2x1x256xf32>
    %689 = vector.broadcast %687 : vector<1x4x1xf32> to vector<2x4x256xf32>
    %690 = vector.broadcast %688 : vector<2x1x256xf32> to vector<2x4x256xf32>
    %691 = arith.mulf %689, %690 : vector<2x4x256xf32>
    %692 = arith.addf %684, %691 : vector<2x4x256xf32>
    %c21_223 = arith.constant 21 : index
    %c0_224 = arith.constant 0 : index
    %c0_225 = arith.constant 0 : index
    %693 = vector.load %arg3[%c21_223, %c0_224, %c0_225] : memref<72x4x1xf32, #tpu.memory_space<vmem>>, vector<1x4x1xf32>
    %694 = vector.shape_cast %693 : vector<1x4x1xf32> to vector<4x1xf32>
    %695 = vector.shape_cast %694 : vector<4x1xf32> to vector<1x4x1xf32>
    %696 = vector.extract_strided_slice %652 {offsets = [0, 5, 0], sizes = [2, 1, 256], strides = [1, 1, 1]} : vector<2x8x256xf32> to vector<2x1x256xf32>
    %697 = vector.broadcast %695 : vector<1x4x1xf32> to vector<2x4x256xf32>
    %698 = vector.broadcast %696 : vector<2x1x256xf32> to vector<2x4x256xf32>
    %699 = arith.mulf %697, %698 : vector<2x4x256xf32>
    %700 = arith.addf %692, %699 : vector<2x4x256xf32>
    %c22_226 = arith.constant 22 : index
    %c0_227 = arith.constant 0 : index
    %c0_228 = arith.constant 0 : index
    %701 = vector.load %arg3[%c22_226, %c0_227, %c0_228] : memref<72x4x1xf32, #tpu.memory_space<vmem>>, vector<1x4x1xf32>
    %702 = vector.shape_cast %701 : vector<1x4x1xf32> to vector<4x1xf32>
    %703 = vector.shape_cast %702 : vector<4x1xf32> to vector<1x4x1xf32>
    %704 = vector.extract_strided_slice %652 {offsets = [0, 6, 0], sizes = [2, 1, 256], strides = [1, 1, 1]} : vector<2x8x256xf32> to vector<2x1x256xf32>
    %705 = vector.broadcast %703 : vector<1x4x1xf32> to vector<2x4x256xf32>
    %706 = vector.broadcast %704 : vector<2x1x256xf32> to vector<2x4x256xf32>
    %707 = arith.mulf %705, %706 : vector<2x4x256xf32>
    %708 = arith.addf %700, %707 : vector<2x4x256xf32>
    %c23_229 = arith.constant 23 : index
    %c0_230 = arith.constant 0 : index
    %c0_231 = arith.constant 0 : index
    %709 = vector.load %arg3[%c23_229, %c0_230, %c0_231] : memref<72x4x1xf32, #tpu.memory_space<vmem>>, vector<1x4x1xf32>
    %710 = vector.shape_cast %709 : vector<1x4x1xf32> to vector<4x1xf32>
    %711 = vector.shape_cast %710 : vector<4x1xf32> to vector<1x4x1xf32>
    %712 = vector.extract_strided_slice %652 {offsets = [0, 7, 0], sizes = [2, 1, 256], strides = [1, 1, 1]} : vector<2x8x256xf32> to vector<2x1x256xf32>
    %713 = vector.broadcast %711 : vector<1x4x1xf32> to vector<2x4x256xf32>
    %714 = vector.broadcast %712 : vector<2x1x256xf32> to vector<2x4x256xf32>
    %715 = arith.mulf %713, %714 : vector<2x4x256xf32>
    %716 = arith.addf %708, %715 : vector<2x4x256xf32>
    %c1_i32_232 = arith.constant 1 : i32
    %717 = tpu.dynamic_rotate %503 by %c1_i32_232 dim 2 : vector<2x8x256xf32>, i32 -> vector<2x8x256xf32>
    %cst_233 = arith.constant 0.000000e+00 : f32
    %718 = vector.shape_cast %80 : vector<1x8x256xi1> to vector<1x8x256xi1>
    %719 = vector.broadcast %718 : vector<1x8x256xi1> to vector<2x8x256xi1>
    %720 = vector.broadcast %cst_233 : f32 to vector<2x8x256xf32>
    %721 = arith.select %719, %717, %720 : vector<2x8x256xi1>, vector<2x8x256xf32>
    %c24_234 = arith.constant 24 : index
    %c0_235 = arith.constant 0 : index
    %c0_236 = arith.constant 0 : index
    %722 = vector.load %arg3[%c24_234, %c0_235, %c0_236] : memref<72x4x1xf32, #tpu.memory_space<vmem>>, vector<1x4x1xf32>
    %723 = vector.shape_cast %722 : vector<1x4x1xf32> to vector<4x1xf32>
    %724 = vector.shape_cast %723 : vector<4x1xf32> to vector<1x4x1xf32>
    %725 = vector.extract_strided_slice %721 {offsets = [0, 0, 0], sizes = [2, 1, 256], strides = [1, 1, 1]} : vector<2x8x256xf32> to vector<2x1x256xf32>
    %726 = vector.broadcast %724 : vector<1x4x1xf32> to vector<2x4x256xf32>
    %727 = vector.broadcast %725 : vector<2x1x256xf32> to vector<2x4x256xf32>
    %728 = arith.mulf %726, %727 : vector<2x4x256xf32>
    %729 = arith.addf %508, %728 : vector<2x4x256xf32>
    %c25_237 = arith.constant 25 : index
    %c0_238 = arith.constant 0 : index
    %c0_239 = arith.constant 0 : index
    %730 = vector.load %arg3[%c25_237, %c0_238, %c0_239] : memref<72x4x1xf32, #tpu.memory_space<vmem>>, vector<1x4x1xf32>
    %731 = vector.shape_cast %730 : vector<1x4x1xf32> to vector<4x1xf32>
    %732 = vector.shape_cast %731 : vector<4x1xf32> to vector<1x4x1xf32>
    %733 = vector.extract_strided_slice %721 {offsets = [0, 1, 0], sizes = [2, 1, 256], strides = [1, 1, 1]} : vector<2x8x256xf32> to vector<2x1x256xf32>
    %734 = vector.broadcast %732 : vector<1x4x1xf32> to vector<2x4x256xf32>
    %735 = vector.broadcast %733 : vector<2x1x256xf32> to vector<2x4x256xf32>
    %736 = arith.mulf %734, %735 : vector<2x4x256xf32>
    %737 = arith.addf %729, %736 : vector<2x4x256xf32>
    %c26_240 = arith.constant 26 : index
    %c0_241 = arith.constant 0 : index
    %c0_242 = arith.constant 0 : index
    %738 = vector.load %arg3[%c26_240, %c0_241, %c0_242] : memref<72x4x1xf32, #tpu.memory_space<vmem>>, vector<1x4x1xf32>
    %739 = vector.shape_cast %738 : vector<1x4x1xf32> to vector<4x1xf32>
    %740 = vector.shape_cast %739 : vector<4x1xf32> to vector<1x4x1xf32>
    %741 = vector.extract_strided_slice %721 {offsets = [0, 2, 0], sizes = [2, 1, 256], strides = [1, 1, 1]} : vector<2x8x256xf32> to vector<2x1x256xf32>
    %742 = vector.broadcast %740 : vector<1x4x1xf32> to vector<2x4x256xf32>
    %743 = vector.broadcast %741 : vector<2x1x256xf32> to vector<2x4x256xf32>
    %744 = arith.mulf %742, %743 : vector<2x4x256xf32>
    %745 = arith.addf %737, %744 : vector<2x4x256xf32>
    %c27_243 = arith.constant 27 : index
    %c0_244 = arith.constant 0 : index
    %c0_245 = arith.constant 0 : index
    %746 = vector.load %arg3[%c27_243, %c0_244, %c0_245] : memref<72x4x1xf32, #tpu.memory_space<vmem>>, vector<1x4x1xf32>
    %747 = vector.shape_cast %746 : vector<1x4x1xf32> to vector<4x1xf32>
    %748 = vector.shape_cast %747 : vector<4x1xf32> to vector<1x4x1xf32>
    %749 = vector.extract_strided_slice %721 {offsets = [0, 3, 0], sizes = [2, 1, 256], strides = [1, 1, 1]} : vector<2x8x256xf32> to vector<2x1x256xf32>
    %750 = vector.broadcast %748 : vector<1x4x1xf32> to vector<2x4x256xf32>
    %751 = vector.broadcast %749 : vector<2x1x256xf32> to vector<2x4x256xf32>
    %752 = arith.mulf %750, %751 : vector<2x4x256xf32>
    %753 = arith.addf %745, %752 : vector<2x4x256xf32>
    %c28_246 = arith.constant 28 : index
    %c0_247 = arith.constant 0 : index
    %c0_248 = arith.constant 0 : index
    %754 = vector.load %arg3[%c28_246, %c0_247, %c0_248] : memref<72x4x1xf32, #tpu.memory_space<vmem>>, vector<1x4x1xf32>
    %755 = vector.shape_cast %754 : vector<1x4x1xf32> to vector<4x1xf32>
    %756 = vector.shape_cast %755 : vector<4x1xf32> to vector<1x4x1xf32>
    %757 = vector.extract_strided_slice %721 {offsets = [0, 4, 0], sizes = [2, 1, 256], strides = [1, 1, 1]} : vector<2x8x256xf32> to vector<2x1x256xf32>
    %758 = vector.broadcast %756 : vector<1x4x1xf32> to vector<2x4x256xf32>
    %759 = vector.broadcast %757 : vector<2x1x256xf32> to vector<2x4x256xf32>
    %760 = arith.mulf %758, %759 : vector<2x4x256xf32>
    %761 = arith.addf %753, %760 : vector<2x4x256xf32>
    %c29_249 = arith.constant 29 : index
    %c0_250 = arith.constant 0 : index
    %c0_251 = arith.constant 0 : index
    %762 = vector.load %arg3[%c29_249, %c0_250, %c0_251] : memref<72x4x1xf32, #tpu.memory_space<vmem>>, vector<1x4x1xf32>
    %763 = vector.shape_cast %762 : vector<1x4x1xf32> to vector<4x1xf32>
    %764 = vector.shape_cast %763 : vector<4x1xf32> to vector<1x4x1xf32>
    %765 = vector.extract_strided_slice %721 {offsets = [0, 5, 0], sizes = [2, 1, 256], strides = [1, 1, 1]} : vector<2x8x256xf32> to vector<2x1x256xf32>
    %766 = vector.broadcast %764 : vector<1x4x1xf32> to vector<2x4x256xf32>
    %767 = vector.broadcast %765 : vector<2x1x256xf32> to vector<2x4x256xf32>
    %768 = arith.mulf %766, %767 : vector<2x4x256xf32>
    %769 = arith.addf %761, %768 : vector<2x4x256xf32>
    %c30_252 = arith.constant 30 : index
    %c0_253 = arith.constant 0 : index
    %c0_254 = arith.constant 0 : index
    %770 = vector.load %arg3[%c30_252, %c0_253, %c0_254] : memref<72x4x1xf32, #tpu.memory_space<vmem>>, vector<1x4x1xf32>
    %771 = vector.shape_cast %770 : vector<1x4x1xf32> to vector<4x1xf32>
    %772 = vector.shape_cast %771 : vector<4x1xf32> to vector<1x4x1xf32>
    %773 = vector.extract_strided_slice %721 {offsets = [0, 6, 0], sizes = [2, 1, 256], strides = [1, 1, 1]} : vector<2x8x256xf32> to vector<2x1x256xf32>
    %774 = vector.broadcast %772 : vector<1x4x1xf32> to vector<2x4x256xf32>
    %775 = vector.broadcast %773 : vector<2x1x256xf32> to vector<2x4x256xf32>
    %776 = arith.mulf %774, %775 : vector<2x4x256xf32>
    %777 = arith.addf %769, %776 : vector<2x4x256xf32>
    %c31_255 = arith.constant 31 : index
    %c0_256 = arith.constant 0 : index
    %c0_257 = arith.constant 0 : index
    %778 = vector.load %arg3[%c31_255, %c0_256, %c0_257] : memref<72x4x1xf32, #tpu.memory_space<vmem>>, vector<1x4x1xf32>
    %779 = vector.shape_cast %778 : vector<1x4x1xf32> to vector<4x1xf32>
    %780 = vector.shape_cast %779 : vector<4x1xf32> to vector<1x4x1xf32>
    %781 = vector.extract_strided_slice %721 {offsets = [0, 7, 0], sizes = [2, 1, 256], strides = [1, 1, 1]} : vector<2x8x256xf32> to vector<2x1x256xf32>
    %782 = vector.broadcast %780 : vector<1x4x1xf32> to vector<2x4x256xf32>
    %783 = vector.broadcast %781 : vector<2x1x256xf32> to vector<2x4x256xf32>
    %784 = arith.mulf %782, %783 : vector<2x4x256xf32>
    %785 = arith.addf %777, %784 : vector<2x4x256xf32>
    %c32_258 = arith.constant 32 : index
    %c0_259 = arith.constant 0 : index
    %c0_260 = arith.constant 0 : index
    %786 = vector.load %arg3[%c32_258, %c0_259, %c0_260] : memref<72x4x1xf32, #tpu.memory_space<vmem>>, vector<1x4x1xf32>
    %787 = vector.shape_cast %786 : vector<1x4x1xf32> to vector<4x1xf32>
    %788 = vector.shape_cast %787 : vector<4x1xf32> to vector<1x4x1xf32>
    %789 = vector.extract_strided_slice %503 {offsets = [0, 0, 0], sizes = [2, 1, 256], strides = [1, 1, 1]} : vector<2x8x256xf32> to vector<2x1x256xf32>
    %790 = vector.broadcast %788 : vector<1x4x1xf32> to vector<2x4x256xf32>
    %791 = vector.broadcast %789 : vector<2x1x256xf32> to vector<2x4x256xf32>
    %792 = arith.mulf %790, %791 : vector<2x4x256xf32>
    %793 = arith.addf %785, %792 : vector<2x4x256xf32>
    %c33_261 = arith.constant 33 : index
    %c0_262 = arith.constant 0 : index
    %c0_263 = arith.constant 0 : index
    %794 = vector.load %arg3[%c33_261, %c0_262, %c0_263] : memref<72x4x1xf32, #tpu.memory_space<vmem>>, vector<1x4x1xf32>
    %795 = vector.shape_cast %794 : vector<1x4x1xf32> to vector<4x1xf32>
    %796 = vector.shape_cast %795 : vector<4x1xf32> to vector<1x4x1xf32>
    %797 = vector.extract_strided_slice %503 {offsets = [0, 1, 0], sizes = [2, 1, 256], strides = [1, 1, 1]} : vector<2x8x256xf32> to vector<2x1x256xf32>
    %798 = vector.broadcast %796 : vector<1x4x1xf32> to vector<2x4x256xf32>
    %799 = vector.broadcast %797 : vector<2x1x256xf32> to vector<2x4x256xf32>
    %800 = arith.mulf %798, %799 : vector<2x4x256xf32>
    %801 = arith.addf %793, %800 : vector<2x4x256xf32>
    %c34_264 = arith.constant 34 : index
    %c0_265 = arith.constant 0 : index
    %c0_266 = arith.constant 0 : index
    %802 = vector.load %arg3[%c34_264, %c0_265, %c0_266] : memref<72x4x1xf32, #tpu.memory_space<vmem>>, vector<1x4x1xf32>
    %803 = vector.shape_cast %802 : vector<1x4x1xf32> to vector<4x1xf32>
    %804 = vector.shape_cast %803 : vector<4x1xf32> to vector<1x4x1xf32>
    %805 = vector.extract_strided_slice %503 {offsets = [0, 2, 0], sizes = [2, 1, 256], strides = [1, 1, 1]} : vector<2x8x256xf32> to vector<2x1x256xf32>
    %806 = vector.broadcast %804 : vector<1x4x1xf32> to vector<2x4x256xf32>
    %807 = vector.broadcast %805 : vector<2x1x256xf32> to vector<2x4x256xf32>
    %808 = arith.mulf %806, %807 : vector<2x4x256xf32>
    %809 = arith.addf %801, %808 : vector<2x4x256xf32>
    %c35_267 = arith.constant 35 : index
    %c0_268 = arith.constant 0 : index
    %c0_269 = arith.constant 0 : index
    %810 = vector.load %arg3[%c35_267, %c0_268, %c0_269] : memref<72x4x1xf32, #tpu.memory_space<vmem>>, vector<1x4x1xf32>
    %811 = vector.shape_cast %810 : vector<1x4x1xf32> to vector<4x1xf32>
    %812 = vector.shape_cast %811 : vector<4x1xf32> to vector<1x4x1xf32>
    %813 = vector.extract_strided_slice %503 {offsets = [0, 3, 0], sizes = [2, 1, 256], strides = [1, 1, 1]} : vector<2x8x256xf32> to vector<2x1x256xf32>
    %814 = vector.broadcast %812 : vector<1x4x1xf32> to vector<2x4x256xf32>
    %815 = vector.broadcast %813 : vector<2x1x256xf32> to vector<2x4x256xf32>
    %816 = arith.mulf %814, %815 : vector<2x4x256xf32>
    %817 = arith.addf %809, %816 : vector<2x4x256xf32>
    %c36 = arith.constant 36 : index
    %c0_270 = arith.constant 0 : index
    %c0_271 = arith.constant 0 : index
    %818 = vector.load %arg3[%c36, %c0_270, %c0_271] : memref<72x4x1xf32, #tpu.memory_space<vmem>>, vector<1x4x1xf32>
    %819 = vector.shape_cast %818 : vector<1x4x1xf32> to vector<4x1xf32>
    %820 = vector.shape_cast %819 : vector<4x1xf32> to vector<1x4x1xf32>
    %821 = vector.extract_strided_slice %503 {offsets = [0, 4, 0], sizes = [2, 1, 256], strides = [1, 1, 1]} : vector<2x8x256xf32> to vector<2x1x256xf32>
    %822 = vector.broadcast %820 : vector<1x4x1xf32> to vector<2x4x256xf32>
    %823 = vector.broadcast %821 : vector<2x1x256xf32> to vector<2x4x256xf32>
    %824 = arith.mulf %822, %823 : vector<2x4x256xf32>
    %825 = arith.addf %817, %824 : vector<2x4x256xf32>
    %c37 = arith.constant 37 : index
    %c0_272 = arith.constant 0 : index
    %c0_273 = arith.constant 0 : index
    %826 = vector.load %arg3[%c37, %c0_272, %c0_273] : memref<72x4x1xf32, #tpu.memory_space<vmem>>, vector<1x4x1xf32>
    %827 = vector.shape_cast %826 : vector<1x4x1xf32> to vector<4x1xf32>
    %828 = vector.shape_cast %827 : vector<4x1xf32> to vector<1x4x1xf32>
    %829 = vector.extract_strided_slice %503 {offsets = [0, 5, 0], sizes = [2, 1, 256], strides = [1, 1, 1]} : vector<2x8x256xf32> to vector<2x1x256xf32>
    %830 = vector.broadcast %828 : vector<1x4x1xf32> to vector<2x4x256xf32>
    %831 = vector.broadcast %829 : vector<2x1x256xf32> to vector<2x4x256xf32>
    %832 = arith.mulf %830, %831 : vector<2x4x256xf32>
    %833 = arith.addf %825, %832 : vector<2x4x256xf32>
    %c38 = arith.constant 38 : index
    %c0_274 = arith.constant 0 : index
    %c0_275 = arith.constant 0 : index
    %834 = vector.load %arg3[%c38, %c0_274, %c0_275] : memref<72x4x1xf32, #tpu.memory_space<vmem>>, vector<1x4x1xf32>
    %835 = vector.shape_cast %834 : vector<1x4x1xf32> to vector<4x1xf32>
    %836 = vector.shape_cast %835 : vector<4x1xf32> to vector<1x4x1xf32>
    %837 = vector.extract_strided_slice %503 {offsets = [0, 6, 0], sizes = [2, 1, 256], strides = [1, 1, 1]} : vector<2x8x256xf32> to vector<2x1x256xf32>
    %838 = vector.broadcast %836 : vector<1x4x1xf32> to vector<2x4x256xf32>
    %839 = vector.broadcast %837 : vector<2x1x256xf32> to vector<2x4x256xf32>
    %840 = arith.mulf %838, %839 : vector<2x4x256xf32>
    %841 = arith.addf %833, %840 : vector<2x4x256xf32>
    %c39 = arith.constant 39 : index
    %c0_276 = arith.constant 0 : index
    %c0_277 = arith.constant 0 : index
    %842 = vector.load %arg3[%c39, %c0_276, %c0_277] : memref<72x4x1xf32, #tpu.memory_space<vmem>>, vector<1x4x1xf32>
    %843 = vector.shape_cast %842 : vector<1x4x1xf32> to vector<4x1xf32>
    %844 = vector.shape_cast %843 : vector<4x1xf32> to vector<1x4x1xf32>
    %845 = vector.extract_strided_slice %503 {offsets = [0, 7, 0], sizes = [2, 1, 256], strides = [1, 1, 1]} : vector<2x8x256xf32> to vector<2x1x256xf32>
    %846 = vector.broadcast %844 : vector<1x4x1xf32> to vector<2x4x256xf32>
    %847 = vector.broadcast %845 : vector<2x1x256xf32> to vector<2x4x256xf32>
    %848 = arith.mulf %846, %847 : vector<2x4x256xf32>
    %849 = arith.addf %841, %848 : vector<2x4x256xf32>
    %c255_i32_278 = arith.constant 255 : i32
    %850 = tpu.dynamic_rotate %503 by %c255_i32_278 dim 2 : vector<2x8x256xf32>, i32 -> vector<2x8x256xf32>
    %cst_279 = arith.constant 0.000000e+00 : f32
    %851 = vector.shape_cast %99 : vector<1x8x256xi1> to vector<1x8x256xi1>
    %852 = vector.broadcast %851 : vector<1x8x256xi1> to vector<2x8x256xi1>
    %853 = vector.broadcast %cst_279 : f32 to vector<2x8x256xf32>
    %854 = arith.select %852, %850, %853 : vector<2x8x256xi1>, vector<2x8x256xf32>
    %c40 = arith.constant 40 : index
    %c0_280 = arith.constant 0 : index
    %c0_281 = arith.constant 0 : index
    %855 = vector.load %arg3[%c40, %c0_280, %c0_281] : memref<72x4x1xf32, #tpu.memory_space<vmem>>, vector<1x4x1xf32>
    %856 = vector.shape_cast %855 : vector<1x4x1xf32> to vector<4x1xf32>
    %857 = vector.shape_cast %856 : vector<4x1xf32> to vector<1x4x1xf32>
    %858 = vector.extract_strided_slice %854 {offsets = [0, 0, 0], sizes = [2, 1, 256], strides = [1, 1, 1]} : vector<2x8x256xf32> to vector<2x1x256xf32>
    %859 = vector.broadcast %857 : vector<1x4x1xf32> to vector<2x4x256xf32>
    %860 = vector.broadcast %858 : vector<2x1x256xf32> to vector<2x4x256xf32>
    %861 = arith.mulf %859, %860 : vector<2x4x256xf32>
    %862 = arith.addf %849, %861 : vector<2x4x256xf32>
    %c41 = arith.constant 41 : index
    %c0_282 = arith.constant 0 : index
    %c0_283 = arith.constant 0 : index
    %863 = vector.load %arg3[%c41, %c0_282, %c0_283] : memref<72x4x1xf32, #tpu.memory_space<vmem>>, vector<1x4x1xf32>
    %864 = vector.shape_cast %863 : vector<1x4x1xf32> to vector<4x1xf32>
    %865 = vector.shape_cast %864 : vector<4x1xf32> to vector<1x4x1xf32>
    %866 = vector.extract_strided_slice %854 {offsets = [0, 1, 0], sizes = [2, 1, 256], strides = [1, 1, 1]} : vector<2x8x256xf32> to vector<2x1x256xf32>
    %867 = vector.broadcast %865 : vector<1x4x1xf32> to vector<2x4x256xf32>
    %868 = vector.broadcast %866 : vector<2x1x256xf32> to vector<2x4x256xf32>
    %869 = arith.mulf %867, %868 : vector<2x4x256xf32>
    %870 = arith.addf %862, %869 : vector<2x4x256xf32>
    %c42 = arith.constant 42 : index
    %c0_284 = arith.constant 0 : index
    %c0_285 = arith.constant 0 : index
    %871 = vector.load %arg3[%c42, %c0_284, %c0_285] : memref<72x4x1xf32, #tpu.memory_space<vmem>>, vector<1x4x1xf32>
    %872 = vector.shape_cast %871 : vector<1x4x1xf32> to vector<4x1xf32>
    %873 = vector.shape_cast %872 : vector<4x1xf32> to vector<1x4x1xf32>
    %874 = vector.extract_strided_slice %854 {offsets = [0, 2, 0], sizes = [2, 1, 256], strides = [1, 1, 1]} : vector<2x8x256xf32> to vector<2x1x256xf32>
    %875 = vector.broadcast %873 : vector<1x4x1xf32> to vector<2x4x256xf32>
    %876 = vector.broadcast %874 : vector<2x1x256xf32> to vector<2x4x256xf32>
    %877 = arith.mulf %875, %876 : vector<2x4x256xf32>
    %878 = arith.addf %870, %877 : vector<2x4x256xf32>
    %c43 = arith.constant 43 : index
    %c0_286 = arith.constant 0 : index
    %c0_287 = arith.constant 0 : index
    %879 = vector.load %arg3[%c43, %c0_286, %c0_287] : memref<72x4x1xf32, #tpu.memory_space<vmem>>, vector<1x4x1xf32>
    %880 = vector.shape_cast %879 : vector<1x4x1xf32> to vector<4x1xf32>
    %881 = vector.shape_cast %880 : vector<4x1xf32> to vector<1x4x1xf32>
    %882 = vector.extract_strided_slice %854 {offsets = [0, 3, 0], sizes = [2, 1, 256], strides = [1, 1, 1]} : vector<2x8x256xf32> to vector<2x1x256xf32>
    %883 = vector.broadcast %881 : vector<1x4x1xf32> to vector<2x4x256xf32>
    %884 = vector.broadcast %882 : vector<2x1x256xf32> to vector<2x4x256xf32>
    %885 = arith.mulf %883, %884 : vector<2x4x256xf32>
    %886 = arith.addf %878, %885 : vector<2x4x256xf32>
    %c44 = arith.constant 44 : index
    %c0_288 = arith.constant 0 : index
    %c0_289 = arith.constant 0 : index
    %887 = vector.load %arg3[%c44, %c0_288, %c0_289] : memref<72x4x1xf32, #tpu.memory_space<vmem>>, vector<1x4x1xf32>
    %888 = vector.shape_cast %887 : vector<1x4x1xf32> to vector<4x1xf32>
    %889 = vector.shape_cast %888 : vector<4x1xf32> to vector<1x4x1xf32>
    %890 = vector.extract_strided_slice %854 {offsets = [0, 4, 0], sizes = [2, 1, 256], strides = [1, 1, 1]} : vector<2x8x256xf32> to vector<2x1x256xf32>
    %891 = vector.broadcast %889 : vector<1x4x1xf32> to vector<2x4x256xf32>
    %892 = vector.broadcast %890 : vector<2x1x256xf32> to vector<2x4x256xf32>
    %893 = arith.mulf %891, %892 : vector<2x4x256xf32>
    %894 = arith.addf %886, %893 : vector<2x4x256xf32>
    %c45 = arith.constant 45 : index
    %c0_290 = arith.constant 0 : index
    %c0_291 = arith.constant 0 : index
    %895 = vector.load %arg3[%c45, %c0_290, %c0_291] : memref<72x4x1xf32, #tpu.memory_space<vmem>>, vector<1x4x1xf32>
    %896 = vector.shape_cast %895 : vector<1x4x1xf32> to vector<4x1xf32>
    %897 = vector.shape_cast %896 : vector<4x1xf32> to vector<1x4x1xf32>
    %898 = vector.extract_strided_slice %854 {offsets = [0, 5, 0], sizes = [2, 1, 256], strides = [1, 1, 1]} : vector<2x8x256xf32> to vector<2x1x256xf32>
    %899 = vector.broadcast %897 : vector<1x4x1xf32> to vector<2x4x256xf32>
    %900 = vector.broadcast %898 : vector<2x1x256xf32> to vector<2x4x256xf32>
    %901 = arith.mulf %899, %900 : vector<2x4x256xf32>
    %902 = arith.addf %894, %901 : vector<2x4x256xf32>
    %c46 = arith.constant 46 : index
    %c0_292 = arith.constant 0 : index
    %c0_293 = arith.constant 0 : index
    %903 = vector.load %arg3[%c46, %c0_292, %c0_293] : memref<72x4x1xf32, #tpu.memory_space<vmem>>, vector<1x4x1xf32>
    %904 = vector.shape_cast %903 : vector<1x4x1xf32> to vector<4x1xf32>
    %905 = vector.shape_cast %904 : vector<4x1xf32> to vector<1x4x1xf32>
    %906 = vector.extract_strided_slice %854 {offsets = [0, 6, 0], sizes = [2, 1, 256], strides = [1, 1, 1]} : vector<2x8x256xf32> to vector<2x1x256xf32>
    %907 = vector.broadcast %905 : vector<1x4x1xf32> to vector<2x4x256xf32>
    %908 = vector.broadcast %906 : vector<2x1x256xf32> to vector<2x4x256xf32>
    %909 = arith.mulf %907, %908 : vector<2x4x256xf32>
    %910 = arith.addf %902, %909 : vector<2x4x256xf32>
    %c47 = arith.constant 47 : index
    %c0_294 = arith.constant 0 : index
    %c0_295 = arith.constant 0 : index
    %911 = vector.load %arg3[%c47, %c0_294, %c0_295] : memref<72x4x1xf32, #tpu.memory_space<vmem>>, vector<1x4x1xf32>
    %912 = vector.shape_cast %911 : vector<1x4x1xf32> to vector<4x1xf32>
    %913 = vector.shape_cast %912 : vector<4x1xf32> to vector<1x4x1xf32>
    %914 = vector.extract_strided_slice %854 {offsets = [0, 7, 0], sizes = [2, 1, 256], strides = [1, 1, 1]} : vector<2x8x256xf32> to vector<2x1x256xf32>
    %915 = vector.broadcast %913 : vector<1x4x1xf32> to vector<2x4x256xf32>
    %916 = vector.broadcast %914 : vector<2x1x256xf32> to vector<2x4x256xf32>
    %917 = arith.mulf %915, %916 : vector<2x4x256xf32>
    %918 = arith.addf %910, %917 : vector<2x4x256xf32>
    %c241_i32_296 = arith.constant 241 : i32
    %919 = tpu.dynamic_rotate %503 by %c241_i32_296 dim 2 : vector<2x8x256xf32>, i32 -> vector<2x8x256xf32>
    %cst_297 = arith.constant 0.000000e+00 : f32
    %920 = vector.shape_cast %118 : vector<1x8x256xi1> to vector<1x8x256xi1>
    %921 = vector.broadcast %920 : vector<1x8x256xi1> to vector<2x8x256xi1>
    %922 = vector.broadcast %cst_297 : f32 to vector<2x8x256xf32>
    %923 = arith.select %921, %919, %922 : vector<2x8x256xi1>, vector<2x8x256xf32>
    %c48 = arith.constant 48 : index
    %c0_298 = arith.constant 0 : index
    %c0_299 = arith.constant 0 : index
    %924 = vector.load %arg3[%c48, %c0_298, %c0_299] : memref<72x4x1xf32, #tpu.memory_space<vmem>>, vector<1x4x1xf32>
    %925 = vector.shape_cast %924 : vector<1x4x1xf32> to vector<4x1xf32>
    %926 = vector.shape_cast %925 : vector<4x1xf32> to vector<1x4x1xf32>
    %927 = vector.extract_strided_slice %923 {offsets = [0, 0, 0], sizes = [2, 1, 256], strides = [1, 1, 1]} : vector<2x8x256xf32> to vector<2x1x256xf32>
    %928 = vector.broadcast %926 : vector<1x4x1xf32> to vector<2x4x256xf32>
    %929 = vector.broadcast %927 : vector<2x1x256xf32> to vector<2x4x256xf32>
    %930 = arith.mulf %928, %929 : vector<2x4x256xf32>
    %931 = arith.addf %509, %930 : vector<2x4x256xf32>
    %c49 = arith.constant 49 : index
    %c0_300 = arith.constant 0 : index
    %c0_301 = arith.constant 0 : index
    %932 = vector.load %arg3[%c49, %c0_300, %c0_301] : memref<72x4x1xf32, #tpu.memory_space<vmem>>, vector<1x4x1xf32>
    %933 = vector.shape_cast %932 : vector<1x4x1xf32> to vector<4x1xf32>
    %934 = vector.shape_cast %933 : vector<4x1xf32> to vector<1x4x1xf32>
    %935 = vector.extract_strided_slice %923 {offsets = [0, 1, 0], sizes = [2, 1, 256], strides = [1, 1, 1]} : vector<2x8x256xf32> to vector<2x1x256xf32>
    %936 = vector.broadcast %934 : vector<1x4x1xf32> to vector<2x4x256xf32>
    %937 = vector.broadcast %935 : vector<2x1x256xf32> to vector<2x4x256xf32>
    %938 = arith.mulf %936, %937 : vector<2x4x256xf32>
    %939 = arith.addf %931, %938 : vector<2x4x256xf32>
    %c50 = arith.constant 50 : index
    %c0_302 = arith.constant 0 : index
    %c0_303 = arith.constant 0 : index
    %940 = vector.load %arg3[%c50, %c0_302, %c0_303] : memref<72x4x1xf32, #tpu.memory_space<vmem>>, vector<1x4x1xf32>
    %941 = vector.shape_cast %940 : vector<1x4x1xf32> to vector<4x1xf32>
    %942 = vector.shape_cast %941 : vector<4x1xf32> to vector<1x4x1xf32>
    %943 = vector.extract_strided_slice %923 {offsets = [0, 2, 0], sizes = [2, 1, 256], strides = [1, 1, 1]} : vector<2x8x256xf32> to vector<2x1x256xf32>
    %944 = vector.broadcast %942 : vector<1x4x1xf32> to vector<2x4x256xf32>
    %945 = vector.broadcast %943 : vector<2x1x256xf32> to vector<2x4x256xf32>
    %946 = arith.mulf %944, %945 : vector<2x4x256xf32>
    %947 = arith.addf %939, %946 : vector<2x4x256xf32>
    %c51 = arith.constant 51 : index
    %c0_304 = arith.constant 0 : index
    %c0_305 = arith.constant 0 : index
    %948 = vector.load %arg3[%c51, %c0_304, %c0_305] : memref<72x4x1xf32, #tpu.memory_space<vmem>>, vector<1x4x1xf32>
    %949 = vector.shape_cast %948 : vector<1x4x1xf32> to vector<4x1xf32>
    %950 = vector.shape_cast %949 : vector<4x1xf32> to vector<1x4x1xf32>
    %951 = vector.extract_strided_slice %923 {offsets = [0, 3, 0], sizes = [2, 1, 256], strides = [1, 1, 1]} : vector<2x8x256xf32> to vector<2x1x256xf32>
    %952 = vector.broadcast %950 : vector<1x4x1xf32> to vector<2x4x256xf32>
    %953 = vector.broadcast %951 : vector<2x1x256xf32> to vector<2x4x256xf32>
    %954 = arith.mulf %952, %953 : vector<2x4x256xf32>
    %955 = arith.addf %947, %954 : vector<2x4x256xf32>
    %c52 = arith.constant 52 : index
    %c0_306 = arith.constant 0 : index
    %c0_307 = arith.constant 0 : index
    %956 = vector.load %arg3[%c52, %c0_306, %c0_307] : memref<72x4x1xf32, #tpu.memory_space<vmem>>, vector<1x4x1xf32>
    %957 = vector.shape_cast %956 : vector<1x4x1xf32> to vector<4x1xf32>
    %958 = vector.shape_cast %957 : vector<4x1xf32> to vector<1x4x1xf32>
    %959 = vector.extract_strided_slice %923 {offsets = [0, 4, 0], sizes = [2, 1, 256], strides = [1, 1, 1]} : vector<2x8x256xf32> to vector<2x1x256xf32>
    %960 = vector.broadcast %958 : vector<1x4x1xf32> to vector<2x4x256xf32>
    %961 = vector.broadcast %959 : vector<2x1x256xf32> to vector<2x4x256xf32>
    %962 = arith.mulf %960, %961 : vector<2x4x256xf32>
    %963 = arith.addf %955, %962 : vector<2x4x256xf32>
    %c53 = arith.constant 53 : index
    %c0_308 = arith.constant 0 : index
    %c0_309 = arith.constant 0 : index
    %964 = vector.load %arg3[%c53, %c0_308, %c0_309] : memref<72x4x1xf32, #tpu.memory_space<vmem>>, vector<1x4x1xf32>
    %965 = vector.shape_cast %964 : vector<1x4x1xf32> to vector<4x1xf32>
    %966 = vector.shape_cast %965 : vector<4x1xf32> to vector<1x4x1xf32>
    %967 = vector.extract_strided_slice %923 {offsets = [0, 5, 0], sizes = [2, 1, 256], strides = [1, 1, 1]} : vector<2x8x256xf32> to vector<2x1x256xf32>
    %968 = vector.broadcast %966 : vector<1x4x1xf32> to vector<2x4x256xf32>
    %969 = vector.broadcast %967 : vector<2x1x256xf32> to vector<2x4x256xf32>
    %970 = arith.mulf %968, %969 : vector<2x4x256xf32>
    %971 = arith.addf %963, %970 : vector<2x4x256xf32>
    %c54 = arith.constant 54 : index
    %c0_310 = arith.constant 0 : index
    %c0_311 = arith.constant 0 : index
    %972 = vector.load %arg3[%c54, %c0_310, %c0_311] : memref<72x4x1xf32, #tpu.memory_space<vmem>>, vector<1x4x1xf32>
    %973 = vector.shape_cast %972 : vector<1x4x1xf32> to vector<4x1xf32>
    %974 = vector.shape_cast %973 : vector<4x1xf32> to vector<1x4x1xf32>
    %975 = vector.extract_strided_slice %923 {offsets = [0, 6, 0], sizes = [2, 1, 256], strides = [1, 1, 1]} : vector<2x8x256xf32> to vector<2x1x256xf32>
    %976 = vector.broadcast %974 : vector<1x4x1xf32> to vector<2x4x256xf32>
    %977 = vector.broadcast %975 : vector<2x1x256xf32> to vector<2x4x256xf32>
    %978 = arith.mulf %976, %977 : vector<2x4x256xf32>
    %979 = arith.addf %971, %978 : vector<2x4x256xf32>
    %c55 = arith.constant 55 : index
    %c0_312 = arith.constant 0 : index
    %c0_313 = arith.constant 0 : index
    %980 = vector.load %arg3[%c55, %c0_312, %c0_313] : memref<72x4x1xf32, #tpu.memory_space<vmem>>, vector<1x4x1xf32>
    %981 = vector.shape_cast %980 : vector<1x4x1xf32> to vector<4x1xf32>
    %982 = vector.shape_cast %981 : vector<4x1xf32> to vector<1x4x1xf32>
    %983 = vector.extract_strided_slice %923 {offsets = [0, 7, 0], sizes = [2, 1, 256], strides = [1, 1, 1]} : vector<2x8x256xf32> to vector<2x1x256xf32>
    %984 = vector.broadcast %982 : vector<1x4x1xf32> to vector<2x4x256xf32>
    %985 = vector.broadcast %983 : vector<2x1x256xf32> to vector<2x4x256xf32>
    %986 = arith.mulf %984, %985 : vector<2x4x256xf32>
    %987 = arith.addf %979, %986 : vector<2x4x256xf32>
    %c240_i32_314 = arith.constant 240 : i32
    %988 = tpu.dynamic_rotate %503 by %c240_i32_314 dim 2 : vector<2x8x256xf32>, i32 -> vector<2x8x256xf32>
    %cst_315 = arith.constant 0.000000e+00 : f32
    %989 = vector.shape_cast %137 : vector<1x8x256xi1> to vector<1x8x256xi1>
    %990 = vector.broadcast %989 : vector<1x8x256xi1> to vector<2x8x256xi1>
    %991 = vector.broadcast %cst_315 : f32 to vector<2x8x256xf32>
    %992 = arith.select %990, %988, %991 : vector<2x8x256xi1>, vector<2x8x256xf32>
    %c56 = arith.constant 56 : index
    %c0_316 = arith.constant 0 : index
    %c0_317 = arith.constant 0 : index
    %993 = vector.load %arg3[%c56, %c0_316, %c0_317] : memref<72x4x1xf32, #tpu.memory_space<vmem>>, vector<1x4x1xf32>
    %994 = vector.shape_cast %993 : vector<1x4x1xf32> to vector<4x1xf32>
    %995 = vector.shape_cast %994 : vector<4x1xf32> to vector<1x4x1xf32>
    %996 = vector.extract_strided_slice %992 {offsets = [0, 0, 0], sizes = [2, 1, 256], strides = [1, 1, 1]} : vector<2x8x256xf32> to vector<2x1x256xf32>
    %997 = vector.broadcast %995 : vector<1x4x1xf32> to vector<2x4x256xf32>
    %998 = vector.broadcast %996 : vector<2x1x256xf32> to vector<2x4x256xf32>
    %999 = arith.mulf %997, %998 : vector<2x4x256xf32>
    %1000 = arith.addf %987, %999 : vector<2x4x256xf32>
    %c57 = arith.constant 57 : index
    %c0_318 = arith.constant 0 : index
    %c0_319 = arith.constant 0 : index
    %1001 = vector.load %arg3[%c57, %c0_318, %c0_319] : memref<72x4x1xf32, #tpu.memory_space<vmem>>, vector<1x4x1xf32>
    %1002 = vector.shape_cast %1001 : vector<1x4x1xf32> to vector<4x1xf32>
    %1003 = vector.shape_cast %1002 : vector<4x1xf32> to vector<1x4x1xf32>
    %1004 = vector.extract_strided_slice %992 {offsets = [0, 1, 0], sizes = [2, 1, 256], strides = [1, 1, 1]} : vector<2x8x256xf32> to vector<2x1x256xf32>
    %1005 = vector.broadcast %1003 : vector<1x4x1xf32> to vector<2x4x256xf32>
    %1006 = vector.broadcast %1004 : vector<2x1x256xf32> to vector<2x4x256xf32>
    %1007 = arith.mulf %1005, %1006 : vector<2x4x256xf32>
    %1008 = arith.addf %1000, %1007 : vector<2x4x256xf32>
    %c58 = arith.constant 58 : index
    %c0_320 = arith.constant 0 : index
    %c0_321 = arith.constant 0 : index
    %1009 = vector.load %arg3[%c58, %c0_320, %c0_321] : memref<72x4x1xf32, #tpu.memory_space<vmem>>, vector<1x4x1xf32>
    %1010 = vector.shape_cast %1009 : vector<1x4x1xf32> to vector<4x1xf32>
    %1011 = vector.shape_cast %1010 : vector<4x1xf32> to vector<1x4x1xf32>
    %1012 = vector.extract_strided_slice %992 {offsets = [0, 2, 0], sizes = [2, 1, 256], strides = [1, 1, 1]} : vector<2x8x256xf32> to vector<2x1x256xf32>
    %1013 = vector.broadcast %1011 : vector<1x4x1xf32> to vector<2x4x256xf32>
    %1014 = vector.broadcast %1012 : vector<2x1x256xf32> to vector<2x4x256xf32>
    %1015 = arith.mulf %1013, %1014 : vector<2x4x256xf32>
    %1016 = arith.addf %1008, %1015 : vector<2x4x256xf32>
    %c59 = arith.constant 59 : index
    %c0_322 = arith.constant 0 : index
    %c0_323 = arith.constant 0 : index
    %1017 = vector.load %arg3[%c59, %c0_322, %c0_323] : memref<72x4x1xf32, #tpu.memory_space<vmem>>, vector<1x4x1xf32>
    %1018 = vector.shape_cast %1017 : vector<1x4x1xf32> to vector<4x1xf32>
    %1019 = vector.shape_cast %1018 : vector<4x1xf32> to vector<1x4x1xf32>
    %1020 = vector.extract_strided_slice %992 {offsets = [0, 3, 0], sizes = [2, 1, 256], strides = [1, 1, 1]} : vector<2x8x256xf32> to vector<2x1x256xf32>
    %1021 = vector.broadcast %1019 : vector<1x4x1xf32> to vector<2x4x256xf32>
    %1022 = vector.broadcast %1020 : vector<2x1x256xf32> to vector<2x4x256xf32>
    %1023 = arith.mulf %1021, %1022 : vector<2x4x256xf32>
    %1024 = arith.addf %1016, %1023 : vector<2x4x256xf32>
    %c60 = arith.constant 60 : index
    %c0_324 = arith.constant 0 : index
    %c0_325 = arith.constant 0 : index
    %1025 = vector.load %arg3[%c60, %c0_324, %c0_325] : memref<72x4x1xf32, #tpu.memory_space<vmem>>, vector<1x4x1xf32>
    %1026 = vector.shape_cast %1025 : vector<1x4x1xf32> to vector<4x1xf32>
    %1027 = vector.shape_cast %1026 : vector<4x1xf32> to vector<1x4x1xf32>
    %1028 = vector.extract_strided_slice %992 {offsets = [0, 4, 0], sizes = [2, 1, 256], strides = [1, 1, 1]} : vector<2x8x256xf32> to vector<2x1x256xf32>
    %1029 = vector.broadcast %1027 : vector<1x4x1xf32> to vector<2x4x256xf32>
    %1030 = vector.broadcast %1028 : vector<2x1x256xf32> to vector<2x4x256xf32>
    %1031 = arith.mulf %1029, %1030 : vector<2x4x256xf32>
    %1032 = arith.addf %1024, %1031 : vector<2x4x256xf32>
    %c61 = arith.constant 61 : index
    %c0_326 = arith.constant 0 : index
    %c0_327 = arith.constant 0 : index
    %1033 = vector.load %arg3[%c61, %c0_326, %c0_327] : memref<72x4x1xf32, #tpu.memory_space<vmem>>, vector<1x4x1xf32>
    %1034 = vector.shape_cast %1033 : vector<1x4x1xf32> to vector<4x1xf32>
    %1035 = vector.shape_cast %1034 : vector<4x1xf32> to vector<1x4x1xf32>
    %1036 = vector.extract_strided_slice %992 {offsets = [0, 5, 0], sizes = [2, 1, 256], strides = [1, 1, 1]} : vector<2x8x256xf32> to vector<2x1x256xf32>
    %1037 = vector.broadcast %1035 : vector<1x4x1xf32> to vector<2x4x256xf32>
    %1038 = vector.broadcast %1036 : vector<2x1x256xf32> to vector<2x4x256xf32>
    %1039 = arith.mulf %1037, %1038 : vector<2x4x256xf32>
    %1040 = arith.addf %1032, %1039 : vector<2x4x256xf32>
    %c62 = arith.constant 62 : index
    %c0_328 = arith.constant 0 : index
    %c0_329 = arith.constant 0 : index
    %1041 = vector.load %arg3[%c62, %c0_328, %c0_329] : memref<72x4x1xf32, #tpu.memory_space<vmem>>, vector<1x4x1xf32>
    %1042 = vector.shape_cast %1041 : vector<1x4x1xf32> to vector<4x1xf32>
    %1043 = vector.shape_cast %1042 : vector<4x1xf32> to vector<1x4x1xf32>
    %1044 = vector.extract_strided_slice %992 {offsets = [0, 6, 0], sizes = [2, 1, 256], strides = [1, 1, 1]} : vector<2x8x256xf32> to vector<2x1x256xf32>
    %1045 = vector.broadcast %1043 : vector<1x4x1xf32> to vector<2x4x256xf32>
    %1046 = vector.broadcast %1044 : vector<2x1x256xf32> to vector<2x4x256xf32>
    %1047 = arith.mulf %1045, %1046 : vector<2x4x256xf32>
    %1048 = arith.addf %1040, %1047 : vector<2x4x256xf32>
    %c63 = arith.constant 63 : index
    %c0_330 = arith.constant 0 : index
    %c0_331 = arith.constant 0 : index
    %1049 = vector.load %arg3[%c63, %c0_330, %c0_331] : memref<72x4x1xf32, #tpu.memory_space<vmem>>, vector<1x4x1xf32>
    %1050 = vector.shape_cast %1049 : vector<1x4x1xf32> to vector<4x1xf32>
    %1051 = vector.shape_cast %1050 : vector<4x1xf32> to vector<1x4x1xf32>
    %1052 = vector.extract_strided_slice %992 {offsets = [0, 7, 0], sizes = [2, 1, 256], strides = [1, 1, 1]} : vector<2x8x256xf32> to vector<2x1x256xf32>
    %1053 = vector.broadcast %1051 : vector<1x4x1xf32> to vector<2x4x256xf32>
    %1054 = vector.broadcast %1052 : vector<2x1x256xf32> to vector<2x4x256xf32>
    %1055 = arith.mulf %1053, %1054 : vector<2x4x256xf32>
    %1056 = arith.addf %1048, %1055 : vector<2x4x256xf32>
    %c239_i32_332 = arith.constant 239 : i32
    %1057 = tpu.dynamic_rotate %503 by %c239_i32_332 dim 2 : vector<2x8x256xf32>, i32 -> vector<2x8x256xf32>
    %cst_333 = arith.constant 0.000000e+00 : f32
    %1058 = vector.shape_cast %156 : vector<1x8x256xi1> to vector<1x8x256xi1>
    %1059 = vector.broadcast %1058 : vector<1x8x256xi1> to vector<2x8x256xi1>
    %1060 = vector.broadcast %cst_333 : f32 to vector<2x8x256xf32>
    %1061 = arith.select %1059, %1057, %1060 : vector<2x8x256xi1>, vector<2x8x256xf32>
    %c64 = arith.constant 64 : index
    %c0_334 = arith.constant 0 : index
    %c0_335 = arith.constant 0 : index
    %1062 = vector.load %arg3[%c64, %c0_334, %c0_335] : memref<72x4x1xf32, #tpu.memory_space<vmem>>, vector<1x4x1xf32>
    %1063 = vector.shape_cast %1062 : vector<1x4x1xf32> to vector<4x1xf32>
    %1064 = vector.shape_cast %1063 : vector<4x1xf32> to vector<1x4x1xf32>
    %1065 = vector.extract_strided_slice %1061 {offsets = [0, 0, 0], sizes = [2, 1, 256], strides = [1, 1, 1]} : vector<2x8x256xf32> to vector<2x1x256xf32>
    %1066 = vector.broadcast %1064 : vector<1x4x1xf32> to vector<2x4x256xf32>
    %1067 = vector.broadcast %1065 : vector<2x1x256xf32> to vector<2x4x256xf32>
    %1068 = arith.mulf %1066, %1067 : vector<2x4x256xf32>
    %1069 = arith.addf %1056, %1068 : vector<2x4x256xf32>
    %c65 = arith.constant 65 : index
    %c0_336 = arith.constant 0 : index
    %c0_337 = arith.constant 0 : index
    %1070 = vector.load %arg3[%c65, %c0_336, %c0_337] : memref<72x4x1xf32, #tpu.memory_space<vmem>>, vector<1x4x1xf32>
    %1071 = vector.shape_cast %1070 : vector<1x4x1xf32> to vector<4x1xf32>
    %1072 = vector.shape_cast %1071 : vector<4x1xf32> to vector<1x4x1xf32>
    %1073 = vector.extract_strided_slice %1061 {offsets = [0, 1, 0], sizes = [2, 1, 256], strides = [1, 1, 1]} : vector<2x8x256xf32> to vector<2x1x256xf32>
    %1074 = vector.broadcast %1072 : vector<1x4x1xf32> to vector<2x4x256xf32>
    %1075 = vector.broadcast %1073 : vector<2x1x256xf32> to vector<2x4x256xf32>
    %1076 = arith.mulf %1074, %1075 : vector<2x4x256xf32>
    %1077 = arith.addf %1069, %1076 : vector<2x4x256xf32>
    %c66 = arith.constant 66 : index
    %c0_338 = arith.constant 0 : index
    %c0_339 = arith.constant 0 : index
    %1078 = vector.load %arg3[%c66, %c0_338, %c0_339] : memref<72x4x1xf32, #tpu.memory_space<vmem>>, vector<1x4x1xf32>
    %1079 = vector.shape_cast %1078 : vector<1x4x1xf32> to vector<4x1xf32>
    %1080 = vector.shape_cast %1079 : vector<4x1xf32> to vector<1x4x1xf32>
    %1081 = vector.extract_strided_slice %1061 {offsets = [0, 2, 0], sizes = [2, 1, 256], strides = [1, 1, 1]} : vector<2x8x256xf32> to vector<2x1x256xf32>
    %1082 = vector.broadcast %1080 : vector<1x4x1xf32> to vector<2x4x256xf32>
    %1083 = vector.broadcast %1081 : vector<2x1x256xf32> to vector<2x4x256xf32>
    %1084 = arith.mulf %1082, %1083 : vector<2x4x256xf32>
    %1085 = arith.addf %1077, %1084 : vector<2x4x256xf32>
    %c67 = arith.constant 67 : index
    %c0_340 = arith.constant 0 : index
    %c0_341 = arith.constant 0 : index
    %1086 = vector.load %arg3[%c67, %c0_340, %c0_341] : memref<72x4x1xf32, #tpu.memory_space<vmem>>, vector<1x4x1xf32>
    %1087 = vector.shape_cast %1086 : vector<1x4x1xf32> to vector<4x1xf32>
    %1088 = vector.shape_cast %1087 : vector<4x1xf32> to vector<1x4x1xf32>
    %1089 = vector.extract_strided_slice %1061 {offsets = [0, 3, 0], sizes = [2, 1, 256], strides = [1, 1, 1]} : vector<2x8x256xf32> to vector<2x1x256xf32>
    %1090 = vector.broadcast %1088 : vector<1x4x1xf32> to vector<2x4x256xf32>
    %1091 = vector.broadcast %1089 : vector<2x1x256xf32> to vector<2x4x256xf32>
    %1092 = arith.mulf %1090, %1091 : vector<2x4x256xf32>
    %1093 = arith.addf %1085, %1092 : vector<2x4x256xf32>
    %c68 = arith.constant 68 : index
    %c0_342 = arith.constant 0 : index
    %c0_343 = arith.constant 0 : index
    %1094 = vector.load %arg3[%c68, %c0_342, %c0_343] : memref<72x4x1xf32, #tpu.memory_space<vmem>>, vector<1x4x1xf32>
    %1095 = vector.shape_cast %1094 : vector<1x4x1xf32> to vector<4x1xf32>
    %1096 = vector.shape_cast %1095 : vector<4x1xf32> to vector<1x4x1xf32>
    %1097 = vector.extract_strided_slice %1061 {offsets = [0, 4, 0], sizes = [2, 1, 256], strides = [1, 1, 1]} : vector<2x8x256xf32> to vector<2x1x256xf32>
    %1098 = vector.broadcast %1096 : vector<1x4x1xf32> to vector<2x4x256xf32>
    %1099 = vector.broadcast %1097 : vector<2x1x256xf32> to vector<2x4x256xf32>
    %1100 = arith.mulf %1098, %1099 : vector<2x4x256xf32>
    %1101 = arith.addf %1093, %1100 : vector<2x4x256xf32>
    %c69 = arith.constant 69 : index
    %c0_344 = arith.constant 0 : index
    %c0_345 = arith.constant 0 : index
    %1102 = vector.load %arg3[%c69, %c0_344, %c0_345] : memref<72x4x1xf32, #tpu.memory_space<vmem>>, vector<1x4x1xf32>
    %1103 = vector.shape_cast %1102 : vector<1x4x1xf32> to vector<4x1xf32>
    %1104 = vector.shape_cast %1103 : vector<4x1xf32> to vector<1x4x1xf32>
    %1105 = vector.extract_strided_slice %1061 {offsets = [0, 5, 0], sizes = [2, 1, 256], strides = [1, 1, 1]} : vector<2x8x256xf32> to vector<2x1x256xf32>
    %1106 = vector.broadcast %1104 : vector<1x4x1xf32> to vector<2x4x256xf32>
    %1107 = vector.broadcast %1105 : vector<2x1x256xf32> to vector<2x4x256xf32>
    %1108 = arith.mulf %1106, %1107 : vector<2x4x256xf32>
    %1109 = arith.addf %1101, %1108 : vector<2x4x256xf32>
    %c70 = arith.constant 70 : index
    %c0_346 = arith.constant 0 : index
    %c0_347 = arith.constant 0 : index
    %1110 = vector.load %arg3[%c70, %c0_346, %c0_347] : memref<72x4x1xf32, #tpu.memory_space<vmem>>, vector<1x4x1xf32>
    %1111 = vector.shape_cast %1110 : vector<1x4x1xf32> to vector<4x1xf32>
    %1112 = vector.shape_cast %1111 : vector<4x1xf32> to vector<1x4x1xf32>
    %1113 = vector.extract_strided_slice %1061 {offsets = [0, 6, 0], sizes = [2, 1, 256], strides = [1, 1, 1]} : vector<2x8x256xf32> to vector<2x1x256xf32>
    %1114 = vector.broadcast %1112 : vector<1x4x1xf32> to vector<2x4x256xf32>
    %1115 = vector.broadcast %1113 : vector<2x1x256xf32> to vector<2x4x256xf32>
    %1116 = arith.mulf %1114, %1115 : vector<2x4x256xf32>
    %1117 = arith.addf %1109, %1116 : vector<2x4x256xf32>
    %c71 = arith.constant 71 : index
    %c0_348 = arith.constant 0 : index
    %c0_349 = arith.constant 0 : index
    %1118 = vector.load %arg3[%c71, %c0_348, %c0_349] : memref<72x4x1xf32, #tpu.memory_space<vmem>>, vector<1x4x1xf32>
    %1119 = vector.shape_cast %1118 : vector<1x4x1xf32> to vector<4x1xf32>
    %1120 = vector.shape_cast %1119 : vector<4x1xf32> to vector<1x4x1xf32>
    %1121 = vector.extract_strided_slice %1061 {offsets = [0, 7, 0], sizes = [2, 1, 256], strides = [1, 1, 1]} : vector<2x8x256xf32> to vector<2x1x256xf32>
    %1122 = vector.broadcast %1120 : vector<1x4x1xf32> to vector<2x4x256xf32>
    %1123 = vector.broadcast %1121 : vector<2x1x256xf32> to vector<2x4x256xf32>
    %1124 = arith.mulf %1122, %1123 : vector<2x4x256xf32>
    %1125 = arith.addf %1117, %1124 : vector<2x4x256xf32>
    %1126 = arith.addf %716, %918 : vector<2x4x256xf32>
    %1127 = arith.addf %1126, %1125 : vector<2x4x256xf32>
    %cst_350 = arith.constant 0.000000e+00 : f32
    %1128 = vector.broadcast %cst_350 : f32 to vector<2x4x256xf32>
    %1129 = arith.maximumf %1127, %1128 : vector<2x4x256xf32>
    %c0_351 = arith.constant 0 : index
    %c0_352 = arith.constant 0 : index
    %c0_353 = arith.constant 0 : index
    %1130 = vector.load %arg5[%c0_351, %c0_352, %c0_353] : memref<2x4x256xf32, #tpu.memory_space<vmem>>, vector<2x4x256xf32>
    tpu.vector_store %arg5[%c0_351, %c0_352, %c0_353], %1129 {strides = array<i32>} : memref<2x4x256xf32, #tpu.memory_space<vmem>>, vector<2x4x256xf32>,
    return
  }
}

</mosaic_0001>

<llo_original>
// kernel: custom_model_forward.1
$region0: #{custom_model_forward.1}
  #allocation0 [shape = 'u32[]', space=smem, size = 0x4, offset = 0x4, fixed_abs, tag = 'smem constant byte address 0x4 - core index']
  #allocation1 [shape = 'u32[144,128]{1,0:T(1,128)}', space=vmem, size = 0x12000, scoped, tag = 'internal scratch']
  %s0 = inlined_call_operand.vmem [shape: f32[2,4,256], index: 0, kind: input, shape index: {}]
  %s1 = inlined_call_operand.hbm [shape: f32[36,8,1], index: 1, kind: input, shape index: {}]
  %s2 = inlined_call_operand.vmem [shape: f32[8,1], index: 2, kind: input, shape index: {}]
  %s3 = inlined_call_operand.hbm [shape: f32[72,4,1], index: 3, kind: input, shape index: {}]
  %s4 = inlined_call_operand.vmem [shape: f32[4,1], index: 4, kind: input, shape index: {}]
  %s5 = inlined_call_operand.vmem [shape: f32[2,4,256], index: 5, kind: output, shape index: {}]
  %s6 = sld [smem:[#allocation0]]
  $region38: #{custom_model_forward.1} parent=0
    _
  %s8 = ssub.s32 1, %s6
  %s9 = scalar_select 0, %s8, %s6
  $region1: #{custom_model_forward.1} parent=0
    #allocation2 [shape = 'u8[147456]{0}', space=vmem, size = 0x24000, scoped, tag = 'input window, operand 1, single buffered']
    #allocation3 [shape = 's32[1]{0}', space=sflag, size = 0x4, scoped, tag = 'scoped memory for custom_model_forward.1']
    #allocation4 [shape = 'u8[147456]{0}', space=vmem, size = 0x24000, scoped, tag = 'input window, operand 3, single buffered']
    #allocation5 [shape = 's32[1]{0}', space=sflag, size = 0x4, scoped, tag = 'scoped memory for custom_model_forward.1']
    %10 = vsyncpa [#allocation3], 0
    %11 = vsyncpa [#allocation5], 0
    // Predicated region
    $region2: #{custom_model_forward.1} parent=1 // pred_check
      _
    $region3: #{custom_model_forward.1} parent=1 // pred_check_branch
      %13 = sbr.rel (0) target = $region5
    $region4: #{custom_model_forward.1} parent=1 // pred_region
      _
    $region5: #{custom_model_forward.1} parent=1 // pred_fallthru
      _
    // Predicated region
    $region6: #{custom_model_forward.1} parent=1 // pred_check
      _
    $region7: #{custom_model_forward.1} parent=1 // pred_check_branch
      %15 = sbr.rel (0) target = $region9
    $region8: #{custom_model_forward.1} parent=1 // pred_region
      %s17 = ssub.s32 4608, 4608
      %18 = vsyncadd [#allocation3], %s17
      %s19 = sshll.u32 [#allocation2], 4
      %s20 = int_to_ptr.vmem [resolvable:$true] %s19
      %25 = dma.hbm_to_vmem [thread:$0]  %s1, 4608, %s20, [#allocation3], 128, 128, 8
    $region9: #{custom_model_forward.1} parent=1 // pred_fallthru
      _
    // Predicated region
    $region10: #{custom_model_forward.1} parent=1 // pred_check
      _
    $region11: #{custom_model_forward.1} parent=1 // pred_check_branch
      %27 = sbr.rel (0) target = $region13
    $region12: #{custom_model_forward.1} parent=1 // pred_region
      _
    $region13: #{custom_model_forward.1} parent=1 // pred_fallthru
      _
    // Predicated region
    $region14: #{custom_model_forward.1} parent=1 // pred_check
      _
    $region15: #{custom_model_forward.1} parent=1 // pred_check_branch
      %29 = sbr.rel (0) target = $region17
    $region16: #{custom_model_forward.1} parent=1 // pred_region
      %s31 = ssub.s32 4608, 4608
      %32 = vsyncadd [#allocation5], %s31
      %s33 = sshll.u32 [#allocation4], 4
      %s34 = int_to_ptr.vmem [resolvable:$true] %s33
      %39 = dma.hbm_to_vmem [thread:$0]  %s3, 4608, %s34, [#allocation5], 64, 64, 4
    $region17: #{custom_model_forward.1} parent=1 // pred_fallthru
      _
    // Predicated region
    $region18: #{custom_model_forward.1} parent=1 // pred_check
      _
    $region19: #{custom_model_forward.1} parent=1 // pred_check_branch
      %41 = sbr.rel (0) target = $region21
    $region20: #{custom_model_forward.1} parent=1 // pred_region
      _
    $region21: #{custom_model_forward.1} parent=1 // pred_fallthru
      _
    // Predicated region
    $region22: #{custom_model_forward.1} parent=1 // pred_check
      _
    $region23: #{custom_model_forward.1} parent=1 // pred_check_branch
      %43 = sbr.rel (0) target = $region25
    $region24: #{custom_model_forward.1} parent=1 // pred_region
      %44 = dma.done [#allocation3], 4608
    $region25: #{custom_model_forward.1} parent=1 // pred_fallthru
      _
    // Predicated region
    $region26: #{custom_model_forward.1} parent=1 // pred_check
      _
    $region27: #{custom_model_forward.1} parent=1 // pred_check_branch
      %46 = sbr.rel (0) target = $region29
    $region28: #{custom_model_forward.1} parent=1 // pred_region
      %47 = dma.done [#allocation5], 4608
    $region29: #{custom_model_forward.1} parent=1 // pred_fallthru
      _
    %v48 = vlaneseq
    %v49 = vand.u32 %v48, 127
    %v50 = vadd.s32 %v49, 128
    %v51 = vshra.s32 %v49, 4
    %v52 = vshra.s32 %v50, 4
    %v53 = vand.u32 %v49, 15
    %v54 = vand.u32 %v50, 15
    %v55 = vadd.s32 %v51, 4294967295
    %v56 = vadd.s32 %v52, 4294967295
    %vm57 = vcmp.ge.s32.totalorder %v55, 0
    %vm58 = vcmp.ge.s32.totalorder %v56, 0
    %vm59 = vcmp.lt.s32.totalorder %v55, 16
    %vm60 = vcmp.lt.s32.totalorder %v56, 16
    %vm61 = vmand %vm57, %vm59
    %vm62 = vmand %vm58, %vm60
    %v63 = vadd.s32 %v53, 4294967295
    %v64 = vadd.s32 %v54, 4294967295
    %vm65 = vcmp.ge.s32.totalorder %v63, 0
    %vm66 = vcmp.ge.s32.totalorder %v64, 0
    %vm67 = vmand %vm61, %vm65
    %vm68 = vmand %vm62, %vm66
    %vm69 = vcmp.lt.s32.totalorder %v63, 16
    %vm70 = vcmp.lt.s32.totalorder %v64, 16
    %vm71 = vmand %vm67, %vm69
    %vm72 = vmand %vm68, %vm70
    %vm73 = vcmp.ge.s32.totalorder %v53, 0
    %vm74 = vcmp.ge.s32.totalorder %v54, 0
    %vm75 = vmand %vm61, %vm73
    %vm76 = vmand %vm62, %vm74
    %vm77 = vcmp.lt.s32.totalorder %v53, 16
    %vm78 = vcmp.lt.s32.totalorder %v54, 16
    %vm79 = vmand %vm75, %vm77
    %vm80 = vmand %vm76, %vm78
    %v81 = vadd.s32 %v53, 1
    %v82 = vadd.s32 %v54, 1
    %vm83 = vcmp.ge.s32.totalorder %v81, 0
    %vm84 = vcmp.ge.s32.totalorder %v82, 0
    %vm85 = vmand %vm61, %vm83
    %vm86 = vmand %vm62, %vm84
    %vm87 = vcmp.lt.s32.totalorder %v81, 16
    %vm88 = vcmp.lt.s32.totalorder %v82, 16
    %vm89 = vmand %vm85, %vm87
    %vm90 = vmand %vm86, %vm88
    %vm91 = vcmp.ge.s32.totalorder %v51, 0
    %vm92 = vcmp.ge.s32.totalorder %v52, 0
    %vm93 = vcmp.lt.s32.totalorder %v51, 16
    %vm94 = vcmp.lt.s32.totalorder %v52, 16
    %vm95 = vmand %vm91, %vm93
    %vm96 = vmand %vm92, %vm94
    %vm97 = vmand %vm95, %vm65
    %vm98 = vmand %vm96, %vm66
    %vm99 = vmand %vm97, %vm69
    %vm100 = vmand %vm98, %vm70
    %vm101 = vmand %vm95, %vm83
    %vm102 = vmand %vm96, %vm84
    %vm103 = vmand %vm101, %vm87
    %vm104 = vmand %vm102, %vm88
    %v105 = vadd.s32 %v51, 1
    %v106 = vadd.s32 %v52, 1
    %vm107 = vcmp.ge.s32.totalorder %v105, 0
    %vm108 = vcmp.ge.s32.totalorder %v106, 0
    %vm109 = vcmp.lt.s32.totalorder %v105, 16
    %vm110 = vcmp.lt.s32.totalorder %v106, 16
    %vm111 = vmand %vm107, %vm109
    %vm112 = vmand %vm108, %vm110
    %vm113 = vmand %vm111, %vm65
    %vm114 = vmand %vm112, %vm66
    %vm115 = vmand %vm113, %vm69
    %vm116 = vmand %vm114, %vm70
    %vm117 = vmand %vm111, %vm73
    %vm118 = vmand %vm112, %vm74
    %vm119 = vmand %vm117, %vm77
    %vm120 = vmand %vm118, %vm78
    %vm121 = vmand %vm111, %vm83
    %vm122 = vmand %vm112, %vm84
    %vm123 = vmand %vm121, %vm87
    %vm124 = vmand %vm122, %vm88
    %v125 = vld [vmem:[%s0] sm:$0xff]
    %v126 = vld [vmem:[%s0 + $0x8] sm:$0xff]
    %v127 = vld [vmem:[%s2] sm:$0xff]
    %129 = vset.pattern.permute.xlu0 0
    %130 = vperm.xlu0 %129, %v127
    %v131 = vpop.permute.xlu0 %130
    %v135 = vcombine.high %v125, %v125
    %v136 = vcombine.high %v126, %v126
    %139 = vrot.lane.b32.xlu0 %v125, 17
    %v140 = vpop.permute.xlu0 %139
    %141 = vrot.lane.b32.xlu0 %v126, 17
    %v142 = vpop.permute.xlu0 %141
    %143 = vrot.lane.b32.xlu0 %v135, 17
    %v144 = vpop.permute.xlu0 %143
    %145 = vrot.lane.b32.xlu0 %v136, 17
    %v146 = vpop.permute.xlu0 %145
    %vm147 = vcmp.lt.s32.totalorder %v49, 17
    %v148 = vsel %vm147, %v140, %v144
    %v149 = vsel %vm147, %v142, %v146
    %v150 = vsel %vm147, %v144, %v140
    %v151 = vsel %vm147, %v146, %v142
    %v152 = vsel %vm71, 1, 0
    %v153 = vsel %vm72, 1, 0
    %vm154 = vcmp.eq.s32.totalorder %v152, 1
    %vm155 = vcmp.eq.s32.totalorder %v153, 1
    %v156 = vsel %vm154, %v150, 0.0
    %v157 = vsel %vm155, %v148, 0.0
    %v158 = vsel %vm154, %v151, 0.0
    %v159 = vsel %vm155, %v149, 0.0
    %v160 = vld [vmem:[#allocation2] sm:$0xff]
    %162 = vset.pattern.permute.xlu0 0
    %163 = vperm.xlu0 %162, %v160
    %v164 = vpop.permute.xlu0 %163
    %v166 = vlaneseq
    %v167 = vshrl.u32 %v166, 7
    %v168 = vsub.s32 0, %v167
    %v169 = vrot.slane %v156, %v168
    %v170 = vlaneseq
    %v171 = vshrl.u32 %v170, 7
    %v172 = vsub.s32 0, %v171
    %v173 = vrot.slane %v157, %v172
    %v174 = vlaneseq
    %v175 = vshrl.u32 %v174, 7
    %v176 = vsub.s32 0, %v175
    %v177 = vrot.slane %v158, %v176
    %v178 = vlaneseq
    %v179 = vshrl.u32 %v178, 7
    %v180 = vsub.s32 0, %v179
    %v181 = vrot.slane %v159, %v180
    %v182 = vmul.f32 %v164, %v169
    %v183 = vmul.f32 %v164, %v173
    %v184 = vmul.f32 %v164, %v177
    %v185 = vmul.f32 %v164, %v181
    %v186 = vadd.f32 %v131, %v182
    %v187 = vadd.f32 %v131, %v183
    %v188 = vadd.f32 %v131, %v184
    %v189 = vadd.f32 %v131, %v185
    %s190 = scalar_lea.vmem [#allocation2], 8
    %v191 = vld [vmem:[%s190] sm:$0xff]
    %193 = vset.pattern.permute.xlu0 0
    %194 = vperm.xlu0 %193, %v191
    %v195 = vpop.permute.xlu0 %194
    %v197 = vlaneseq
    %v198 = vshrl.u32 %v197, 7
    %v199 = vsub.s32 1, %v198
    %v200 = vrot.slane %v156, %v199
    %v201 = vlaneseq
    %v202 = vshrl.u32 %v201, 7
    %v203 = vsub.s32 1, %v202
    %v204 = vrot.slane %v157, %v203
    %v205 = vlaneseq
    %v206 = vshrl.u32 %v205, 7
    %v207 = vsub.s32 1, %v206
    %v208 = vrot.slane %v158, %v207
    %v209 = vlaneseq
    %v210 = vshrl.u32 %v209, 7
    %v211 = vsub.s32 1, %v210
    %v212 = vrot.slane %v159, %v211
    %v213 = vmul.f32 %v195, %v200
    %v214 = vmul.f32 %v195, %v204
    %v215 = vmul.f32 %v195, %v208
    %v216 = vmul.f32 %v195, %v212
    %v217 = vadd.f32 %v186, %v213
    %v218 = vadd.f32 %v187, %v214
    %v219 = vadd.f32 %v188, %v215
    %v220 = vadd.f32 %v189, %v216
    %s221 = scalar_lea.vmem [#allocation2], 16
    %v222 = vld [vmem:[%s221] sm:$0xff]
    %224 = vset.pattern.permute.xlu0 0
    %225 = vperm.xlu0 %224, %v222
    %v226 = vpop.permute.xlu0 %225
    %v228 = vlaneseq
    %v229 = vshrl.u32 %v228, 7
    %v230 = vsub.s32 2, %v229
    %v231 = vrot.slane %v156, %v230
    %v232 = vlaneseq
    %v233 = vshrl.u32 %v232, 7
    %v234 = vsub.s32 2, %v233
    %v235 = vrot.slane %v157, %v234
    %v236 = vlaneseq
    %v237 = vshrl.u32 %v236, 7
    %v238 = vsub.s32 2, %v237
    %v239 = vrot.slane %v158, %v238
    %v240 = vlaneseq
    %v241 = vshrl.u32 %v240, 7
    %v242 = vsub.s32 2, %v241
    %v243 = vrot.slane %v159, %v242
    %v244 = vmul.f32 %v226, %v231
    %v245 = vmul.f32 %v226, %v235
    %v246 = vmul.f32 %v226, %v239
    %v247 = vmul.f32 %v226, %v243
    %v248 = vadd.f32 %v217, %v244
    %v249 = vadd.f32 %v218, %v245
    %v250 = vadd.f32 %v219, %v246
    %v251 = vadd.f32 %v220, %v247
    %s252 = scalar_lea.vmem [#allocation2], 24
    %v253 = vld [vmem:[%s252] sm:$0xff]
    %255 = vset.pattern.permute.xlu0 0
    %256 = vperm.xlu0 %255, %v253
    %v257 = vpop.permute.xlu0 %256
    %v259 = vlaneseq
    %v260 = vshrl.u32 %v259, 7
    %v261 = vsub.s32 3, %v260
    %v262 = vrot.slane %v156, %v261
    %v263 = vlaneseq
    %v264 = vshrl.u32 %v263, 7
    %v265 = vsub.s32 3, %v264
    %v266 = vrot.slane %v157, %v265
    %v267 = vlaneseq
    %v268 = vshrl.u32 %v267, 7
    %v269 = vsub.s32 3, %v268
    %v270 = vrot.slane %v158, %v269
    %v271 = vlaneseq
    %v272 = vshrl.u32 %v271, 7
    %v273 = vsub.s32 3, %v272
    %v274 = vrot.slane %v159, %v273
    %v275 = vmul.f32 %v257, %v262
    %v276 = vmul.f32 %v257, %v266
    %v277 = vmul.f32 %v257, %v270
    %v278 = vmul.f32 %v257, %v274
    %v279 = vadd.f32 %v248, %v275
    %v280 = vadd.f32 %v249, %v276
    %v281 = vadd.f32 %v250, %v277
    %v282 = vadd.f32 %v251, %v278
    %283 = vrot.lane.b32.xlu0 %v125, 16
    %v284 = vpop.permute.xlu0 %283
    %285 = vrot.lane.b32.xlu0 %v126, 16
    %v286 = vpop.permute.xlu0 %285
    %287 = vrot.lane.b32.xlu0 %v135, 16
    %v288 = vpop.permute.xlu0 %287
    %289 = vrot.lane.b32.xlu0 %v136, 16
    %v290 = vpop.permute.xlu0 %289
    %vm291 = vcmp.lt.s32.totalorder %v49, 16
    %v292 = vsel %vm291, %v284, %v288
    %v293 = vsel %vm291, %v286, %v290
    %v294 = vsel %vm291, %v288, %v284
    %v295 = vsel %vm291, %v290, %v286
    %v296 = vsel %vm79, 1, 0
    %v297 = vsel %vm80, 1, 0
    %vm298 = vcmp.eq.s32.totalorder %v296, 1
    %vm299 = vcmp.eq.s32.totalorder %v297, 1
    %v300 = vsel %vm298, %v294, 0.0
    %v301 = vsel %vm299, %v292, 0.0
    %v302 = vsel %vm298, %v295, 0.0
    %v303 = vsel %vm299, %v293, 0.0
    %s304 = scalar_lea.vmem [#allocation2], 32
    %v305 = vld [vmem:[%s304] sm:$0xff]
    %307 = vset.pattern.permute.xlu0 0
    %308 = vperm.xlu0 %307, %v305
    %v309 = vpop.permute.xlu0 %308
    %v311 = vlaneseq
    %v312 = vshrl.u32 %v311, 7
    %v313 = vsub.s32 0, %v312
    %v314 = vrot.slane %v300, %v313
    %v315 = vlaneseq
    %v316 = vshrl.u32 %v315, 7
    %v317 = vsub.s32 0, %v316
    %v318 = vrot.slane %v301, %v317
    %v319 = vlaneseq
    %v320 = vshrl.u32 %v319, 7
    %v321 = vsub.s32 0, %v320
    %v322 = vrot.slane %v302, %v321
    %v323 = vlaneseq
    %v324 = vshrl.u32 %v323, 7
    %v325 = vsub.s32 0, %v324
    %v326 = vrot.slane %v303, %v325
    %v327 = vmul.f32 %v309, %v314
    %v328 = vmul.f32 %v309, %v318
    %v329 = vmul.f32 %v309, %v322
    %v330 = vmul.f32 %v309, %v326
    %v331 = vadd.f32 %v279, %v327
    %v332 = vadd.f32 %v280, %v328
    %v333 = vadd.f32 %v281, %v329
    %v334 = vadd.f32 %v282, %v330
    %s335 = scalar_lea.vmem [#allocation2], 40
    %v336 = vld [vmem:[%s335] sm:$0xff]
    %338 = vset.pattern.permute.xlu0 0
    %339 = vperm.xlu0 %338, %v336
    %v340 = vpop.permute.xlu0 %339
    %v342 = vlaneseq
    %v343 = vshrl.u32 %v342, 7
    %v344 = vsub.s32 1, %v343
    %v345 = vrot.slane %v300, %v344
    %v346 = vlaneseq
    %v347 = vshrl.u32 %v346, 7
    %v348 = vsub.s32 1, %v347
    %v349 = vrot.slane %v301, %v348
    %v350 = vlaneseq
    %v351 = vshrl.u32 %v350, 7
    %v352 = vsub.s32 1, %v351
    %v353 = vrot.slane %v302, %v352
    %v354 = vlaneseq
    %v355 = vshrl.u32 %v354, 7
    %v356 = vsub.s32 1, %v355
    %v357 = vrot.slane %v303, %v356
    %v358 = vmul.f32 %v340, %v345
    %v359 = vmul.f32 %v340, %v349
    %v360 = vmul.f32 %v340, %v353
    %v361 = vmul.f32 %v340, %v357
    %v362 = vadd.f32 %v331, %v358
    %v363 = vadd.f32 %v332, %v359
    %v364 = vadd.f32 %v333, %v360
    %v365 = vadd.f32 %v334, %v361
    %s366 = scalar_lea.vmem [#allocation2], 48
    %v367 = vld [vmem:[%s366] sm:$0xff]
    %369 = vset.pattern.permute.xlu0 0
    %370 = vperm.xlu0 %369, %v367
    %v371 = vpop.permute.xlu0 %370
    %v373 = vlaneseq
    %v374 = vshrl.u32 %v373, 7
    %v375 = vsub.s32 2, %v374
    %v376 = vrot.slane %v300, %v375
    %v377 = vlaneseq
    %v378 = vshrl.u32 %v377, 7
    %v379 = vsub.s32 2, %v378
    %v380 = vrot.slane %v301, %v379
    %v381 = vlaneseq
    %v382 = vshrl.u32 %v381, 7
    %v383 = vsub.s32 2, %v382
    %v384 = vrot.slane %v302, %v383
    %v385 = vlaneseq
    %v386 = vshrl.u32 %v385, 7
    %v387 = vsub.s32 2, %v386
    %v388 = vrot.slane %v303, %v387
    %v389 = vmul.f32 %v371, %v376
    %v390 = vmul.f32 %v371, %v380
    %v391 = vmul.f32 %v371, %v384
    %v392 = vmul.f32 %v371, %v388
    %v393 = vadd.f32 %v362, %v389
    %v394 = vadd.f32 %v363, %v390
    %v395 = vadd.f32 %v364, %v391
    %v396 = vadd.f32 %v365, %v392
    %s397 = scalar_lea.vmem [#allocation2], 56
    %v398 = vld [vmem:[%s397] sm:$0xff]
    %400 = vset.pattern.permute.xlu0 0
    %401 = vperm.xlu0 %400, %v398
    %v402 = vpop.permute.xlu0 %401
    %v404 = vlaneseq
    %v405 = vshrl.u32 %v404, 7
    %v406 = vsub.s32 3, %v405
    %v407 = vrot.slane %v300, %v406
    %v408 = vlaneseq
    %v409 = vshrl.u32 %v408, 7
    %v410 = vsub.s32 3, %v409
    %v411 = vrot.slane %v301, %v410
    %v412 = vlaneseq
    %v413 = vshrl.u32 %v412, 7
    %v414 = vsub.s32 3, %v413
    %v415 = vrot.slane %v302, %v414
    %v416 = vlaneseq
    %v417 = vshrl.u32 %v416, 7
    %v418 = vsub.s32 3, %v417
    %v419 = vrot.slane %v303, %v418
    %v420 = vmul.f32 %v402, %v407
    %v421 = vmul.f32 %v402, %v411
    %v422 = vmul.f32 %v402, %v415
    %v423 = vmul.f32 %v402, %v419
    %v424 = vadd.f32 %v393, %v420
    %v425 = vadd.f32 %v394, %v421
    %v426 = vadd.f32 %v395, %v422
    %v427 = vadd.f32 %v396, %v423
    %428 = vrot.lane.b32.xlu0 %v125, 15
    %v429 = vpop.permute.xlu0 %428
    %430 = vrot.lane.b32.xlu0 %v126, 15
    %v431 = vpop.permute.xlu0 %430
    %432 = vrot.lane.b32.xlu0 %v135, 15
    %v433 = vpop.permute.xlu0 %432
    %434 = vrot.lane.b32.xlu0 %v136, 15
    %v435 = vpop.permute.xlu0 %434
    %vm436 = vcmp.lt.s32.totalorder %v49, 15
    %v437 = vsel %vm436, %v429, %v433
    %v438 = vsel %vm436, %v431, %v435
    %v439 = vsel %vm436, %v433, %v429
    %v440 = vsel %vm436, %v435, %v431
    %v441 = vsel %vm89, 1, 0
    %v442 = vsel %vm90, 1, 0
    %vm443 = vcmp.eq.s32.totalorder %v441, 1
    %vm444 = vcmp.eq.s32.totalorder %v442, 1
    %v445 = vsel %vm443, %v439, 0.0
    %v446 = vsel %vm444, %v437, 0.0
    %v447 = vsel %vm443, %v440, 0.0
    %v448 = vsel %vm444, %v438, 0.0
    %s449 = scalar_lea.vmem [#allocation2], 64
    %v450 = vld [vmem:[%s449] sm:$0xff]
    %452 = vset.pattern.permute.xlu0 0
    %453 = vperm.xlu0 %452, %v450
    %v454 = vpop.permute.xlu0 %453
    %v456 = vlaneseq
    %v457 = vshrl.u32 %v456, 7
    %v458 = vsub.s32 0, %v457
    %v459 = vrot.slane %v445, %v458
    %v460 = vlaneseq
    %v461 = vshrl.u32 %v460, 7
    %v462 = vsub.s32 0, %v461
    %v463 = vrot.slane %v446, %v462
    %v464 = vlaneseq
    %v465 = vshrl.u32 %v464, 7
    %v466 = vsub.s32 0, %v465
    %v467 = vrot.slane %v447, %v466
    %v468 = vlaneseq
    %v469 = vshrl.u32 %v468, 7
    %v470 = vsub.s32 0, %v469
    %v471 = vrot.slane %v448, %v470
    %v472 = vmul.f32 %v454, %v459
    %v473 = vmul.f32 %v454, %v463
    %v474 = vmul.f32 %v454, %v467
    %v475 = vmul.f32 %v454, %v471
    %v476 = vadd.f32 %v424, %v472
    %v477 = vadd.f32 %v425, %v473
    %v478 = vadd.f32 %v426, %v474
    %v479 = vadd.f32 %v427, %v475
    %s480 = scalar_lea.vmem [#allocation2], 72
    %v481 = vld [vmem:[%s480] sm:$0xff]
    %483 = vset.pattern.permute.xlu0 0
    %484 = vperm.xlu0 %483, %v481
    %v485 = vpop.permute.xlu0 %484
    %v487 = vlaneseq
    %v488 = vshrl.u32 %v487, 7
    %v489 = vsub.s32 1, %v488
    %v490 = vrot.slane %v445, %v489
    %v491 = vlaneseq
    %v492 = vshrl.u32 %v491, 7
    %v493 = vsub.s32 1, %v492
    %v494 = vrot.slane %v446, %v493
    %v495 = vlaneseq
    %v496 = vshrl.u32 %v495, 7
    %v497 = vsub.s32 1, %v496
    %v498 = vrot.slane %v447, %v497
    %v499 = vlaneseq
    %v500 = vshrl.u32 %v499, 7
    %v501 = vsub.s32 1, %v500
    %v502 = vrot.slane %v448, %v501
    %v503 = vmul.f32 %v485, %v490
    %v504 = vmul.f32 %v485, %v494
    %v505 = vmul.f32 %v485, %v498
    %v506 = vmul.f32 %v485, %v502
    %v507 = vadd.f32 %v476, %v503
    %v508 = vadd.f32 %v477, %v504
    %v509 = vadd.f32 %v478, %v505
    %v510 = vadd.f32 %v479, %v506
    %s511 = scalar_lea.vmem [#allocation2], 80
    %v512 = vld [vmem:[%s511] sm:$0xff]
    %514 = vset.pattern.permute.xlu0 0
    %515 = vperm.xlu0 %514, %v512
    %v516 = vpop.permute.xlu0 %515
    %v518 = vlaneseq
    %v519 = vshrl.u32 %v518, 7
    %v520 = vsub.s32 2, %v519
    %v521 = vrot.slane %v445, %v520
    %v522 = vlaneseq
    %v523 = vshrl.u32 %v522, 7
    %v524 = vsub.s32 2, %v523
    %v525 = vrot.slane %v446, %v524
    %v526 = vlaneseq
    %v527 = vshrl.u32 %v526, 7
    %v528 = vsub.s32 2, %v527
    %v529 = vrot.slane %v447, %v528
    %v530 = vlaneseq
    %v531 = vshrl.u32 %v530, 7
    %v532 = vsub.s32 2, %v531
    %v533 = vrot.slane %v448, %v532
    %v534 = vmul.f32 %v516, %v521
    %v535 = vmul.f32 %v516, %v525
    %v536 = vmul.f32 %v516, %v529
    %v537 = vmul.f32 %v516, %v533
    %v538 = vadd.f32 %v507, %v534
    %v539 = vadd.f32 %v508, %v535
    %v540 = vadd.f32 %v509, %v536
    %v541 = vadd.f32 %v510, %v537
    %s542 = scalar_lea.vmem [#allocation2], 88
    %v543 = vld [vmem:[%s542] sm:$0xff]
    %545 = vset.pattern.permute.xlu0 0
    %546 = vperm.xlu0 %545, %v543
    %v547 = vpop.permute.xlu0 %546
    %v549 = vlaneseq
    %v550 = vshrl.u32 %v549, 7
    %v551 = vsub.s32 3, %v550
    %v552 = vrot.slane %v445, %v551
    %v553 = vlaneseq
    %v554 = vshrl.u32 %v553, 7
    %v555 = vsub.s32 3, %v554
    %v556 = vrot.slane %v446, %v555
    %v557 = vlaneseq
    %v558 = vshrl.u32 %v557, 7
    %v559 = vsub.s32 3, %v558
    %v560 = vrot.slane %v447, %v559
    %v561 = vlaneseq
    %v562 = vshrl.u32 %v561, 7
    %v563 = vsub.s32 3, %v562
    %v564 = vrot.slane %v448, %v563
    %v565 = vmul.f32 %v547, %v552
    %v566 = vmul.f32 %v547, %v556
    %v567 = vmul.f32 %v547, %v560
    %v568 = vmul.f32 %v547, %v564
    %v569 = vadd.f32 %v538, %v565
    %v570 = vadd.f32 %v539, %v566
    %v571 = vadd.f32 %v540, %v567
    %v572 = vadd.f32 %v541, %v568
    %573 = vrot.lane.b32.xlu0 %v125, 1
    %v574 = vpop.permute.xlu0 %573
    %575 = vrot.lane.b32.xlu0 %v126, 1
    %v576 = vpop.permute.xlu0 %575
    %577 = vrot.lane.b32.xlu0 %v135, 1
    %v578 = vpop.permute.xlu0 %577
    %579 = vrot.lane.b32.xlu0 %v136, 1
    %v580 = vpop.permute.xlu0 %579
    %vm581 = vcmp.lt.s32.totalorder %v49, 1
    %v582 = vsel %vm581, %v574, %v578
    %v583 = vsel %vm581, %v576, %v580
    %v584 = vsel %vm581, %v578, %v574
    %v585 = vsel %vm581, %v580, %v576
    %v586 = vsel %vm99, 1, 0
    %v587 = vsel %vm100, 1, 0
    %vm588 = vcmp.eq.s32.totalorder %v586, 1
    %vm589 = vcmp.eq.s32.totalorder %v587, 1
    %v590 = vsel %vm588, %v584, 0.0
    %v591 = vsel %vm589, %v582, 0.0
    %v592 = vsel %vm588, %v585, 0.0
    %v593 = vsel %vm589, %v583, 0.0
    %s594 = scalar_lea.vmem [#allocation2], 96
    %v595 = vld [vmem:[%s594] sm:$0xff]
    %597 = vset.pattern.permute.xlu0 0
    %598 = vperm.xlu0 %597, %v595
    %v599 = vpop.permute.xlu0 %598
    %v601 = vlaneseq
    %v602 = vshrl.u32 %v601, 7
    %v603 = vsub.s32 0, %v602
    %v604 = vrot.slane %v590, %v603
    %v605 = vlaneseq
    %v606 = vshrl.u32 %v605, 7
    %v607 = vsub.s32 0, %v606
    %v608 = vrot.slane %v591, %v607
    %v609 = vlaneseq
    %v610 = vshrl.u32 %v609, 7
    %v611 = vsub.s32 0, %v610
    %v612 = vrot.slane %v592, %v611
    %v613 = vlaneseq
    %v614 = vshrl.u32 %v613, 7
    %v615 = vsub.s32 0, %v614
    %v616 = vrot.slane %v593, %v615
    %v617 = vmul.f32 %v599, %v604
    %v618 = vmul.f32 %v599, %v608
    %v619 = vmul.f32 %v599, %v612
    %v620 = vmul.f32 %v599, %v616
    %v621 = vadd.f32 %v617, 0.0
    %v622 = vadd.f32 %v618, 0.0
    %v623 = vadd.f32 %v619, 0.0
    %v624 = vadd.f32 %v620, 0.0
    %s625 = scalar_lea.vmem [#allocation2], 104
    %v626 = vld [vmem:[%s625] sm:$0xff]
    %628 = vset.pattern.permute.xlu0 0
    %629 = vperm.xlu0 %628, %v626
    %v630 = vpop.permute.xlu0 %629
    %v632 = vlaneseq
    %v633 = vshrl.u32 %v632, 7
    %v634 = vsub.s32 1, %v633
    %v635 = vrot.slane %v590, %v634
    %v636 = vlaneseq
    %v637 = vshrl.u32 %v636, 7
    %v638 = vsub.s32 1, %v637
    %v639 = vrot.slane %v591, %v638
    %v640 = vlaneseq
    %v641 = vshrl.u32 %v640, 7
    %v642 = vsub.s32 1, %v641
    %v643 = vrot.slane %v592, %v642
    %v644 = vlaneseq
    %v645 = vshrl.u32 %v644, 7
    %v646 = vsub.s32 1, %v645
    %v647 = vrot.slane %v593, %v646
    %v648 = vmul.f32 %v630, %v635
    %v649 = vmul.f32 %v630, %v639
    %v650 = vmul.f32 %v630, %v643
    %v651 = vmul.f32 %v630, %v647
    %v652 = vadd.f32 %v621, %v648
    %v653 = vadd.f32 %v622, %v649
    %v654 = vadd.f32 %v623, %v650
    %v655 = vadd.f32 %v624, %v651
    %s656 = scalar_lea.vmem [#allocation2], 112
    %v657 = vld [vmem:[%s656] sm:$0xff]
    %659 = vset.pattern.permute.xlu0 0
    %660 = vperm.xlu0 %659, %v657
    %v661 = vpop.permute.xlu0 %660
    %v663 = vlaneseq
    %v664 = vshrl.u32 %v663, 7
    %v665 = vsub.s32 2, %v664
    %v666 = vrot.slane %v590, %v665
    %v667 = vlaneseq
    %v668 = vshrl.u32 %v667, 7
    %v669 = vsub.s32 2, %v668
    %v670 = vrot.slane %v591, %v669
    %v671 = vlaneseq
    %v672 = vshrl.u32 %v671, 7
    %v673 = vsub.s32 2, %v672
    %v674 = vrot.slane %v592, %v673
    %v675 = vlaneseq
    %v676 = vshrl.u32 %v675, 7
    %v677 = vsub.s32 2, %v676
    %v678 = vrot.slane %v593, %v677
    %v679 = vmul.f32 %v661, %v666
    %v680 = vmul.f32 %v661, %v670
    %v681 = vmul.f32 %v661, %v674
    %v682 = vmul.f32 %v661, %v678
    %v683 = vadd.f32 %v652, %v679
    %v684 = vadd.f32 %v653, %v680
    %v685 = vadd.f32 %v654, %v681
    %v686 = vadd.f32 %v655, %v682
    %s687 = scalar_lea.vmem [#allocation2], 120
    %v688 = vld [vmem:[%s687] sm:$0xff]
    %690 = vset.pattern.permute.xlu0 0
    %691 = vperm.xlu0 %690, %v688
    %v692 = vpop.permute.xlu0 %691
    %v694 = vlaneseq
    %v695 = vshrl.u32 %v694, 7
    %v696 = vsub.s32 3, %v695
    %v697 = vrot.slane %v590, %v696
    %v698 = vlaneseq
    %v699 = vshrl.u32 %v698, 7
    %v700 = vsub.s32 3, %v699
    %v701 = vrot.slane %v591, %v700
    %v702 = vlaneseq
    %v703 = vshrl.u32 %v702, 7
    %v704 = vsub.s32 3, %v703
    %v705 = vrot.slane %v592, %v704
    %v706 = vlaneseq
    %v707 = vshrl.u32 %v706, 7
    %v708 = vsub.s32 3, %v707
    %v709 = vrot.slane %v593, %v708
    %v710 = vmul.f32 %v692, %v697
    %v711 = vmul.f32 %v692, %v701
    %v712 = vmul.f32 %v692, %v705
    %v713 = vmul.f32 %v692, %v709
    %v714 = vadd.f32 %v683, %v710
    %v715 = vadd.f32 %v684, %v711
    %v716 = vadd.f32 %v685, %v712
    %v717 = vadd.f32 %v686, %v713
    %s718 = scalar_lea.vmem [#allocation2], 128
    %v719 = vld [vmem:[%s718] sm:$0xff]
    %721 = vset.pattern.permute.xlu0 0
    %722 = vperm.xlu0 %721, %v719
    %v723 = vpop.permute.xlu0 %722
    %v725 = vlaneseq
    %v726 = vshrl.u32 %v725, 7
    %v727 = vsub.s32 0, %v726
    %v728 = vrot.slane %v125, %v727
    %v729 = vlaneseq
    %v730 = vshrl.u32 %v729, 7
    %v731 = vsub.s32 4, %v730
    %v732 = vrot.slane %v125, %v731
    %v733 = vlaneseq
    %v734 = vshrl.u32 %v733, 7
    %v735 = vsub.s32 0, %v734
    %v736 = vrot.slane %v126, %v735
    %v737 = vlaneseq
    %v738 = vshrl.u32 %v737, 7
    %v739 = vsub.s32 4, %v738
    %v740 = vrot.slane %v126, %v739
    %v745 = vlaneseq
    %v746 = vshrl.u32 %v745, 7
    %v747 = vsub.s32 0, %v746
    %v748 = vrot.slane %v728, %v747
    %v749 = vlaneseq
    %v750 = vshrl.u32 %v749, 7
    %v751 = vsub.s32 0, %v750
    %v752 = vrot.slane %v732, %v751
    %v753 = vlaneseq
    %v754 = vshrl.u32 %v753, 7
    %v755 = vsub.s32 0, %v754
    %v756 = vrot.slane %v736, %v755
    %v757 = vlaneseq
    %v758 = vshrl.u32 %v757, 7
    %v759 = vsub.s32 0, %v758
    %v760 = vrot.slane %v740, %v759
    %v761 = vmul.f32 %v723, %v748
    %v762 = vmul.f32 %v723, %v752
    %v763 = vmul.f32 %v723, %v756
    %v764 = vmul.f32 %v723, %v760
    %v765 = vadd.f32 %v714, %v761
    %v766 = vadd.f32 %v715, %v762
    %v767 = vadd.f32 %v716, %v763
    %v768 = vadd.f32 %v717, %v764
    %s769 = scalar_lea.vmem [#allocation2], 136
    %v770 = vld [vmem:[%s769] sm:$0xff]
    %772 = vset.pattern.permute.xlu0 0
    %773 = vperm.xlu0 %772, %v770
    %v774 = vpop.permute.xlu0 %773
    %v776 = vlaneseq
    %v777 = vshrl.u32 %v776, 7
    %v778 = vsub.s32 1, %v777
    %v779 = vrot.slane %v125, %v778
    %v780 = vlaneseq
    %v781 = vshrl.u32 %v780, 7
    %v782 = vsub.s32 5, %v781
    %v783 = vrot.slane %v125, %v782
    %v784 = vlaneseq
    %v785 = vshrl.u32 %v784, 7
    %v786 = vsub.s32 1, %v785
    %v787 = vrot.slane %v126, %v786
    %v788 = vlaneseq
    %v789 = vshrl.u32 %v788, 7
    %v790 = vsub.s32 5, %v789
    %v791 = vrot.slane %v126, %v790
    %v796 = vlaneseq
    %v797 = vshrl.u32 %v796, 7
    %v798 = vsub.s32 1, %v797
    %v799 = vrot.slane %v779, %v798
    %v800 = vlaneseq
    %v801 = vshrl.u32 %v800, 7
    %v802 = vsub.s32 1, %v801
    %v803 = vrot.slane %v783, %v802
    %v804 = vlaneseq
    %v805 = vshrl.u32 %v804, 7
    %v806 = vsub.s32 1, %v805
    %v807 = vrot.slane %v787, %v806
    %v808 = vlaneseq
    %v809 = vshrl.u32 %v808, 7
    %v810 = vsub.s32 1, %v809
    %v811 = vrot.slane %v791, %v810
    %v812 = vmul.f32 %v774, %v799
    %v813 = vmul.f32 %v774, %v803
    %v814 = vmul.f32 %v774, %v807
    %v815 = vmul.f32 %v774, %v811
    %v816 = vadd.f32 %v765, %v812
    %v817 = vadd.f32 %v766, %v813
    %v818 = vadd.f32 %v767, %v814
    %v819 = vadd.f32 %v768, %v815
    %s820 = scalar_lea.vmem [#allocation2], 144
    %v821 = vld [vmem:[%s820] sm:$0xff]
    %823 = vset.pattern.permute.xlu0 0
    %824 = vperm.xlu0 %823, %v821
    %v825 = vpop.permute.xlu0 %824
    %v827 = vlaneseq
    %v828 = vshrl.u32 %v827, 7
    %v829 = vsub.s32 2, %v828
    %v830 = vrot.slane %v125, %v829
    %v831 = vlaneseq
    %v832 = vshrl.u32 %v831, 7
    %v833 = vsub.s32 6, %v832
    %v834 = vrot.slane %v125, %v833
    %v835 = vlaneseq
    %v836 = vshrl.u32 %v835, 7
    %v837 = vsub.s32 2, %v836
    %v838 = vrot.slane %v126, %v837
    %v839 = vlaneseq
    %v840 = vshrl.u32 %v839, 7
    %v841 = vsub.s32 6, %v840
    %v842 = vrot.slane %v126, %v841
    %v847 = vlaneseq
    %v848 = vshrl.u32 %v847, 7
    %v849 = vsub.s32 2, %v848
    %v850 = vrot.slane %v830, %v849
    %v851 = vlaneseq
    %v852 = vshrl.u32 %v851, 7
    %v853 = vsub.s32 2, %v852
    %v854 = vrot.slane %v834, %v853
    %v855 = vlaneseq
    %v856 = vshrl.u32 %v855, 7
    %v857 = vsub.s32 2, %v856
    %v858 = vrot.slane %v838, %v857
    %v859 = vlaneseq
    %v860 = vshrl.u32 %v859, 7
    %v861 = vsub.s32 2, %v860
    %v862 = vrot.slane %v842, %v861
    %v863 = vmul.f32 %v825, %v850
    %v864 = vmul.f32 %v825, %v854
    %v865 = vmul.f32 %v825, %v858
    %v866 = vmul.f32 %v825, %v862
    %v867 = vadd.f32 %v816, %v863
    %v868 = vadd.f32 %v817, %v864
    %v869 = vadd.f32 %v818, %v865
    %v870 = vadd.f32 %v819, %v866
    %s871 = scalar_lea.vmem [#allocation2], 152
    %v872 = vld [vmem:[%s871] sm:$0xff]
    %874 = vset.pattern.permute.xlu0 0
    %875 = vperm.xlu0 %874, %v872
    %v876 = vpop.permute.xlu0 %875
    %v878 = vlaneseq
    %v879 = vshrl.u32 %v878, 7
    %v880 = vsub.s32 3, %v879
    %v881 = vrot.slane %v125, %v880
    %v882 = vlaneseq
    %v883 = vshrl.u32 %v882, 7
    %v884 = vsub.s32 7, %v883
    %v885 = vrot.slane %v125, %v884
    %v886 = vlaneseq
    %v887 = vshrl.u32 %v886, 7
    %v888 = vsub.s32 3, %v887
    %v889 = vrot.slane %v126, %v888
    %v890 = vlaneseq
    %v891 = vshrl.u32 %v890, 7
    %v892 = vsub.s32 7, %v891
    %v893 = vrot.slane %v126, %v892
    %v898 = vlaneseq
    %v899 = vshrl.u32 %v898, 7
    %v900 = vsub.s32 3, %v899
    %v901 = vrot.slane %v881, %v900
    %v902 = vlaneseq
    %v903 = vshrl.u32 %v902, 7
    %v904 = vsub.s32 3, %v903
    %v905 = vrot.slane %v885, %v904
    %v906 = vlaneseq
    %v907 = vshrl.u32 %v906, 7
    %v908 = vsub.s32 3, %v907
    %v909 = vrot.slane %v889, %v908
    %v910 = vlaneseq
    %v911 = vshrl.u32 %v910, 7
    %v912 = vsub.s32 3, %v911
    %v913 = vrot.slane %v893, %v912
    %v914 = vmul.f32 %v876, %v901
    %v915 = vmul.f32 %v876, %v905
    %v916 = vmul.f32 %v876, %v909
    %v917 = vmul.f32 %v876, %v913
    %v918 = vadd.f32 %v867, %v914
    %v919 = vadd.f32 %v868, %v915
    %v920 = vadd.f32 %v869, %v916
    %v921 = vadd.f32 %v870, %v917
    %922 = vrot.lane.b32.xlu0 %v125, 127
    %v923 = vpop.permute.xlu0 %922
    %924 = vrot.lane.b32.xlu0 %v126, 127
    %v925 = vpop.permute.xlu0 %924
    %926 = vrot.lane.b32.xlu0 %v135, 127
    %v927 = vpop.permute.xlu0 %926
    %928 = vrot.lane.b32.xlu0 %v136, 127
    %v929 = vpop.permute.xlu0 %928
    %vm930 = vcmp.lt.s32.totalorder %v49, 127
    %v931 = vsel %vm930, %v923, %v927
    %v932 = vsel %vm930, %v925, %v929
    %v933 = vsel %vm930, %v927, %v923
    %v934 = vsel %vm930, %v929, %v925
    %v935 = vsel %vm103, 1, 0
    %v936 = vsel %vm104, 1, 0
    %vm937 = vcmp.eq.s32.totalorder %v935, 1
    %vm938 = vcmp.eq.s32.totalorder %v936, 1
    %v939 = vsel %vm937, %v931, 0.0
    %v940 = vsel %vm938, %v933, 0.0
    %v941 = vsel %vm937, %v932, 0.0
    %v942 = vsel %vm938, %v934, 0.0
    %s943 = scalar_lea.vmem [#allocation2], 160
    %v944 = vld [vmem:[%s943] sm:$0xff]
    %946 = vset.pattern.permute.xlu0 0
    %947 = vperm.xlu0 %946, %v944
    %v948 = vpop.permute.xlu0 %947
    %v950 = vlaneseq
    %v951 = vshrl.u32 %v950, 7
    %v952 = vsub.s32 0, %v951
    %v953 = vrot.slane %v939, %v952
    %v954 = vlaneseq
    %v955 = vshrl.u32 %v954, 7
    %v956 = vsub.s32 0, %v955
    %v957 = vrot.slane %v940, %v956
    %v958 = vlaneseq
    %v959 = vshrl.u32 %v958, 7
    %v960 = vsub.s32 0, %v959
    %v961 = vrot.slane %v941, %v960
    %v962 = vlaneseq
    %v963 = vshrl.u32 %v962, 7
    %v964 = vsub.s32 0, %v963
    %v965 = vrot.slane %v942, %v964
    %v966 = vmul.f32 %v948, %v953
    %v967 = vmul.f32 %v948, %v957
    %v968 = vmul.f32 %v948, %v961
    %v969 = vmul.f32 %v948, %v965
    %v970 = vadd.f32 %v918, %v966
    %v971 = vadd.f32 %v919, %v967
    %v972 = vadd.f32 %v920, %v968
    %v973 = vadd.f32 %v921, %v969
    %s974 = scalar_lea.vmem [#allocation2], 168
    %v975 = vld [vmem:[%s974] sm:$0xff]
    %977 = vset.pattern.permute.xlu0 0
    %978 = vperm.xlu0 %977, %v975
    %v979 = vpop.permute.xlu0 %978
    %v981 = vlaneseq
    %v982 = vshrl.u32 %v981, 7
    %v983 = vsub.s32 1, %v982
    %v984 = vrot.slane %v939, %v983
    %v985 = vlaneseq
    %v986 = vshrl.u32 %v985, 7
    %v987 = vsub.s32 1, %v986
    %v988 = vrot.slane %v940, %v987
    %v989 = vlaneseq
    %v990 = vshrl.u32 %v989, 7
    %v991 = vsub.s32 1, %v990
    %v992 = vrot.slane %v941, %v991
    %v993 = vlaneseq
    %v994 = vshrl.u32 %v993, 7
    %v995 = vsub.s32 1, %v994
    %v996 = vrot.slane %v942, %v995
    %v997 = vmul.f32 %v979, %v984
    %v998 = vmul.f32 %v979, %v988
    %v999 = vmul.f32 %v979, %v992
    %v1000 = vmul.f32 %v979, %v996
    %v1001 = vadd.f32 %v970, %v997
    %v1002 = vadd.f32 %v971, %v998
    %v1003 = vadd.f32 %v972, %v999
    %v1004 = vadd.f32 %v973, %v1000
    %s1005 = scalar_lea.vmem [#allocation2], 176
    %v1006 = vld [vmem:[%s1005] sm:$0xff]
    %1008 = vset.pattern.permute.xlu0 0
    %1009 = vperm.xlu0 %1008, %v1006
    %v1010 = vpop.permute.xlu0 %1009
    %v1012 = vlaneseq
    %v1013 = vshrl.u32 %v1012, 7
    %v1014 = vsub.s32 2, %v1013
    %v1015 = vrot.slane %v939, %v1014
    %v1016 = vlaneseq
    %v1017 = vshrl.u32 %v1016, 7
    %v1018 = vsub.s32 2, %v1017
    %v1019 = vrot.slane %v940, %v1018
    %v1020 = vlaneseq
    %v1021 = vshrl.u32 %v1020, 7
    %v1022 = vsub.s32 2, %v1021
    %v1023 = vrot.slane %v941, %v1022
    %v1024 = vlaneseq
    %v1025 = vshrl.u32 %v1024, 7
    %v1026 = vsub.s32 2, %v1025
    %v1027 = vrot.slane %v942, %v1026
    %v1028 = vmul.f32 %v1010, %v1015
    %v1029 = vmul.f32 %v1010, %v1019
    %v1030 = vmul.f32 %v1010, %v1023
    %v1031 = vmul.f32 %v1010, %v1027
    %v1032 = vadd.f32 %v1001, %v1028
    %v1033 = vadd.f32 %v1002, %v1029
    %v1034 = vadd.f32 %v1003, %v1030
    %v1035 = vadd.f32 %v1004, %v1031
    %s1036 = scalar_lea.vmem [#allocation2], 184
    %v1037 = vld [vmem:[%s1036] sm:$0xff]
    %1039 = vset.pattern.permute.xlu0 0
    %1040 = vperm.xlu0 %1039, %v1037
    %v1041 = vpop.permute.xlu0 %1040
    %v1043 = vlaneseq
    %v1044 = vshrl.u32 %v1043, 7
    %v1045 = vsub.s32 3, %v1044
    %v1046 = vrot.slane %v939, %v1045
    %v1047 = vlaneseq
    %v1048 = vshrl.u32 %v1047, 7
    %v1049 = vsub.s32 3, %v1048
    %v1050 = vrot.slane %v940, %v1049
    %v1051 = vlaneseq
    %v1052 = vshrl.u32 %v1051, 7
    %v1053 = vsub.s32 3, %v1052
    %v1054 = vrot.slane %v941, %v1053
    %v1055 = vlaneseq
    %v1056 = vshrl.u32 %v1055, 7
    %v1057 = vsub.s32 3, %v1056
    %v1058 = vrot.slane %v942, %v1057
    %v1059 = vmul.f32 %v1041, %v1046
    %v1060 = vmul.f32 %v1041, %v1050
    %v1061 = vmul.f32 %v1041, %v1054
    %v1062 = vmul.f32 %v1041, %v1058
    %v1063 = vadd.f32 %v1032, %v1059
    %v1064 = vadd.f32 %v1033, %v1060
    %v1065 = vadd.f32 %v1034, %v1061
    %v1066 = vadd.f32 %v1035, %v1062
    %1067 = vrot.lane.b32.xlu0 %v125, 113
    %v1068 = vpop.permute.xlu0 %1067
    %1069 = vrot.lane.b32.xlu0 %v126, 113
    %v1070 = vpop.permute.xlu0 %1069
    %1071 = vrot.lane.b32.xlu0 %v135, 113
    %v1072 = vpop.permute.xlu0 %1071
    %1073 = vrot.lane.b32.xlu0 %v136, 113
    %v1074 = vpop.permute.xlu0 %1073
    %vm1075 = vcmp.lt.s32.totalorder %v49, 113
    %v1076 = vsel %vm1075, %v1068, %v1072
    %v1077 = vsel %vm1075, %v1070, %v1074
    %v1078 = vsel %vm1075, %v1072, %v1068
    %v1079 = vsel %vm1075, %v1074, %v1070
    %v1080 = vsel %vm115, 1, 0
    %v1081 = vsel %vm116, 1, 0
    %vm1082 = vcmp.eq.s32.totalorder %v1080, 1
    %vm1083 = vcmp.eq.s32.totalorder %v1081, 1
    %v1084 = vsel %vm1082, %v1076, 0.0
    %v1085 = vsel %vm1083, %v1078, 0.0
    %v1086 = vsel %vm1082, %v1077, 0.0
    %v1087 = vsel %vm1083, %v1079, 0.0
    %s1088 = scalar_lea.vmem [#allocation2], 192
    %v1089 = vld [vmem:[%s1088] sm:$0xff]
    %1091 = vset.pattern.permute.xlu0 0
    %1092 = vperm.xlu0 %1091, %v1089
    %v1093 = vpop.permute.xlu0 %1092
    %v1095 = vlaneseq
    %v1096 = vshrl.u32 %v1095, 7
    %v1097 = vsub.s32 0, %v1096
    %v1098 = vrot.slane %v1084, %v1097
    %v1099 = vlaneseq
    %v1100 = vshrl.u32 %v1099, 7
    %v1101 = vsub.s32 0, %v1100
    %v1102 = vrot.slane %v1085, %v1101
    %v1103 = vlaneseq
    %v1104 = vshrl.u32 %v1103, 7
    %v1105 = vsub.s32 0, %v1104
    %v1106 = vrot.slane %v1086, %v1105
    %v1107 = vlaneseq
    %v1108 = vshrl.u32 %v1107, 7
    %v1109 = vsub.s32 0, %v1108
    %v1110 = vrot.slane %v1087, %v1109
    %v1111 = vmul.f32 %v1093, %v1098
    %v1112 = vmul.f32 %v1093, %v1102
    %v1113 = vmul.f32 %v1093, %v1106
    %v1114 = vmul.f32 %v1093, %v1110
    %v1115 = vadd.f32 %v1111, 0.0
    %v1116 = vadd.f32 %v1112, 0.0
    %v1117 = vadd.f32 %v1113, 0.0
    %v1118 = vadd.f32 %v1114, 0.0
    %s1119 = scalar_lea.vmem [#allocation2], 200
    %v1120 = vld [vmem:[%s1119] sm:$0xff]
    %1122 = vset.pattern.permute.xlu0 0
    %1123 = vperm.xlu0 %1122, %v1120
    %v1124 = vpop.permute.xlu0 %1123
    %v1126 = vlaneseq
    %v1127 = vshrl.u32 %v1126, 7
    %v1128 = vsub.s32 1, %v1127
    %v1129 = vrot.slane %v1084, %v1128
    %v1130 = vlaneseq
    %v1131 = vshrl.u32 %v1130, 7
    %v1132 = vsub.s32 1, %v1131
    %v1133 = vrot.slane %v1085, %v1132
    %v1134 = vlaneseq
    %v1135 = vshrl.u32 %v1134, 7
    %v1136 = vsub.s32 1, %v1135
    %v1137 = vrot.slane %v1086, %v1136
    %v1138 = vlaneseq
    %v1139 = vshrl.u32 %v1138, 7
    %v1140 = vsub.s32 1, %v1139
    %v1141 = vrot.slane %v1087, %v1140
    %v1142 = vmul.f32 %v1124, %v1129
    %v1143 = vmul.f32 %v1124, %v1133
    %v1144 = vmul.f32 %v1124, %v1137
    %v1145 = vmul.f32 %v1124, %v1141
    %v1146 = vadd.f32 %v1115, %v1142
    %v1147 = vadd.f32 %v1116, %v1143
    %v1148 = vadd.f32 %v1117, %v1144
    %v1149 = vadd.f32 %v1118, %v1145
    %s1150 = scalar_lea.vmem [#allocation2], 208
    %v1151 = vld [vmem:[%s1150] sm:$0xff]
    %1153 = vset.pattern.permute.xlu0 0
    %1154 = vperm.xlu0 %1153, %v1151
    %v1155 = vpop.permute.xlu0 %1154
    %v1157 = vlaneseq
    %v1158 = vshrl.u32 %v1157, 7
    %v1159 = vsub.s32 2, %v1158
    %v1160 = vrot.slane %v1084, %v1159
    %v1161 = vlaneseq
    %v1162 = vshrl.u32 %v1161, 7
    %v1163 = vsub.s32 2, %v1162
    %v1164 = vrot.slane %v1085, %v1163
    %v1165 = vlaneseq
    %v1166 = vshrl.u32 %v1165, 7
    %v1167 = vsub.s32 2, %v1166
    %v1168 = vrot.slane %v1086, %v1167
    %v1169 = vlaneseq
    %v1170 = vshrl.u32 %v1169, 7
    %v1171 = vsub.s32 2, %v1170
    %v1172 = vrot.slane %v1087, %v1171
    %v1173 = vmul.f32 %v1155, %v1160
    %v1174 = vmul.f32 %v1155, %v1164
    %v1175 = vmul.f32 %v1155, %v1168
    %v1176 = vmul.f32 %v1155, %v1172
    %v1177 = vadd.f32 %v1146, %v1173
    %v1178 = vadd.f32 %v1147, %v1174
    %v1179 = vadd.f32 %v1148, %v1175
    %v1180 = vadd.f32 %v1149, %v1176
    %s1181 = scalar_lea.vmem [#allocation2], 216
    %v1182 = vld [vmem:[%s1181] sm:$0xff]
    %1184 = vset.pattern.permute.xlu0 0
    %1185 = vperm.xlu0 %1184, %v1182
    %v1186 = vpop.permute.xlu0 %1185
    %v1188 = vlaneseq
    %v1189 = vshrl.u32 %v1188, 7
    %v1190 = vsub.s32 3, %v1189
    %v1191 = vrot.slane %v1084, %v1190
    %v1192 = vlaneseq
    %v1193 = vshrl.u32 %v1192, 7
    %v1194 = vsub.s32 3, %v1193
    %v1195 = vrot.slane %v1085, %v1194
    %v1196 = vlaneseq
    %v1197 = vshrl.u32 %v1196, 7
    %v1198 = vsub.s32 3, %v1197
    %v1199 = vrot.slane %v1086, %v1198
    %v1200 = vlaneseq
    %v1201 = vshrl.u32 %v1200, 7
    %v1202 = vsub.s32 3, %v1201
    %v1203 = vrot.slane %v1087, %v1202
    %v1204 = vmul.f32 %v1186, %v1191
    %v1205 = vmul.f32 %v1186, %v1195
    %v1206 = vmul.f32 %v1186, %v1199
    %v1207 = vmul.f32 %v1186, %v1203
    %v1208 = vadd.f32 %v1177, %v1204
    %v1209 = vadd.f32 %v1178, %v1205
    %v1210 = vadd.f32 %v1179, %v1206
    %v1211 = vadd.f32 %v1180, %v1207
    %1212 = vrot.lane.b32.xlu0 %v125, 112
    %v1213 = vpop.permute.xlu0 %1212
    %1214 = vrot.lane.b32.xlu0 %v126, 112
    %v1215 = vpop.permute.xlu0 %1214
    %1216 = vrot.lane.b32.xlu0 %v135, 112
    %v1217 = vpop.permute.xlu0 %1216
    %1218 = vrot.lane.b32.xlu0 %v136, 112
    %v1219 = vpop.permute.xlu0 %1218
    %vm1220 = vcmp.lt.s32.totalorder %v49, 112
    %v1221 = vsel %vm1220, %v1213, %v1217
    %v1222 = vsel %vm1220, %v1215, %v1219
    %v1223 = vsel %vm1220, %v1217, %v1213
    %v1224 = vsel %vm1220, %v1219, %v1215
    %v1225 = vsel %vm119, 1, 0
    %v1226 = vsel %vm120, 1, 0
    %vm1227 = vcmp.eq.s32.totalorder %v1225, 1
    %vm1228 = vcmp.eq.s32.totalorder %v1226, 1
    %v1229 = vsel %vm1227, %v1221, 0.0
    %v1230 = vsel %vm1228, %v1223, 0.0
    %v1231 = vsel %vm1227, %v1222, 0.0
    %v1232 = vsel %vm1228, %v1224, 0.0
    %s1233 = scalar_lea.vmem [#allocation2], 224
    %v1234 = vld [vmem:[%s1233] sm:$0xff]
    %1236 = vset.pattern.permute.xlu0 0
    %1237 = vperm.xlu0 %1236, %v1234
    %v1238 = vpop.permute.xlu0 %1237
    %v1240 = vlaneseq
    %v1241 = vshrl.u32 %v1240, 7
    %v1242 = vsub.s32 0, %v1241
    %v1243 = vrot.slane %v1229, %v1242
    %v1244 = vlaneseq
    %v1245 = vshrl.u32 %v1244, 7
    %v1246 = vsub.s32 0, %v1245
    %v1247 = vrot.slane %v1230, %v1246
    %v1248 = vlaneseq
    %v1249 = vshrl.u32 %v1248, 7
    %v1250 = vsub.s32 0, %v1249
    %v1251 = vrot.slane %v1231, %v1250
    %v1252 = vlaneseq
    %v1253 = vshrl.u32 %v1252, 7
    %v1254 = vsub.s32 0, %v1253
    %v1255 = vrot.slane %v1232, %v1254
    %v1256 = vmul.f32 %v1238, %v1243
    %v1257 = vmul.f32 %v1238, %v1247
    %v1258 = vmul.f32 %v1238, %v1251
    %v1259 = vmul.f32 %v1238, %v1255
    %v1260 = vadd.f32 %v1208, %v1256
    %v1261 = vadd.f32 %v1209, %v1257
    %v1262 = vadd.f32 %v1210, %v1258
    %v1263 = vadd.f32 %v1211, %v1259
    %s1264 = scalar_lea.vmem [#allocation2], 232
    %v1265 = vld [vmem:[%s1264] sm:$0xff]
    %1267 = vset.pattern.permute.xlu0 0
    %1268 = vperm.xlu0 %1267, %v1265
    %v1269 = vpop.permute.xlu0 %1268
    %v1271 = vlaneseq
    %v1272 = vshrl.u32 %v1271, 7
    %v1273 = vsub.s32 1, %v1272
    %v1274 = vrot.slane %v1229, %v1273
    %v1275 = vlaneseq
    %v1276 = vshrl.u32 %v1275, 7
    %v1277 = vsub.s32 1, %v1276
    %v1278 = vrot.slane %v1230, %v1277
    %v1279 = vlaneseq
    %v1280 = vshrl.u32 %v1279, 7
    %v1281 = vsub.s32 1, %v1280
    %v1282 = vrot.slane %v1231, %v1281
    %v1283 = vlaneseq
    %v1284 = vshrl.u32 %v1283, 7
    %v1285 = vsub.s32 1, %v1284
    %v1286 = vrot.slane %v1232, %v1285
    %v1287 = vmul.f32 %v1269, %v1274
    %v1288 = vmul.f32 %v1269, %v1278
    %v1289 = vmul.f32 %v1269, %v1282
    %v1290 = vmul.f32 %v1269, %v1286
    %v1291 = vadd.f32 %v1260, %v1287
    %v1292 = vadd.f32 %v1261, %v1288
    %v1293 = vadd.f32 %v1262, %v1289
    %v1294 = vadd.f32 %v1263, %v1290
    %s1295 = scalar_lea.vmem [#allocation2], 240
    %v1296 = vld [vmem:[%s1295] sm:$0xff]
    %1298 = vset.pattern.permute.xlu0 0
    %1299 = vperm.xlu0 %1298, %v1296
    %v1300 = vpop.permute.xlu0 %1299
    %v1302 = vlaneseq
    %v1303 = vshrl.u32 %v1302, 7
    %v1304 = vsub.s32 2, %v1303
    %v1305 = vrot.slane %v1229, %v1304
    %v1306 = vlaneseq
    %v1307 = vshrl.u32 %v1306, 7
    %v1308 = vsub.s32 2, %v1307
    %v1309 = vrot.slane %v1230, %v1308
    %v1310 = vlaneseq
    %v1311 = vshrl.u32 %v1310, 7
    %v1312 = vsub.s32 2, %v1311
    %v1313 = vrot.slane %v1231, %v1312
    %v1314 = vlaneseq
    %v1315 = vshrl.u32 %v1314, 7
    %v1316 = vsub.s32 2, %v1315
    %v1317 = vrot.slane %v1232, %v1316
    %v1318 = vmul.f32 %v1300, %v1305
    %v1319 = vmul.f32 %v1300, %v1309
    %v1320 = vmul.f32 %v1300, %v1313
    %v1321 = vmul.f32 %v1300, %v1317
    %v1322 = vadd.f32 %v1291, %v1318
    %v1323 = vadd.f32 %v1292, %v1319
    %v1324 = vadd.f32 %v1293, %v1320
    %v1325 = vadd.f32 %v1294, %v1321
    %s1326 = scalar_lea.vmem [#allocation2], 248
    %v1327 = vld [vmem:[%s1326] sm:$0xff]
    %1329 = vset.pattern.permute.xlu0 0
    %1330 = vperm.xlu0 %1329, %v1327
    %v1331 = vpop.permute.xlu0 %1330
    %v1333 = vlaneseq
    %v1334 = vshrl.u32 %v1333, 7
    %v1335 = vsub.s32 3, %v1334
    %v1336 = vrot.slane %v1229, %v1335
    %v1337 = vlaneseq
    %v1338 = vshrl.u32 %v1337, 7
    %v1339 = vsub.s32 3, %v1338
    %v1340 = vrot.slane %v1230, %v1339
    %v1341 = vlaneseq
    %v1342 = vshrl.u32 %v1341, 7
    %v1343 = vsub.s32 3, %v1342
    %v1344 = vrot.slane %v1231, %v1343
    %v1345 = vlaneseq
    %v1346 = vshrl.u32 %v1345, 7
    %v1347 = vsub.s32 3, %v1346
    %v1348 = vrot.slane %v1232, %v1347
    %v1349 = vmul.f32 %v1331, %v1336
    %v1350 = vmul.f32 %v1331, %v1340
    %v1351 = vmul.f32 %v1331, %v1344
    %v1352 = vmul.f32 %v1331, %v1348
    %v1353 = vadd.f32 %v1322, %v1349
    %v1354 = vadd.f32 %v1323, %v1350
    %v1355 = vadd.f32 %v1324, %v1351
    %v1356 = vadd.f32 %v1325, %v1352
    %1357 = vrot.lane.b32.xlu0 %v125, 111
    %v1358 = vpop.permute.xlu0 %1357
    %1359 = vrot.lane.b32.xlu0 %v126, 111
    %v1360 = vpop.permute.xlu0 %1359
    %1361 = vrot.lane.b32.xlu0 %v135, 111
    %v1362 = vpop.permute.xlu0 %1361
    %1363 = vrot.lane.b32.xlu0 %v136, 111
    %v1364 = vpop.permute.xlu0 %1363
    %vm1365 = vcmp.lt.s32.totalorder %v49, 111
    %v1366 = vsel %vm1365, %v1358, %v1362
    %v1367 = vsel %vm1365, %v1360, %v1364
    %v1368 = vsel %vm1365, %v1362, %v1358
    %v1369 = vsel %vm1365, %v1364, %v1360
    %v1370 = vsel %vm123, 1, 0
    %v1371 = vsel %vm124, 1, 0
    %vm1372 = vcmp.eq.s32.totalorder %v1370, 1
    %vm1373 = vcmp.eq.s32.totalorder %v1371, 1
    %v1374 = vsel %vm1372, %v1366, 0.0
    %v1375 = vsel %vm1373, %v1368, 0.0
    %v1376 = vsel %vm1372, %v1367, 0.0
    %v1377 = vsel %vm1373, %v1369, 0.0
    %s1378 = scalar_lea.vmem [#allocation2], 256
    %v1379 = vld [vmem:[%s1378] sm:$0xff]
    %1381 = vset.pattern.permute.xlu0 0
    %1382 = vperm.xlu0 %1381, %v1379
    %v1383 = vpop.permute.xlu0 %1382
    %v1385 = vlaneseq
    %v1386 = vshrl.u32 %v1385, 7
    %v1387 = vsub.s32 0, %v1386
    %v1388 = vrot.slane %v1374, %v1387
    %v1389 = vlaneseq
    %v1390 = vshrl.u32 %v1389, 7
    %v1391 = vsub.s32 0, %v1390
    %v1392 = vrot.slane %v1375, %v1391
    %v1393 = vlaneseq
    %v1394 = vshrl.u32 %v1393, 7
    %v1395 = vsub.s32 0, %v1394
    %v1396 = vrot.slane %v1376, %v1395
    %v1397 = vlaneseq
    %v1398 = vshrl.u32 %v1397, 7
    %v1399 = vsub.s32 0, %v1398
    %v1400 = vrot.slane %v1377, %v1399
    %v1401 = vmul.f32 %v1383, %v1388
    %v1402 = vmul.f32 %v1383, %v1392
    %v1403 = vmul.f32 %v1383, %v1396
    %v1404 = vmul.f32 %v1383, %v1400
    %v1405 = vadd.f32 %v1353, %v1401
    %v1406 = vadd.f32 %v1354, %v1402
    %v1407 = vadd.f32 %v1355, %v1403
    %v1408 = vadd.f32 %v1356, %v1404
    %s1409 = scalar_lea.vmem [#allocation2], 264
    %v1410 = vld [vmem:[%s1409] sm:$0xff]
    %1412 = vset.pattern.permute.xlu0 0
    %1413 = vperm.xlu0 %1412, %v1410
    %v1414 = vpop.permute.xlu0 %1413
    %v1416 = vlaneseq
    %v1417 = vshrl.u32 %v1416, 7
    %v1418 = vsub.s32 1, %v1417
    %v1419 = vrot.slane %v1374, %v1418
    %v1420 = vlaneseq
    %v1421 = vshrl.u32 %v1420, 7
    %v1422 = vsub.s32 1, %v1421
    %v1423 = vrot.slane %v1375, %v1422
    %v1424 = vlaneseq
    %v1425 = vshrl.u32 %v1424, 7
    %v1426 = vsub.s32 1, %v1425
    %v1427 = vrot.slane %v1376, %v1426
    %v1428 = vlaneseq
    %v1429 = vshrl.u32 %v1428, 7
    %v1430 = vsub.s32 1, %v1429
    %v1431 = vrot.slane %v1377, %v1430
    %v1432 = vmul.f32 %v1414, %v1419
    %v1433 = vmul.f32 %v1414, %v1423
    %v1434 = vmul.f32 %v1414, %v1427
    %v1435 = vmul.f32 %v1414, %v1431
    %v1436 = vadd.f32 %v1405, %v1432
    %v1437 = vadd.f32 %v1406, %v1433
    %v1438 = vadd.f32 %v1407, %v1434
    %v1439 = vadd.f32 %v1408, %v1435
    %s1440 = scalar_lea.vmem [#allocation2], 272
    %v1441 = vld [vmem:[%s1440] sm:$0xff]
    %1443 = vset.pattern.permute.xlu0 0
    %1444 = vperm.xlu0 %1443, %v1441
    %v1445 = vpop.permute.xlu0 %1444
    %v1447 = vlaneseq
    %v1448 = vshrl.u32 %v1447, 7
    %v1449 = vsub.s32 2, %v1448
    %v1450 = vrot.slane %v1374, %v1449
    %v1451 = vlaneseq
    %v1452 = vshrl.u32 %v1451, 7
    %v1453 = vsub.s32 2, %v1452
    %v1454 = vrot.slane %v1375, %v1453
    %v1455 = vlaneseq
    %v1456 = vshrl.u32 %v1455, 7
    %v1457 = vsub.s32 2, %v1456
    %v1458 = vrot.slane %v1376, %v1457
    %v1459 = vlaneseq
    %v1460 = vshrl.u32 %v1459, 7
    %v1461 = vsub.s32 2, %v1460
    %v1462 = vrot.slane %v1377, %v1461
    %v1463 = vmul.f32 %v1445, %v1450
    %v1464 = vmul.f32 %v1445, %v1454
    %v1465 = vmul.f32 %v1445, %v1458
    %v1466 = vmul.f32 %v1445, %v1462
    %v1467 = vadd.f32 %v1436, %v1463
    %v1468 = vadd.f32 %v1437, %v1464
    %v1469 = vadd.f32 %v1438, %v1465
    %v1470 = vadd.f32 %v1439, %v1466
    %s1471 = scalar_lea.vmem [#allocation2], 280
    %v1472 = vld [vmem:[%s1471] sm:$0xff]
    %1474 = vset.pattern.permute.xlu0 0
    %1475 = vperm.xlu0 %1474, %v1472
    %v1476 = vpop.permute.xlu0 %1475
    %v1478 = vlaneseq
    %v1479 = vshrl.u32 %v1478, 7
    %v1480 = vsub.s32 3, %v1479
    %v1481 = vrot.slane %v1374, %v1480
    %v1482 = vlaneseq
    %v1483 = vshrl.u32 %v1482, 7
    %v1484 = vsub.s32 3, %v1483
    %v1485 = vrot.slane %v1375, %v1484
    %v1486 = vlaneseq
    %v1487 = vshrl.u32 %v1486, 7
    %v1488 = vsub.s32 3, %v1487
    %v1489 = vrot.slane %v1376, %v1488
    %v1490 = vlaneseq
    %v1491 = vshrl.u32 %v1490, 7
    %v1492 = vsub.s32 3, %v1491
    %v1493 = vrot.slane %v1377, %v1492
    %v1494 = vmul.f32 %v1476, %v1481
    %v1495 = vmul.f32 %v1476, %v1485
    %v1496 = vmul.f32 %v1476, %v1489
    %v1497 = vmul.f32 %v1476, %v1493
    %v1498 = vadd.f32 %v1467, %v1494
    %v1499 = vadd.f32 %v1468, %v1495
    %v1500 = vadd.f32 %v1469, %v1496
    %v1501 = vadd.f32 %v1470, %v1497
    %v1502 = vadd.f32 %v569, %v1063
    %v1503 = vadd.f32 %v570, %v1064
    %v1504 = vadd.f32 %v571, %v1065
    %v1505 = vadd.f32 %v572, %v1066
    %v1506 = vadd.f32 %v1502, %v1498
    %v1507 = vadd.f32 %v1503, %v1499
    %v1508 = vadd.f32 %v1504, %v1500
    %v1509 = vadd.f32 %v1505, %v1501
    %v1510 = vmax.f32 %v1506, 0.0
    %v1511 = vmax.f32 %v1507, 0.0
    %v1512 = vmax.f32 %v1508, 0.0
    %v1513 = vmax.f32 %v1509, 0.0
    %v1514 = vld [vmem:[%s4] sm:$0xf]
    %1516 = vset.pattern.permute.xlu0 0
    %1517 = vperm.xlu0 %1516, %v1514
    %v1518 = vpop.permute.xlu0 %1517
    %1520 = vrot.lane.b32.xlu0 %v1510, 17
    %v1521 = vpop.permute.xlu0 %1520
    %1522 = vrot.lane.b32.xlu0 %v1512, 17
    %v1523 = vpop.permute.xlu0 %1522
    %1524 = vrot.lane.b32.xlu0 %v1511, 17
    %v1525 = vpop.permute.xlu0 %1524
    %1526 = vrot.lane.b32.xlu0 %v1513, 17
    %v1527 = vpop.permute.xlu0 %1526
    %v1528 = vsel %vm147, %v1521, %v1525
    %v1529 = vsel %vm147, %v1523, %v1527
    %v1530 = vsel %vm147, %v1525, %v1521
    %v1531 = vsel %vm147, %v1527, %v1523
    %v1532 = vsel %vm154, %v1530, 0.0
    %v1533 = vsel %vm155, %v1528, 0.0
    %v1534 = vsel %vm154, %v1531, 0.0
    %v1535 = vsel %vm155, %v1529, 0.0
    %v1536 = vld [vmem:[#allocation4] sm:$0xf]
    %1538 = vset.pattern.permute.xlu0 0
    %1539 = vperm.xlu0 %1538, %v1536
    %v1540 = vpop.permute.xlu0 %1539
    %v1542 = vlaneseq
    %v1543 = vshrl.u32 %v1542, 7
    %v1544 = vsub.s32 0, %v1543
    %v1545 = vrot.slane %v1532, %v1544
    %v1546 = vlaneseq
    %v1547 = vshrl.u32 %v1546, 7
    %v1548 = vsub.s32 0, %v1547
    %v1549 = vrot.slane %v1533, %v1548
    %v1550 = vlaneseq
    %v1551 = vshrl.u32 %v1550, 7
    %v1552 = vsub.s32 0, %v1551
    %v1553 = vrot.slane %v1534, %v1552
    %v1554 = vlaneseq
    %v1555 = vshrl.u32 %v1554, 7
    %v1556 = vsub.s32 0, %v1555
    %v1557 = vrot.slane %v1535, %v1556
    %v1558 = vmul.f32 %v1540, %v1545
    %v1559 = vmul.f32 %v1540, %v1549
    %v1560 = vmul.f32 %v1540, %v1553
    %v1561 = vmul.f32 %v1540, %v1557
    %v1562 = vadd.f32 %v1518, %v1558
    %v1563 = vadd.f32 %v1518, %v1559
    %v1564 = vadd.f32 %v1518, %v1560
    %v1565 = vadd.f32 %v1518, %v1561
    %s1566 = scalar_lea.vmem [#allocation4], 4
    %v1567 = vld [vmem:[%s1566] sm:$0xf]
    %1569 = vset.pattern.permute.xlu0 0
    %1570 = vperm.xlu0 %1569, %v1567
    %v1571 = vpop.permute.xlu0 %1570
    %v1573 = vlaneseq
    %v1574 = vshrl.u32 %v1573, 7
    %v1575 = vsub.s32 1, %v1574
    %v1576 = vrot.slane %v1532, %v1575
    %v1577 = vlaneseq
    %v1578 = vshrl.u32 %v1577, 7
    %v1579 = vsub.s32 1, %v1578
    %v1580 = vrot.slane %v1533, %v1579
    %v1581 = vlaneseq
    %v1582 = vshrl.u32 %v1581, 7
    %v1583 = vsub.s32 1, %v1582
    %v1584 = vrot.slane %v1534, %v1583
    %v1585 = vlaneseq
    %v1586 = vshrl.u32 %v1585, 7
    %v1587 = vsub.s32 1, %v1586
    %v1588 = vrot.slane %v1535, %v1587
    %v1589 = vmul.f32 %v1571, %v1576
    %v1590 = vmul.f32 %v1571, %v1580
    %v1591 = vmul.f32 %v1571, %v1584
    %v1592 = vmul.f32 %v1571, %v1588
    %v1593 = vadd.f32 %v1562, %v1589
    %v1594 = vadd.f32 %v1563, %v1590
    %v1595 = vadd.f32 %v1564, %v1591
    %v1596 = vadd.f32 %v1565, %v1592
    %s1597 = scalar_lea.vmem [#allocation4], 8
    %v1598 = vld [vmem:[%s1597] sm:$0xf]
    %1600 = vset.pattern.permute.xlu0 0
    %1601 = vperm.xlu0 %1600, %v1598
    %v1602 = vpop.permute.xlu0 %1601
    %v1604 = vlaneseq
    %v1605 = vshrl.u32 %v1604, 7
    %v1606 = vsub.s32 2, %v1605
    %v1607 = vrot.slane %v1532, %v1606
    %v1608 = vlaneseq
    %v1609 = vshrl.u32 %v1608, 7
    %v1610 = vsub.s32 2, %v1609
    %v1611 = vrot.slane %v1533, %v1610
    %v1612 = vlaneseq
    %v1613 = vshrl.u32 %v1612, 7
    %v1614 = vsub.s32 2, %v1613
    %v1615 = vrot.slane %v1534, %v1614
    %v1616 = vlaneseq
    %v1617 = vshrl.u32 %v1616, 7
    %v1618 = vsub.s32 2, %v1617
    %v1619 = vrot.slane %v1535, %v1618
    %v1620 = vmul.f32 %v1602, %v1607
    %v1621 = vmul.f32 %v1602, %v1611
    %v1622 = vmul.f32 %v1602, %v1615
    %v1623 = vmul.f32 %v1602, %v1619
    %v1624 = vadd.f32 %v1593, %v1620
    %v1625 = vadd.f32 %v1594, %v1621
    %v1626 = vadd.f32 %v1595, %v1622
    %v1627 = vadd.f32 %v1596, %v1623
    %s1628 = scalar_lea.vmem [#allocation4], 12
    %v1629 = vld [vmem:[%s1628] sm:$0xf]
    %1631 = vset.pattern.permute.xlu0 0
    %1632 = vperm.xlu0 %1631, %v1629
    %v1633 = vpop.permute.xlu0 %1632
    %v1635 = vlaneseq
    %v1636 = vshrl.u32 %v1635, 7
    %v1637 = vsub.s32 3, %v1636
    %v1638 = vrot.slane %v1532, %v1637
    %v1639 = vlaneseq
    %v1640 = vshrl.u32 %v1639, 7
    %v1641 = vsub.s32 3, %v1640
    %v1642 = vrot.slane %v1533, %v1641
    %v1643 = vlaneseq
    %v1644 = vshrl.u32 %v1643, 7
    %v1645 = vsub.s32 3, %v1644
    %v1646 = vrot.slane %v1534, %v1645
    %v1647 = vlaneseq
    %v1648 = vshrl.u32 %v1647, 7
    %v1649 = vsub.s32 3, %v1648
    %v1650 = vrot.slane %v1535, %v1649
    %v1651 = vmul.f32 %v1633, %v1638
    %v1652 = vmul.f32 %v1633, %v1642
    %v1653 = vmul.f32 %v1633, %v1646
    %v1654 = vmul.f32 %v1633, %v1650
    %v1655 = vadd.f32 %v1624, %v1651
    %v1656 = vadd.f32 %v1625, %v1652
    %v1657 = vadd.f32 %v1626, %v1653
    %v1658 = vadd.f32 %v1627, %v1654
    %s1659 = scalar_lea.vmem [#allocation4], 16
    %v1660 = vld [vmem:[%s1659] sm:$0xf]
    %1662 = vset.pattern.permute.xlu0 0
    %1663 = vperm.xlu0 %1662, %v1660
    %v1664 = vpop.permute.xlu0 %1663
    %v1666 = vlaneseq
    %v1667 = vshrl.u32 %v1666, 7
    %v1668 = vsub.s32 4, %v1667
    %v1669 = vrot.slane %v1532, %v1668
    %v1670 = vlaneseq
    %v1671 = vshrl.u32 %v1670, 7
    %v1672 = vsub.s32 4, %v1671
    %v1673 = vrot.slane %v1533, %v1672
    %v1674 = vlaneseq
    %v1675 = vshrl.u32 %v1674, 7
    %v1676 = vsub.s32 4, %v1675
    %v1677 = vrot.slane %v1534, %v1676
    %v1678 = vlaneseq
    %v1679 = vshrl.u32 %v1678, 7
    %v1680 = vsub.s32 4, %v1679
    %v1681 = vrot.slane %v1535, %v1680
    %v1682 = vmul.f32 %v1664, %v1669
    %v1683 = vmul.f32 %v1664, %v1673
    %v1684 = vmul.f32 %v1664, %v1677
    %v1685 = vmul.f32 %v1664, %v1681
    %v1686 = vadd.f32 %v1655, %v1682
    %v1687 = vadd.f32 %v1656, %v1683
    %v1688 = vadd.f32 %v1657, %v1684
    %v1689 = vadd.f32 %v1658, %v1685
    %s1690 = scalar_lea.vmem [#allocation4], 20
    %v1691 = vld [vmem:[%s1690] sm:$0xf]
    %1693 = vset.pattern.permute.xlu0 0
    %1694 = vperm.xlu0 %1693, %v1691
    %v1695 = vpop.permute.xlu0 %1694
    %v1697 = vlaneseq
    %v1698 = vshrl.u32 %v1697, 7
    %v1699 = vsub.s32 5, %v1698
    %v1700 = vrot.slane %v1532, %v1699
    %v1701 = vlaneseq
    %v1702 = vshrl.u32 %v1701, 7
    %v1703 = vsub.s32 5, %v1702
    %v1704 = vrot.slane %v1533, %v1703
    %v1705 = vlaneseq
    %v1706 = vshrl.u32 %v1705, 7
    %v1707 = vsub.s32 5, %v1706
    %v1708 = vrot.slane %v1534, %v1707
    %v1709 = vlaneseq
    %v1710 = vshrl.u32 %v1709, 7
    %v1711 = vsub.s32 5, %v1710
    %v1712 = vrot.slane %v1535, %v1711
    %v1713 = vmul.f32 %v1695, %v1700
    %v1714 = vmul.f32 %v1695, %v1704
    %v1715 = vmul.f32 %v1695, %v1708
    %v1716 = vmul.f32 %v1695, %v1712
    %v1717 = vadd.f32 %v1686, %v1713
    %v1718 = vadd.f32 %v1687, %v1714
    %v1719 = vadd.f32 %v1688, %v1715
    %v1720 = vadd.f32 %v1689, %v1716
    %s1721 = scalar_lea.vmem [#allocation4], 24
    %v1722 = vld [vmem:[%s1721] sm:$0xf]
    %1724 = vset.pattern.permute.xlu0 0
    %1725 = vperm.xlu0 %1724, %v1722
    %v1726 = vpop.permute.xlu0 %1725
    %v1728 = vlaneseq
    %v1729 = vshrl.u32 %v1728, 7
    %v1730 = vsub.s32 6, %v1729
    %v1731 = vrot.slane %v1532, %v1730
    %v1732 = vlaneseq
    %v1733 = vshrl.u32 %v1732, 7
    %v1734 = vsub.s32 6, %v1733
    %v1735 = vrot.slane %v1533, %v1734
    %v1736 = vlaneseq
    %v1737 = vshrl.u32 %v1736, 7
    %v1738 = vsub.s32 6, %v1737
    %v1739 = vrot.slane %v1534, %v1738
    %v1740 = vlaneseq
    %v1741 = vshrl.u32 %v1740, 7
    %v1742 = vsub.s32 6, %v1741
    %v1743 = vrot.slane %v1535, %v1742
    %v1744 = vmul.f32 %v1726, %v1731
    %v1745 = vmul.f32 %v1726, %v1735
    %v1746 = vmul.f32 %v1726, %v1739
    %v1747 = vmul.f32 %v1726, %v1743
    %v1748 = vadd.f32 %v1717, %v1744
    %v1749 = vadd.f32 %v1718, %v1745
    %v1750 = vadd.f32 %v1719, %v1746
    %v1751 = vadd.f32 %v1720, %v1747
    %s1752 = scalar_lea.vmem [#allocation4], 28
    %v1753 = vld [vmem:[%s1752] sm:$0xf]
    %1755 = vset.pattern.permute.xlu0 0
    %1756 = vperm.xlu0 %1755, %v1753
    %v1757 = vpop.permute.xlu0 %1756
    %v1759 = vlaneseq
    %v1760 = vshrl.u32 %v1759, 7
    %v1761 = vsub.s32 7, %v1760
    %v1762 = vrot.slane %v1532, %v1761
    %v1763 = vlaneseq
    %v1764 = vshrl.u32 %v1763, 7
    %v1765 = vsub.s32 7, %v1764
    %v1766 = vrot.slane %v1533, %v1765
    %v1767 = vlaneseq
    %v1768 = vshrl.u32 %v1767, 7
    %v1769 = vsub.s32 7, %v1768
    %v1770 = vrot.slane %v1534, %v1769
    %v1771 = vlaneseq
    %v1772 = vshrl.u32 %v1771, 7
    %v1773 = vsub.s32 7, %v1772
    %v1774 = vrot.slane %v1535, %v1773
    %v1775 = vmul.f32 %v1757, %v1762
    %v1776 = vmul.f32 %v1757, %v1766
    %v1777 = vmul.f32 %v1757, %v1770
    %v1778 = vmul.f32 %v1757, %v1774
    %v1779 = vadd.f32 %v1748, %v1775
    %v1780 = vadd.f32 %v1749, %v1776
    %v1781 = vadd.f32 %v1750, %v1777
    %v1782 = vadd.f32 %v1751, %v1778
    %1783 = vrot.lane.b32.xlu0 %v1510, 16
    %v1784 = vpop.permute.xlu0 %1783
    %1785 = vrot.lane.b32.xlu0 %v1512, 16
    %v1786 = vpop.permute.xlu0 %1785
    %1787 = vrot.lane.b32.xlu0 %v1511, 16
    %v1788 = vpop.permute.xlu0 %1787
    %1789 = vrot.lane.b32.xlu0 %v1513, 16
    %v1790 = vpop.permute.xlu0 %1789
    %v1791 = vsel %vm291, %v1784, %v1788
    %v1792 = vsel %vm291, %v1786, %v1790
    %v1793 = vsel %vm291, %v1788, %v1784
    %v1794 = vsel %vm291, %v1790, %v1786
    %v1795 = vsel %vm298, %v1793, 0.0
    %v1796 = vsel %vm299, %v1791, 0.0
    %v1797 = vsel %vm298, %v1794, 0.0
    %v1798 = vsel %vm299, %v1792, 0.0
    %s1799 = scalar_lea.vmem [#allocation4], 32
    %v1800 = vld [vmem:[%s1799] sm:$0xf]
    %1802 = vset.pattern.permute.xlu0 0
    %1803 = vperm.xlu0 %1802, %v1800
    %v1804 = vpop.permute.xlu0 %1803
    %v1806 = vlaneseq
    %v1807 = vshrl.u32 %v1806, 7
    %v1808 = vsub.s32 0, %v1807
    %v1809 = vrot.slane %v1795, %v1808
    %v1810 = vlaneseq
    %v1811 = vshrl.u32 %v1810, 7
    %v1812 = vsub.s32 0, %v1811
    %v1813 = vrot.slane %v1796, %v1812
    %v1814 = vlaneseq
    %v1815 = vshrl.u32 %v1814, 7
    %v1816 = vsub.s32 0, %v1815
    %v1817 = vrot.slane %v1797, %v1816
    %v1818 = vlaneseq
    %v1819 = vshrl.u32 %v1818, 7
    %v1820 = vsub.s32 0, %v1819
    %v1821 = vrot.slane %v1798, %v1820
    %v1822 = vmul.f32 %v1804, %v1809
    %v1823 = vmul.f32 %v1804, %v1813
    %v1824 = vmul.f32 %v1804, %v1817
    %v1825 = vmul.f32 %v1804, %v1821
    %v1826 = vadd.f32 %v1779, %v1822
    %v1827 = vadd.f32 %v1780, %v1823
    %v1828 = vadd.f32 %v1781, %v1824
    %v1829 = vadd.f32 %v1782, %v1825
    %s1830 = scalar_lea.vmem [#allocation4], 36
    %v1831 = vld [vmem:[%s1830] sm:$0xf]
    %1833 = vset.pattern.permute.xlu0 0
    %1834 = vperm.xlu0 %1833, %v1831
    %v1835 = vpop.permute.xlu0 %1834
    %v1837 = vlaneseq
    %v1838 = vshrl.u32 %v1837, 7
    %v1839 = vsub.s32 1, %v1838
    %v1840 = vrot.slane %v1795, %v1839
    %v1841 = vlaneseq
    %v1842 = vshrl.u32 %v1841, 7
    %v1843 = vsub.s32 1, %v1842
    %v1844 = vrot.slane %v1796, %v1843
    %v1845 = vlaneseq
    %v1846 = vshrl.u32 %v1845, 7
    %v1847 = vsub.s32 1, %v1846
    %v1848 = vrot.slane %v1797, %v1847
    %v1849 = vlaneseq
    %v1850 = vshrl.u32 %v1849, 7
    %v1851 = vsub.s32 1, %v1850
    %v1852 = vrot.slane %v1798, %v1851
    %v1853 = vmul.f32 %v1835, %v1840
    %v1854 = vmul.f32 %v1835, %v1844
    %v1855 = vmul.f32 %v1835, %v1848
    %v1856 = vmul.f32 %v1835, %v1852
    %v1857 = vadd.f32 %v1826, %v1853
    %v1858 = vadd.f32 %v1827, %v1854
    %v1859 = vadd.f32 %v1828, %v1855
    %v1860 = vadd.f32 %v1829, %v1856
    %s1861 = scalar_lea.vmem [#allocation4], 40
    %v1862 = vld [vmem:[%s1861] sm:$0xf]
    %1864 = vset.pattern.permute.xlu0 0
    %1865 = vperm.xlu0 %1864, %v1862
    %v1866 = vpop.permute.xlu0 %1865
    %v1868 = vlaneseq
    %v1869 = vshrl.u32 %v1868, 7
    %v1870 = vsub.s32 2, %v1869
    %v1871 = vrot.slane %v1795, %v1870
    %v1872 = vlaneseq
    %v1873 = vshrl.u32 %v1872, 7
    %v1874 = vsub.s32 2, %v1873
    %v1875 = vrot.slane %v1796, %v1874
    %v1876 = vlaneseq
    %v1877 = vshrl.u32 %v1876, 7
    %v1878 = vsub.s32 2, %v1877
    %v1879 = vrot.slane %v1797, %v1878
    %v1880 = vlaneseq
    %v1881 = vshrl.u32 %v1880, 7
    %v1882 = vsub.s32 2, %v1881
    %v1883 = vrot.slane %v1798, %v1882
    %v1884 = vmul.f32 %v1866, %v1871
    %v1885 = vmul.f32 %v1866, %v1875
    %v1886 = vmul.f32 %v1866, %v1879
    %v1887 = vmul.f32 %v1866, %v1883
    %v1888 = vadd.f32 %v1857, %v1884
    %v1889 = vadd.f32 %v1858, %v1885
    %v1890 = vadd.f32 %v1859, %v1886
    %v1891 = vadd.f32 %v1860, %v1887
    %s1892 = scalar_lea.vmem [#allocation4], 44
    %v1893 = vld [vmem:[%s1892] sm:$0xf]
    %1895 = vset.pattern.permute.xlu0 0
    %1896 = vperm.xlu0 %1895, %v1893
    %v1897 = vpop.permute.xlu0 %1896
    %v1899 = vlaneseq
    %v1900 = vshrl.u32 %v1899, 7
    %v1901 = vsub.s32 3, %v1900
    %v1902 = vrot.slane %v1795, %v1901
    %v1903 = vlaneseq
    %v1904 = vshrl.u32 %v1903, 7
    %v1905 = vsub.s32 3, %v1904
    %v1906 = vrot.slane %v1796, %v1905
    %v1907 = vlaneseq
    %v1908 = vshrl.u32 %v1907, 7
    %v1909 = vsub.s32 3, %v1908
    %v1910 = vrot.slane %v1797, %v1909
    %v1911 = vlaneseq
    %v1912 = vshrl.u32 %v1911, 7
    %v1913 = vsub.s32 3, %v1912
    %v1914 = vrot.slane %v1798, %v1913
    %v1915 = vmul.f32 %v1897, %v1902
    %v1916 = vmul.f32 %v1897, %v1906
    %v1917 = vmul.f32 %v1897, %v1910
    %v1918 = vmul.f32 %v1897, %v1914
    %v1919 = vadd.f32 %v1888, %v1915
    %v1920 = vadd.f32 %v1889, %v1916
    %v1921 = vadd.f32 %v1890, %v1917
    %v1922 = vadd.f32 %v1891, %v1918
    %s1923 = scalar_lea.vmem [#allocation4], 48
    %v1924 = vld [vmem:[%s1923] sm:$0xf]
    %1926 = vset.pattern.permute.xlu0 0
    %1927 = vperm.xlu0 %1926, %v1924
    %v1928 = vpop.permute.xlu0 %1927
    %v1930 = vlaneseq
    %v1931 = vshrl.u32 %v1930, 7
    %v1932 = vsub.s32 4, %v1931
    %v1933 = vrot.slane %v1795, %v1932
    %v1934 = vlaneseq
    %v1935 = vshrl.u32 %v1934, 7
    %v1936 = vsub.s32 4, %v1935
    %v1937 = vrot.slane %v1796, %v1936
    %v1938 = vlaneseq
    %v1939 = vshrl.u32 %v1938, 7
    %v1940 = vsub.s32 4, %v1939
    %v1941 = vrot.slane %v1797, %v1940
    %v1942 = vlaneseq
    %v1943 = vshrl.u32 %v1942, 7
    %v1944 = vsub.s32 4, %v1943
    %v1945 = vrot.slane %v1798, %v1944
    %v1946 = vmul.f32 %v1928, %v1933
    %v1947 = vmul.f32 %v1928, %v1937
    %v1948 = vmul.f32 %v1928, %v1941
    %v1949 = vmul.f32 %v1928, %v1945
    %v1950 = vadd.f32 %v1919, %v1946
    %v1951 = vadd.f32 %v1920, %v1947
    %v1952 = vadd.f32 %v1921, %v1948
    %v1953 = vadd.f32 %v1922, %v1949
    %s1954 = scalar_lea.vmem [#allocation4], 52
    %v1955 = vld [vmem:[%s1954] sm:$0xf]
    %1957 = vset.pattern.permute.xlu0 0
    %1958 = vperm.xlu0 %1957, %v1955
    %v1959 = vpop.permute.xlu0 %1958
    %v1961 = vlaneseq
    %v1962 = vshrl.u32 %v1961, 7
    %v1963 = vsub.s32 5, %v1962
    %v1964 = vrot.slane %v1795, %v1963
    %v1965 = vlaneseq
    %v1966 = vshrl.u32 %v1965, 7
    %v1967 = vsub.s32 5, %v1966
    %v1968 = vrot.slane %v1796, %v1967
    %v1969 = vlaneseq
    %v1970 = vshrl.u32 %v1969, 7
    %v1971 = vsub.s32 5, %v1970
    %v1972 = vrot.slane %v1797, %v1971
    %v1973 = vlaneseq
    %v1974 = vshrl.u32 %v1973, 7
    %v1975 = vsub.s32 5, %v1974
    %v1976 = vrot.slane %v1798, %v1975
    %v1977 = vmul.f32 %v1959, %v1964
    %v1978 = vmul.f32 %v1959, %v1968
    %v1979 = vmul.f32 %v1959, %v1972
    %v1980 = vmul.f32 %v1959, %v1976
    %v1981 = vadd.f32 %v1950, %v1977
    %v1982 = vadd.f32 %v1951, %v1978
    %v1983 = vadd.f32 %v1952, %v1979
    %v1984 = vadd.f32 %v1953, %v1980
    %s1985 = scalar_lea.vmem [#allocation4], 56
    %v1986 = vld [vmem:[%s1985] sm:$0xf]
    %1988 = vset.pattern.permute.xlu0 0
    %1989 = vperm.xlu0 %1988, %v1986
    %v1990 = vpop.permute.xlu0 %1989
    %v1992 = vlaneseq
    %v1993 = vshrl.u32 %v1992, 7
    %v1994 = vsub.s32 6, %v1993
    %v1995 = vrot.slane %v1795, %v1994
    %v1996 = vlaneseq
    %v1997 = vshrl.u32 %v1996, 7
    %v1998 = vsub.s32 6, %v1997
    %v1999 = vrot.slane %v1796, %v1998
    %v2000 = vlaneseq
    %v2001 = vshrl.u32 %v2000, 7
    %v2002 = vsub.s32 6, %v2001
    %v2003 = vrot.slane %v1797, %v2002
    %v2004 = vlaneseq
    %v2005 = vshrl.u32 %v2004, 7
    %v2006 = vsub.s32 6, %v2005
    %v2007 = vrot.slane %v1798, %v2006
    %v2008 = vmul.f32 %v1990, %v1995
    %v2009 = vmul.f32 %v1990, %v1999
    %v2010 = vmul.f32 %v1990, %v2003
    %v2011 = vmul.f32 %v1990, %v2007
    %v2012 = vadd.f32 %v1981, %v2008
    %v2013 = vadd.f32 %v1982, %v2009
    %v2014 = vadd.f32 %v1983, %v2010
    %v2015 = vadd.f32 %v1984, %v2011
    %s2016 = scalar_lea.vmem [#allocation4], 60
    %v2017 = vld [vmem:[%s2016] sm:$0xf]
    %2019 = vset.pattern.permute.xlu0 0
    %2020 = vperm.xlu0 %2019, %v2017
    %v2021 = vpop.permute.xlu0 %2020
    %v2023 = vlaneseq
    %v2024 = vshrl.u32 %v2023, 7
    %v2025 = vsub.s32 7, %v2024
    %v2026 = vrot.slane %v1795, %v2025
    %v2027 = vlaneseq
    %v2028 = vshrl.u32 %v2027, 7
    %v2029 = vsub.s32 7, %v2028
    %v2030 = vrot.slane %v1796, %v2029
    %v2031 = vlaneseq
    %v2032 = vshrl.u32 %v2031, 7
    %v2033 = vsub.s32 7, %v2032
    %v2034 = vrot.slane %v1797, %v2033
    %v2035 = vlaneseq
    %v2036 = vshrl.u32 %v2035, 7
    %v2037 = vsub.s32 7, %v2036
    %v2038 = vrot.slane %v1798, %v2037
    %v2039 = vmul.f32 %v2021, %v2026
    %v2040 = vmul.f32 %v2021, %v2030
    %v2041 = vmul.f32 %v2021, %v2034
    %v2042 = vmul.f32 %v2021, %v2038
    %v2043 = vadd.f32 %v2012, %v2039
    %v2044 = vadd.f32 %v2013, %v2040
    %v2045 = vadd.f32 %v2014, %v2041
    %v2046 = vadd.f32 %v2015, %v2042
    %2047 = vrot.lane.b32.xlu0 %v1510, 15
    %v2048 = vpop.permute.xlu0 %2047
    %2049 = vrot.lane.b32.xlu0 %v1512, 15
    %v2050 = vpop.permute.xlu0 %2049
    %2051 = vrot.lane.b32.xlu0 %v1511, 15
    %v2052 = vpop.permute.xlu0 %2051
    %2053 = vrot.lane.b32.xlu0 %v1513, 15
    %v2054 = vpop.permute.xlu0 %2053
    %v2055 = vsel %vm436, %v2048, %v2052
    %v2056 = vsel %vm436, %v2050, %v2054
    %v2057 = vsel %vm436, %v2052, %v2048
    %v2058 = vsel %vm436, %v2054, %v2050
    %v2059 = vsel %vm443, %v2057, 0.0
    %v2060 = vsel %vm444, %v2055, 0.0
    %v2061 = vsel %vm443, %v2058, 0.0
    %v2062 = vsel %vm444, %v2056, 0.0
    %s2063 = scalar_lea.vmem [#allocation4], 64
    %v2064 = vld [vmem:[%s2063] sm:$0xf]
    %2066 = vset.pattern.permute.xlu0 0
    %2067 = vperm.xlu0 %2066, %v2064
    %v2068 = vpop.permute.xlu0 %2067
    %v2070 = vlaneseq
    %v2071 = vshrl.u32 %v2070, 7
    %v2072 = vsub.s32 0, %v2071
    %v2073 = vrot.slane %v2059, %v2072
    %v2074 = vlaneseq
    %v2075 = vshrl.u32 %v2074, 7
    %v2076 = vsub.s32 0, %v2075
    %v2077 = vrot.slane %v2060, %v2076
    %v2078 = vlaneseq
    %v2079 = vshrl.u32 %v2078, 7
    %v2080 = vsub.s32 0, %v2079
    %v2081 = vrot.slane %v2061, %v2080
    %v2082 = vlaneseq
    %v2083 = vshrl.u32 %v2082, 7
    %v2084 = vsub.s32 0, %v2083
    %v2085 = vrot.slane %v2062, %v2084
    %v2086 = vmul.f32 %v2068, %v2073
    %v2087 = vmul.f32 %v2068, %v2077
    %v2088 = vmul.f32 %v2068, %v2081
    %v2089 = vmul.f32 %v2068, %v2085
    %v2090 = vadd.f32 %v2043, %v2086
    %v2091 = vadd.f32 %v2044, %v2087
    %v2092 = vadd.f32 %v2045, %v2088
    %v2093 = vadd.f32 %v2046, %v2089
    %s2094 = scalar_lea.vmem [#allocation4], 68
    %v2095 = vld [vmem:[%s2094] sm:$0xf]
    %2097 = vset.pattern.permute.xlu0 0
    %2098 = vperm.xlu0 %2097, %v2095
    %v2099 = vpop.permute.xlu0 %2098
    %v2101 = vlaneseq
    %v2102 = vshrl.u32 %v2101, 7
    %v2103 = vsub.s32 1, %v2102
    %v2104 = vrot.slane %v2059, %v2103
    %v2105 = vlaneseq
    %v2106 = vshrl.u32 %v2105, 7
    %v2107 = vsub.s32 1, %v2106
    %v2108 = vrot.slane %v2060, %v2107
    %v2109 = vlaneseq
    %v2110 = vshrl.u32 %v2109, 7
    %v2111 = vsub.s32 1, %v2110
    %v2112 = vrot.slane %v2061, %v2111
    %v2113 = vlaneseq
    %v2114 = vshrl.u32 %v2113, 7
    %v2115 = vsub.s32 1, %v2114
    %v2116 = vrot.slane %v2062, %v2115
    %v2117 = vmul.f32 %v2099, %v2104
    %v2118 = vmul.f32 %v2099, %v2108
    %v2119 = vmul.f32 %v2099, %v2112
    %v2120 = vmul.f32 %v2099, %v2116
    %v2121 = vadd.f32 %v2090, %v2117
    %v2122 = vadd.f32 %v2091, %v2118
    %v2123 = vadd.f32 %v2092, %v2119
    %v2124 = vadd.f32 %v2093, %v2120
    %s2125 = scalar_lea.vmem [#allocation4], 72
    %v2126 = vld [vmem:[%s2125] sm:$0xf]
    %2128 = vset.pattern.permute.xlu0 0
    %2129 = vperm.xlu0 %2128, %v2126
    %v2130 = vpop.permute.xlu0 %2129
    %v2132 = vlaneseq
    %v2133 = vshrl.u32 %v2132, 7
    %v2134 = vsub.s32 2, %v2133
    %v2135 = vrot.slane %v2059, %v2134
    %v2136 = vlaneseq
    %v2137 = vshrl.u32 %v2136, 7
    %v2138 = vsub.s32 2, %v2137
    %v2139 = vrot.slane %v2060, %v2138
    %v2140 = vlaneseq
    %v2141 = vshrl.u32 %v2140, 7
    %v2142 = vsub.s32 2, %v2141
    %v2143 = vrot.slane %v2061, %v2142
    %v2144 = vlaneseq
    %v2145 = vshrl.u32 %v2144, 7
    %v2146 = vsub.s32 2, %v2145
    %v2147 = vrot.slane %v2062, %v2146
    %v2148 = vmul.f32 %v2130, %v2135
    %v2149 = vmul.f32 %v2130, %v2139
    %v2150 = vmul.f32 %v2130, %v2143
    %v2151 = vmul.f32 %v2130, %v2147
    %v2152 = vadd.f32 %v2121, %v2148
    %v2153 = vadd.f32 %v2122, %v2149
    %v2154 = vadd.f32 %v2123, %v2150
    %v2155 = vadd.f32 %v2124, %v2151
    %s2156 = scalar_lea.vmem [#allocation4], 76
    %v2157 = vld [vmem:[%s2156] sm:$0xf]
    %2159 = vset.pattern.permute.xlu0 0
    %2160 = vperm.xlu0 %2159, %v2157
    %v2161 = vpop.permute.xlu0 %2160
    %v2163 = vlaneseq
    %v2164 = vshrl.u32 %v2163, 7
    %v2165 = vsub.s32 3, %v2164
    %v2166 = vrot.slane %v2059, %v2165
    %v2167 = vlaneseq
    %v2168 = vshrl.u32 %v2167, 7
    %v2169 = vsub.s32 3, %v2168
    %v2170 = vrot.slane %v2060, %v2169
    %v2171 = vlaneseq
    %v2172 = vshrl.u32 %v2171, 7
    %v2173 = vsub.s32 3, %v2172
    %v2174 = vrot.slane %v2061, %v2173
    %v2175 = vlaneseq
    %v2176 = vshrl.u32 %v2175, 7
    %v2177 = vsub.s32 3, %v2176
    %v2178 = vrot.slane %v2062, %v2177
    %v2179 = vmul.f32 %v2161, %v2166
    %v2180 = vmul.f32 %v2161, %v2170
    %v2181 = vmul.f32 %v2161, %v2174
    %v2182 = vmul.f32 %v2161, %v2178
    %v2183 = vadd.f32 %v2152, %v2179
    %v2184 = vadd.f32 %v2153, %v2180
    %v2185 = vadd.f32 %v2154, %v2181
    %v2186 = vadd.f32 %v2155, %v2182
    %s2187 = scalar_lea.vmem [#allocation4], 80
    %v2188 = vld [vmem:[%s2187] sm:$0xf]
    %2190 = vset.pattern.permute.xlu0 0
    %2191 = vperm.xlu0 %2190, %v2188
    %v2192 = vpop.permute.xlu0 %2191
    %v2194 = vlaneseq
    %v2195 = vshrl.u32 %v2194, 7
    %v2196 = vsub.s32 4, %v2195
    %v2197 = vrot.slane %v2059, %v2196
    %v2198 = vlaneseq
    %v2199 = vshrl.u32 %v2198, 7
    %v2200 = vsub.s32 4, %v2199
    %v2201 = vrot.slane %v2060, %v2200
    %v2202 = vlaneseq
    %v2203 = vshrl.u32 %v2202, 7
    %v2204 = vsub.s32 4, %v2203
    %v2205 = vrot.slane %v2061, %v2204
    %v2206 = vlaneseq
    %v2207 = vshrl.u32 %v2206, 7
    %v2208 = vsub.s32 4, %v2207
    %v2209 = vrot.slane %v2062, %v2208
    %v2210 = vmul.f32 %v2192, %v2197
    %v2211 = vmul.f32 %v2192, %v2201
    %v2212 = vmul.f32 %v2192, %v2205
    %v2213 = vmul.f32 %v2192, %v2209
    %v2214 = vadd.f32 %v2183, %v2210
    %v2215 = vadd.f32 %v2184, %v2211
    %v2216 = vadd.f32 %v2185, %v2212
    %v2217 = vadd.f32 %v2186, %v2213
    %s2218 = scalar_lea.vmem [#allocation4], 84
    %v2219 = vld [vmem:[%s2218] sm:$0xf]
    %2221 = vset.pattern.permute.xlu0 0
    %2222 = vperm.xlu0 %2221, %v2219
    %v2223 = vpop.permute.xlu0 %2222
    %v2225 = vlaneseq
    %v2226 = vshrl.u32 %v2225, 7
    %v2227 = vsub.s32 5, %v2226
    %v2228 = vrot.slane %v2059, %v2227
    %v2229 = vlaneseq
    %v2230 = vshrl.u32 %v2229, 7
    %v2231 = vsub.s32 5, %v2230
    %v2232 = vrot.slane %v2060, %v2231
    %v2233 = vlaneseq
    %v2234 = vshrl.u32 %v2233, 7
    %v2235 = vsub.s32 5, %v2234
    %v2236 = vrot.slane %v2061, %v2235
    %v2237 = vlaneseq
    %v2238 = vshrl.u32 %v2237, 7
    %v2239 = vsub.s32 5, %v2238
    %v2240 = vrot.slane %v2062, %v2239
    %v2241 = vmul.f32 %v2223, %v2228
    %v2242 = vmul.f32 %v2223, %v2232
    %v2243 = vmul.f32 %v2223, %v2236
    %v2244 = vmul.f32 %v2223, %v2240
    %v2245 = vadd.f32 %v2214, %v2241
    %v2246 = vadd.f32 %v2215, %v2242
    %v2247 = vadd.f32 %v2216, %v2243
    %v2248 = vadd.f32 %v2217, %v2244
    %s2249 = scalar_lea.vmem [#allocation4], 88
    %v2250 = vld [vmem:[%s2249] sm:$0xf]
    %2252 = vset.pattern.permute.xlu0 0
    %2253 = vperm.xlu0 %2252, %v2250
    %v2254 = vpop.permute.xlu0 %2253
    %v2256 = vlaneseq
    %v2257 = vshrl.u32 %v2256, 7
    %v2258 = vsub.s32 6, %v2257
    %v2259 = vrot.slane %v2059, %v2258
    %v2260 = vlaneseq
    %v2261 = vshrl.u32 %v2260, 7
    %v2262 = vsub.s32 6, %v2261
    %v2263 = vrot.slane %v2060, %v2262
    %v2264 = vlaneseq
    %v2265 = vshrl.u32 %v2264, 7
    %v2266 = vsub.s32 6, %v2265
    %v2267 = vrot.slane %v2061, %v2266
    %v2268 = vlaneseq
    %v2269 = vshrl.u32 %v2268, 7
    %v2270 = vsub.s32 6, %v2269
    %v2271 = vrot.slane %v2062, %v2270
    %v2272 = vmul.f32 %v2254, %v2259
    %v2273 = vmul.f32 %v2254, %v2263
    %v2274 = vmul.f32 %v2254, %v2267
    %v2275 = vmul.f32 %v2254, %v2271
    %v2276 = vadd.f32 %v2245, %v2272
    %v2277 = vadd.f32 %v2246, %v2273
    %v2278 = vadd.f32 %v2247, %v2274
    %v2279 = vadd.f32 %v2248, %v2275
    %s2280 = scalar_lea.vmem [#allocation4], 92
    %v2281 = vld [vmem:[%s2280] sm:$0xf]
    %2283 = vset.pattern.permute.xlu0 0
    %2284 = vperm.xlu0 %2283, %v2281
    %v2285 = vpop.permute.xlu0 %2284
    %v2287 = vlaneseq
    %v2288 = vshrl.u32 %v2287, 7
    %v2289 = vsub.s32 7, %v2288
    %v2290 = vrot.slane %v2059, %v2289
    %v2291 = vlaneseq
    %v2292 = vshrl.u32 %v2291, 7
    %v2293 = vsub.s32 7, %v2292
    %v2294 = vrot.slane %v2060, %v2293
    %v2295 = vlaneseq
    %v2296 = vshrl.u32 %v2295, 7
    %v2297 = vsub.s32 7, %v2296
    %v2298 = vrot.slane %v2061, %v2297
    %v2299 = vlaneseq
    %v2300 = vshrl.u32 %v2299, 7
    %v2301 = vsub.s32 7, %v2300
    %v2302 = vrot.slane %v2062, %v2301
    %v2303 = vmul.f32 %v2285, %v2290
    %v2304 = vmul.f32 %v2285, %v2294
    %v2305 = vmul.f32 %v2285, %v2298
    %v2306 = vmul.f32 %v2285, %v2302
    %v2307 = vadd.f32 %v2276, %v2303
    %v2308 = vadd.f32 %v2277, %v2304
    %v2309 = vadd.f32 %v2278, %v2305
    %v2310 = vadd.f32 %v2279, %v2306
    %2311 = vrot.lane.b32.xlu0 %v1510, 1
    %v2312 = vpop.permute.xlu0 %2311
    %2313 = vrot.lane.b32.xlu0 %v1512, 1
    %v2314 = vpop.permute.xlu0 %2313
    %2315 = vrot.lane.b32.xlu0 %v1511, 1
    %v2316 = vpop.permute.xlu0 %2315
    %2317 = vrot.lane.b32.xlu0 %v1513, 1
    %v2318 = vpop.permute.xlu0 %2317
    %v2319 = vsel %vm581, %v2312, %v2316
    %v2320 = vsel %vm581, %v2314, %v2318
    %v2321 = vsel %vm581, %v2316, %v2312
    %v2322 = vsel %vm581, %v2318, %v2314
    %v2323 = vsel %vm588, %v2321, 0.0
    %v2324 = vsel %vm589, %v2319, 0.0
    %v2325 = vsel %vm588, %v2322, 0.0
    %v2326 = vsel %vm589, %v2320, 0.0
    %s2327 = scalar_lea.vmem [#allocation4], 96
    %v2328 = vld [vmem:[%s2327] sm:$0xf]
    %2330 = vset.pattern.permute.xlu0 0
    %2331 = vperm.xlu0 %2330, %v2328
    %v2332 = vpop.permute.xlu0 %2331
    %v2334 = vlaneseq
    %v2335 = vshrl.u32 %v2334, 7
    %v2336 = vsub.s32 0, %v2335
    %v2337 = vrot.slane %v2323, %v2336
    %v2338 = vlaneseq
    %v2339 = vshrl.u32 %v2338, 7
    %v2340 = vsub.s32 0, %v2339
    %v2341 = vrot.slane %v2324, %v2340
    %v2342 = vlaneseq
    %v2343 = vshrl.u32 %v2342, 7
    %v2344 = vsub.s32 0, %v2343
    %v2345 = vrot.slane %v2325, %v2344
    %v2346 = vlaneseq
    %v2347 = vshrl.u32 %v2346, 7
    %v2348 = vsub.s32 0, %v2347
    %v2349 = vrot.slane %v2326, %v2348
    %v2350 = vmul.f32 %v2332, %v2337
    %v2351 = vmul.f32 %v2332, %v2341
    %v2352 = vmul.f32 %v2332, %v2345
    %v2353 = vmul.f32 %v2332, %v2349
    %v2354 = vadd.f32 %v2350, 0.0
    %v2355 = vadd.f32 %v2351, 0.0
    %v2356 = vadd.f32 %v2352, 0.0
    %v2357 = vadd.f32 %v2353, 0.0
    %s2358 = scalar_lea.vmem [#allocation4], 100
    %v2359 = vld [vmem:[%s2358] sm:$0xf]
    %2361 = vset.pattern.permute.xlu0 0
    %2362 = vperm.xlu0 %2361, %v2359
    %v2363 = vpop.permute.xlu0 %2362
    %v2365 = vlaneseq
    %v2366 = vshrl.u32 %v2365, 7
    %v2367 = vsub.s32 1, %v2366
    %v2368 = vrot.slane %v2323, %v2367
    %v2369 = vlaneseq
    %v2370 = vshrl.u32 %v2369, 7
    %v2371 = vsub.s32 1, %v2370
    %v2372 = vrot.slane %v2324, %v2371
    %v2373 = vlaneseq
    %v2374 = vshrl.u32 %v2373, 7
    %v2375 = vsub.s32 1, %v2374
    %v2376 = vrot.slane %v2325, %v2375
    %v2377 = vlaneseq
    %v2378 = vshrl.u32 %v2377, 7
    %v2379 = vsub.s32 1, %v2378
    %v2380 = vrot.slane %v2326, %v2379
    %v2381 = vmul.f32 %v2363, %v2368
    %v2382 = vmul.f32 %v2363, %v2372
    %v2383 = vmul.f32 %v2363, %v2376
    %v2384 = vmul.f32 %v2363, %v2380
    %v2385 = vadd.f32 %v2354, %v2381
    %v2386 = vadd.f32 %v2355, %v2382
    %v2387 = vadd.f32 %v2356, %v2383
    %v2388 = vadd.f32 %v2357, %v2384
    %s2389 = scalar_lea.vmem [#allocation4], 104
    %v2390 = vld [vmem:[%s2389] sm:$0xf]
    %2392 = vset.pattern.permute.xlu0 0
    %2393 = vperm.xlu0 %2392, %v2390
    %v2394 = vpop.permute.xlu0 %2393
    %v2396 = vlaneseq
    %v2397 = vshrl.u32 %v2396, 7
    %v2398 = vsub.s32 2, %v2397
    %v2399 = vrot.slane %v2323, %v2398
    %v2400 = vlaneseq
    %v2401 = vshrl.u32 %v2400, 7
    %v2402 = vsub.s32 2, %v2401
    %v2403 = vrot.slane %v2324, %v2402
    %v2404 = vlaneseq
    %v2405 = vshrl.u32 %v2404, 7
    %v2406 = vsub.s32 2, %v2405
    %v2407 = vrot.slane %v2325, %v2406
    %v2408 = vlaneseq
    %v2409 = vshrl.u32 %v2408, 7
    %v2410 = vsub.s32 2, %v2409
    %v2411 = vrot.slane %v2326, %v2410
    %v2412 = vmul.f32 %v2394, %v2399
    %v2413 = vmul.f32 %v2394, %v2403
    %v2414 = vmul.f32 %v2394, %v2407
    %v2415 = vmul.f32 %v2394, %v2411
    %v2416 = vadd.f32 %v2385, %v2412
    %v2417 = vadd.f32 %v2386, %v2413
    %v2418 = vadd.f32 %v2387, %v2414
    %v2419 = vadd.f32 %v2388, %v2415
    %s2420 = scalar_lea.vmem [#allocation4], 108
    %v2421 = vld [vmem:[%s2420] sm:$0xf]
    %2423 = vset.pattern.permute.xlu0 0
    %2424 = vperm.xlu0 %2423, %v2421
    %v2425 = vpop.permute.xlu0 %2424
    %v2427 = vlaneseq
    %v2428 = vshrl.u32 %v2427, 7
    %v2429 = vsub.s32 3, %v2428
    %v2430 = vrot.slane %v2323, %v2429
    %v2431 = vlaneseq
    %v2432 = vshrl.u32 %v2431, 7
    %v2433 = vsub.s32 3, %v2432
    %v2434 = vrot.slane %v2324, %v2433
    %v2435 = vlaneseq
    %v2436 = vshrl.u32 %v2435, 7
    %v2437 = vsub.s32 3, %v2436
    %v2438 = vrot.slane %v2325, %v2437
    %v2439 = vlaneseq
    %v2440 = vshrl.u32 %v2439, 7
    %v2441 = vsub.s32 3, %v2440
    %v2442 = vrot.slane %v2326, %v2441
    %v2443 = vmul.f32 %v2425, %v2430
    %v2444 = vmul.f32 %v2425, %v2434
    %v2445 = vmul.f32 %v2425, %v2438
    %v2446 = vmul.f32 %v2425, %v2442
    %v2447 = vadd.f32 %v2416, %v2443
    %v2448 = vadd.f32 %v2417, %v2444
    %v2449 = vadd.f32 %v2418, %v2445
    %v2450 = vadd.f32 %v2419, %v2446
    %s2451 = scalar_lea.vmem [#allocation4], 112
    %v2452 = vld [vmem:[%s2451] sm:$0xf]
    %2454 = vset.pattern.permute.xlu0 0
    %2455 = vperm.xlu0 %2454, %v2452
    %v2456 = vpop.permute.xlu0 %2455
    %v2458 = vlaneseq
    %v2459 = vshrl.u32 %v2458, 7
    %v2460 = vsub.s32 4, %v2459
    %v2461 = vrot.slane %v2323, %v2460
    %v2462 = vlaneseq
    %v2463 = vshrl.u32 %v2462, 7
    %v2464 = vsub.s32 4, %v2463
    %v2465 = vrot.slane %v2324, %v2464
    %v2466 = vlaneseq
    %v2467 = vshrl.u32 %v2466, 7
    %v2468 = vsub.s32 4, %v2467
    %v2469 = vrot.slane %v2325, %v2468
    %v2470 = vlaneseq
    %v2471 = vshrl.u32 %v2470, 7
    %v2472 = vsub.s32 4, %v2471
    %v2473 = vrot.slane %v2326, %v2472
    %v2474 = vmul.f32 %v2456, %v2461
    %v2475 = vmul.f32 %v2456, %v2465
    %v2476 = vmul.f32 %v2456, %v2469
    %v2477 = vmul.f32 %v2456, %v2473
    %v2478 = vadd.f32 %v2447, %v2474
    %v2479 = vadd.f32 %v2448, %v2475
    %v2480 = vadd.f32 %v2449, %v2476
    %v2481 = vadd.f32 %v2450, %v2477
    %s2482 = scalar_lea.vmem [#allocation4], 116
    %v2483 = vld [vmem:[%s2482] sm:$0xf]
    %2485 = vset.pattern.permute.xlu0 0
    %2486 = vperm.xlu0 %2485, %v2483
    %v2487 = vpop.permute.xlu0 %2486
    %v2489 = vlaneseq
    %v2490 = vshrl.u32 %v2489, 7
    %v2491 = vsub.s32 5, %v2490
    %v2492 = vrot.slane %v2323, %v2491
    %v2493 = vlaneseq
    %v2494 = vshrl.u32 %v2493, 7
    %v2495 = vsub.s32 5, %v2494
    %v2496 = vrot.slane %v2324, %v2495
    %v2497 = vlaneseq
    %v2498 = vshrl.u32 %v2497, 7
    %v2499 = vsub.s32 5, %v2498
    %v2500 = vrot.slane %v2325, %v2499
    %v2501 = vlaneseq
    %v2502 = vshrl.u32 %v2501, 7
    %v2503 = vsub.s32 5, %v2502
    %v2504 = vrot.slane %v2326, %v2503
    %v2505 = vmul.f32 %v2487, %v2492
    %v2506 = vmul.f32 %v2487, %v2496
    %v2507 = vmul.f32 %v2487, %v2500
    %v2508 = vmul.f32 %v2487, %v2504
    %v2509 = vadd.f32 %v2478, %v2505
    %v2510 = vadd.f32 %v2479, %v2506
    %v2511 = vadd.f32 %v2480, %v2507
    %v2512 = vadd.f32 %v2481, %v2508
    %s2513 = scalar_lea.vmem [#allocation4], 120
    %v2514 = vld [vmem:[%s2513] sm:$0xf]
    %2516 = vset.pattern.permute.xlu0 0
    %2517 = vperm.xlu0 %2516, %v2514
    %v2518 = vpop.permute.xlu0 %2517
    %v2520 = vlaneseq
    %v2521 = vshrl.u32 %v2520, 7
    %v2522 = vsub.s32 6, %v2521
    %v2523 = vrot.slane %v2323, %v2522
    %v2524 = vlaneseq
    %v2525 = vshrl.u32 %v2524, 7
    %v2526 = vsub.s32 6, %v2525
    %v2527 = vrot.slane %v2324, %v2526
    %v2528 = vlaneseq
    %v2529 = vshrl.u32 %v2528, 7
    %v2530 = vsub.s32 6, %v2529
    %v2531 = vrot.slane %v2325, %v2530
    %v2532 = vlaneseq
    %v2533 = vshrl.u32 %v2532, 7
    %v2534 = vsub.s32 6, %v2533
    %v2535 = vrot.slane %v2326, %v2534
    %v2536 = vmul.f32 %v2518, %v2523
    %v2537 = vmul.f32 %v2518, %v2527
    %v2538 = vmul.f32 %v2518, %v2531
    %v2539 = vmul.f32 %v2518, %v2535
    %v2540 = vadd.f32 %v2509, %v2536
    %v2541 = vadd.f32 %v2510, %v2537
    %v2542 = vadd.f32 %v2511, %v2538
    %v2543 = vadd.f32 %v2512, %v2539
    %s2544 = scalar_lea.vmem [#allocation4], 124
    %v2545 = vld [vmem:[%s2544] sm:$0xf]
    %2547 = vset.pattern.permute.xlu0 0
    %2548 = vperm.xlu0 %2547, %v2545
    %v2549 = vpop.permute.xlu0 %2548
    %v2551 = vlaneseq
    %v2552 = vshrl.u32 %v2551, 7
    %v2553 = vsub.s32 7, %v2552
    %v2554 = vrot.slane %v2323, %v2553
    %v2555 = vlaneseq
    %v2556 = vshrl.u32 %v2555, 7
    %v2557 = vsub.s32 7, %v2556
    %v2558 = vrot.slane %v2324, %v2557
    %v2559 = vlaneseq
    %v2560 = vshrl.u32 %v2559, 7
    %v2561 = vsub.s32 7, %v2560
    %v2562 = vrot.slane %v2325, %v2561
    %v2563 = vlaneseq
    %v2564 = vshrl.u32 %v2563, 7
    %v2565 = vsub.s32 7, %v2564
    %v2566 = vrot.slane %v2326, %v2565
    %v2567 = vmul.f32 %v2549, %v2554
    %v2568 = vmul.f32 %v2549, %v2558
    %v2569 = vmul.f32 %v2549, %v2562
    %v2570 = vmul.f32 %v2549, %v2566
    %v2571 = vadd.f32 %v2540, %v2567
    %v2572 = vadd.f32 %v2541, %v2568
    %v2573 = vadd.f32 %v2542, %v2569
    %v2574 = vadd.f32 %v2543, %v2570
    %s2575 = scalar_lea.vmem [#allocation4], 128
    %v2576 = vld [vmem:[%s2575] sm:$0xf]
    %2578 = vset.pattern.permute.xlu0 0
    %2579 = vperm.xlu0 %2578, %v2576
    %v2580 = vpop.permute.xlu0 %2579
    %v2582 = vlaneseq
    %v2583 = vshrl.u32 %v2582, 7
    %v2584 = vsub.s32 0, %v2583
    %v2585 = vrot.slane %v1510, %v2584
    %v2586 = vlaneseq
    %v2587 = vshrl.u32 %v2586, 7
    %v2588 = vsub.s32 0, %v2587
    %v2589 = vrot.slane %v1511, %v2588
    %v2590 = vlaneseq
    %v2591 = vshrl.u32 %v2590, 7
    %v2592 = vsub.s32 0, %v2591
    %v2593 = vrot.slane %v1512, %v2592
    %v2594 = vlaneseq
    %v2595 = vshrl.u32 %v2594, 7
    %v2596 = vsub.s32 0, %v2595
    %v2597 = vrot.slane %v1513, %v2596
    %v2598 = vmul.f32 %v2580, %v2585
    %v2599 = vmul.f32 %v2580, %v2589
    %v2600 = vmul.f32 %v2580, %v2593
    %v2601 = vmul.f32 %v2580, %v2597
    %v2602 = vadd.f32 %v2571, %v2598
    %v2603 = vadd.f32 %v2572, %v2599
    %v2604 = vadd.f32 %v2573, %v2600
    %v2605 = vadd.f32 %v2574, %v2601
    %s2606 = scalar_lea.vmem [#allocation4], 132
    %v2607 = vld [vmem:[%s2606] sm:$0xf]
    %2609 = vset.pattern.permute.xlu0 0
    %2610 = vperm.xlu0 %2609, %v2607
    %v2611 = vpop.permute.xlu0 %2610
    %v2613 = vlaneseq
    %v2614 = vshrl.u32 %v2613, 7
    %v2615 = vsub.s32 1, %v2614
    %v2616 = vrot.slane %v1510, %v2615
    %v2617 = vlaneseq
    %v2618 = vshrl.u32 %v2617, 7
    %v2619 = vsub.s32 1, %v2618
    %v2620 = vrot.slane %v1511, %v2619
    %v2621 = vlaneseq
    %v2622 = vshrl.u32 %v2621, 7
    %v2623 = vsub.s32 1, %v2622
    %v2624 = vrot.slane %v1512, %v2623
    %v2625 = vlaneseq
    %v2626 = vshrl.u32 %v2625, 7
    %v2627 = vsub.s32 1, %v2626
    %v2628 = vrot.slane %v1513, %v2627
    %v2629 = vmul.f32 %v2611, %v2616
    %v2630 = vmul.f32 %v2611, %v2620
    %v2631 = vmul.f32 %v2611, %v2624
    %v2632 = vmul.f32 %v2611, %v2628
    %v2633 = vadd.f32 %v2602, %v2629
    %v2634 = vadd.f32 %v2603, %v2630
    %v2635 = vadd.f32 %v2604, %v2631
    %v2636 = vadd.f32 %v2605, %v2632
    %s2637 = scalar_lea.vmem [#allocation4], 136
    %v2638 = vld [vmem:[%s2637] sm:$0xf]
    %2640 = vset.pattern.permute.xlu0 0
    %2641 = vperm.xlu0 %2640, %v2638
    %v2642 = vpop.permute.xlu0 %2641
    %v2644 = vlaneseq
    %v2645 = vshrl.u32 %v2644, 7
    %v2646 = vsub.s32 2, %v2645
    %v2647 = vrot.slane %v1510, %v2646
    %v2648 = vlaneseq
    %v2649 = vshrl.u32 %v2648, 7
    %v2650 = vsub.s32 2, %v2649
    %v2651 = vrot.slane %v1511, %v2650
    %v2652 = vlaneseq
    %v2653 = vshrl.u32 %v2652, 7
    %v2654 = vsub.s32 2, %v2653
    %v2655 = vrot.slane %v1512, %v2654
    %v2656 = vlaneseq
    %v2657 = vshrl.u32 %v2656, 7
    %v2658 = vsub.s32 2, %v2657
    %v2659 = vrot.slane %v1513, %v2658
    %v2660 = vmul.f32 %v2642, %v2647
    %v2661 = vmul.f32 %v2642, %v2651
    %v2662 = vmul.f32 %v2642, %v2655
    %v2663 = vmul.f32 %v2642, %v2659
    %v2664 = vadd.f32 %v2633, %v2660
    %v2665 = vadd.f32 %v2634, %v2661
    %v2666 = vadd.f32 %v2635, %v2662
    %v2667 = vadd.f32 %v2636, %v2663
    %s2668 = scalar_lea.vmem [#allocation4], 140
    %v2669 = vld [vmem:[%s2668] sm:$0xf]
    %2671 = vset.pattern.permute.xlu0 0
    %2672 = vperm.xlu0 %2671, %v2669
    %v2673 = vpop.permute.xlu0 %2672
    %v2675 = vlaneseq
    %v2676 = vshrl.u32 %v2675, 7
    %v2677 = vsub.s32 3, %v2676
    %v2678 = vrot.slane %v1510, %v2677
    %v2679 = vlaneseq
    %v2680 = vshrl.u32 %v2679, 7
    %v2681 = vsub.s32 3, %v2680
    %v2682 = vrot.slane %v1511, %v2681
    %v2683 = vlaneseq
    %v2684 = vshrl.u32 %v2683, 7
    %v2685 = vsub.s32 3, %v2684
    %v2686 = vrot.slane %v1512, %v2685
    %v2687 = vlaneseq
    %v2688 = vshrl.u32 %v2687, 7
    %v2689 = vsub.s32 3, %v2688
    %v2690 = vrot.slane %v1513, %v2689
    %v2691 = vmul.f32 %v2673, %v2678
    %v2692 = vmul.f32 %v2673, %v2682
    %v2693 = vmul.f32 %v2673, %v2686
    %v2694 = vmul.f32 %v2673, %v2690
    %v2695 = vadd.f32 %v2664, %v2691
    %v2696 = vadd.f32 %v2665, %v2692
    %v2697 = vadd.f32 %v2666, %v2693
    %v2698 = vadd.f32 %v2667, %v2694
    %s2699 = scalar_lea.vmem [#allocation4], 144
    %v2700 = vld [vmem:[%s2699] sm:$0xf]
    %2702 = vset.pattern.permute.xlu0 0
    %2703 = vperm.xlu0 %2702, %v2700
    %v2704 = vpop.permute.xlu0 %2703
    %v2706 = vlaneseq
    %v2707 = vshrl.u32 %v2706, 7
    %v2708 = vsub.s32 4, %v2707
    %v2709 = vrot.slane %v1510, %v2708
    %v2710 = vlaneseq
    %v2711 = vshrl.u32 %v2710, 7
    %v2712 = vsub.s32 4, %v2711
    %v2713 = vrot.slane %v1511, %v2712
    %v2714 = vlaneseq
    %v2715 = vshrl.u32 %v2714, 7
    %v2716 = vsub.s32 4, %v2715
    %v2717 = vrot.slane %v1512, %v2716
    %v2718 = vlaneseq
    %v2719 = vshrl.u32 %v2718, 7
    %v2720 = vsub.s32 4, %v2719
    %v2721 = vrot.slane %v1513, %v2720
    %v2722 = vmul.f32 %v2704, %v2709
    %v2723 = vmul.f32 %v2704, %v2713
    %v2724 = vmul.f32 %v2704, %v2717
    %v2725 = vmul.f32 %v2704, %v2721
    %v2726 = vadd.f32 %v2695, %v2722
    %v2727 = vadd.f32 %v2696, %v2723
    %v2728 = vadd.f32 %v2697, %v2724
    %v2729 = vadd.f32 %v2698, %v2725
    %s2730 = scalar_lea.vmem [#allocation4], 148
    %v2731 = vld [vmem:[%s2730] sm:$0xf]
    %2733 = vset.pattern.permute.xlu0 0
    %2734 = vperm.xlu0 %2733, %v2731
    %v2735 = vpop.permute.xlu0 %2734
    %v2737 = vlaneseq
    %v2738 = vshrl.u32 %v2737, 7
    %v2739 = vsub.s32 5, %v2738
    %v2740 = vrot.slane %v1510, %v2739
    %v2741 = vlaneseq
    %v2742 = vshrl.u32 %v2741, 7
    %v2743 = vsub.s32 5, %v2742
    %v2744 = vrot.slane %v1511, %v2743
    %v2745 = vlaneseq
    %v2746 = vshrl.u32 %v2745, 7
    %v2747 = vsub.s32 5, %v2746
    %v2748 = vrot.slane %v1512, %v2747
    %v2749 = vlaneseq
    %v2750 = vshrl.u32 %v2749, 7
    %v2751 = vsub.s32 5, %v2750
    %v2752 = vrot.slane %v1513, %v2751
    %v2753 = vmul.f32 %v2735, %v2740
    %v2754 = vmul.f32 %v2735, %v2744
    %v2755 = vmul.f32 %v2735, %v2748
    %v2756 = vmul.f32 %v2735, %v2752
    %v2757 = vadd.f32 %v2726, %v2753
    %v2758 = vadd.f32 %v2727, %v2754
    %v2759 = vadd.f32 %v2728, %v2755
    %v2760 = vadd.f32 %v2729, %v2756
    %s2761 = scalar_lea.vmem [#allocation4], 152
    %v2762 = vld [vmem:[%s2761] sm:$0xf]
    %2764 = vset.pattern.permute.xlu0 0
    %2765 = vperm.xlu0 %2764, %v2762
    %v2766 = vpop.permute.xlu0 %2765
    %v2768 = vlaneseq
    %v2769 = vshrl.u32 %v2768, 7
    %v2770 = vsub.s32 6, %v2769
    %v2771 = vrot.slane %v1510, %v2770
    %v2772 = vlaneseq
    %v2773 = vshrl.u32 %v2772, 7
    %v2774 = vsub.s32 6, %v2773
    %v2775 = vrot.slane %v1511, %v2774
    %v2776 = vlaneseq
    %v2777 = vshrl.u32 %v2776, 7
    %v2778 = vsub.s32 6, %v2777
    %v2779 = vrot.slane %v1512, %v2778
    %v2780 = vlaneseq
    %v2781 = vshrl.u32 %v2780, 7
    %v2782 = vsub.s32 6, %v2781
    %v2783 = vrot.slane %v1513, %v2782
    %v2784 = vmul.f32 %v2766, %v2771
    %v2785 = vmul.f32 %v2766, %v2775
    %v2786 = vmul.f32 %v2766, %v2779
    %v2787 = vmul.f32 %v2766, %v2783
    %v2788 = vadd.f32 %v2757, %v2784
    %v2789 = vadd.f32 %v2758, %v2785
    %v2790 = vadd.f32 %v2759, %v2786
    %v2791 = vadd.f32 %v2760, %v2787
    %s2792 = scalar_lea.vmem [#allocation4], 156
    %v2793 = vld [vmem:[%s2792] sm:$0xf]
    %2795 = vset.pattern.permute.xlu0 0
    %2796 = vperm.xlu0 %2795, %v2793
    %v2797 = vpop.permute.xlu0 %2796
    %v2799 = vlaneseq
    %v2800 = vshrl.u32 %v2799, 7
    %v2801 = vsub.s32 7, %v2800
    %v2802 = vrot.slane %v1510, %v2801
    %v2803 = vlaneseq
    %v2804 = vshrl.u32 %v2803, 7
    %v2805 = vsub.s32 7, %v2804
    %v2806 = vrot.slane %v1511, %v2805
    %v2807 = vlaneseq
    %v2808 = vshrl.u32 %v2807, 7
    %v2809 = vsub.s32 7, %v2808
    %v2810 = vrot.slane %v1512, %v2809
    %v2811 = vlaneseq
    %v2812 = vshrl.u32 %v2811, 7
    %v2813 = vsub.s32 7, %v2812
    %v2814 = vrot.slane %v1513, %v2813
    %v2815 = vmul.f32 %v2797, %v2802
    %v2816 = vmul.f32 %v2797, %v2806
    %v2817 = vmul.f32 %v2797, %v2810
    %v2818 = vmul.f32 %v2797, %v2814
    %v2819 = vadd.f32 %v2788, %v2815
    %v2820 = vadd.f32 %v2789, %v2816
    %v2821 = vadd.f32 %v2790, %v2817
    %v2822 = vadd.f32 %v2791, %v2818
    %2823 = vrot.lane.b32.xlu0 %v1510, 127
    %v2824 = vpop.permute.xlu0 %2823
    %2825 = vrot.lane.b32.xlu0 %v1512, 127
    %v2826 = vpop.permute.xlu0 %2825
    %2827 = vrot.lane.b32.xlu0 %v1511, 127
    %v2828 = vpop.permute.xlu0 %2827
    %2829 = vrot.lane.b32.xlu0 %v1513, 127
    %v2830 = vpop.permute.xlu0 %2829
    %v2831 = vsel %vm930, %v2824, %v2828
    %v2832 = vsel %vm930, %v2826, %v2830
    %v2833 = vsel %vm930, %v2828, %v2824
    %v2834 = vsel %vm930, %v2830, %v2826
    %v2835 = vsel %vm937, %v2831, 0.0
    %v2836 = vsel %vm938, %v2833, 0.0
    %v2837 = vsel %vm937, %v2832, 0.0
    %v2838 = vsel %vm938, %v2834, 0.0
    %s2839 = scalar_lea.vmem [#allocation4], 160
    %v2840 = vld [vmem:[%s2839] sm:$0xf]
    %2842 = vset.pattern.permute.xlu0 0
    %2843 = vperm.xlu0 %2842, %v2840
    %v2844 = vpop.permute.xlu0 %2843
    %v2846 = vlaneseq
    %v2847 = vshrl.u32 %v2846, 7
    %v2848 = vsub.s32 0, %v2847
    %v2849 = vrot.slane %v2835, %v2848
    %v2850 = vlaneseq
    %v2851 = vshrl.u32 %v2850, 7
    %v2852 = vsub.s32 0, %v2851
    %v2853 = vrot.slane %v2836, %v2852
    %v2854 = vlaneseq
    %v2855 = vshrl.u32 %v2854, 7
    %v2856 = vsub.s32 0, %v2855
    %v2857 = vrot.slane %v2837, %v2856
    %v2858 = vlaneseq
    %v2859 = vshrl.u32 %v2858, 7
    %v2860 = vsub.s32 0, %v2859
    %v2861 = vrot.slane %v2838, %v2860
    %v2862 = vmul.f32 %v2844, %v2849
    %v2863 = vmul.f32 %v2844, %v2853
    %v2864 = vmul.f32 %v2844, %v2857
    %v2865 = vmul.f32 %v2844, %v2861
    %v2866 = vadd.f32 %v2819, %v2862
    %v2867 = vadd.f32 %v2820, %v2863
    %v2868 = vadd.f32 %v2821, %v2864
    %v2869 = vadd.f32 %v2822, %v2865
    %s2870 = scalar_lea.vmem [#allocation4], 164
    %v2871 = vld [vmem:[%s2870] sm:$0xf]
    %2873 = vset.pattern.permute.xlu0 0
    %2874 = vperm.xlu0 %2873, %v2871
    %v2875 = vpop.permute.xlu0 %2874
    %v2877 = vlaneseq
    %v2878 = vshrl.u32 %v2877, 7
    %v2879 = vsub.s32 1, %v2878
    %v2880 = vrot.slane %v2835, %v2879
    %v2881 = vlaneseq
    %v2882 = vshrl.u32 %v2881, 7
    %v2883 = vsub.s32 1, %v2882
    %v2884 = vrot.slane %v2836, %v2883
    %v2885 = vlaneseq
    %v2886 = vshrl.u32 %v2885, 7
    %v2887 = vsub.s32 1, %v2886
    %v2888 = vrot.slane %v2837, %v2887
    %v2889 = vlaneseq
    %v2890 = vshrl.u32 %v2889, 7
    %v2891 = vsub.s32 1, %v2890
    %v2892 = vrot.slane %v2838, %v2891
    %v2893 = vmul.f32 %v2875, %v2880
    %v2894 = vmul.f32 %v2875, %v2884
    %v2895 = vmul.f32 %v2875, %v2888
    %v2896 = vmul.f32 %v2875, %v2892
    %v2897 = vadd.f32 %v2866, %v2893
    %v2898 = vadd.f32 %v2867, %v2894
    %v2899 = vadd.f32 %v2868, %v2895
    %v2900 = vadd.f32 %v2869, %v2896
    %s2901 = scalar_lea.vmem [#allocation4], 168
    %v2902 = vld [vmem:[%s2901] sm:$0xf]
    %2904 = vset.pattern.permute.xlu0 0
    %2905 = vperm.xlu0 %2904, %v2902
    %v2906 = vpop.permute.xlu0 %2905
    %v2908 = vlaneseq
    %v2909 = vshrl.u32 %v2908, 7
    %v2910 = vsub.s32 2, %v2909
    %v2911 = vrot.slane %v2835, %v2910
    %v2912 = vlaneseq
    %v2913 = vshrl.u32 %v2912, 7
    %v2914 = vsub.s32 2, %v2913
    %v2915 = vrot.slane %v2836, %v2914
    %v2916 = vlaneseq
    %v2917 = vshrl.u32 %v2916, 7
    %v2918 = vsub.s32 2, %v2917
    %v2919 = vrot.slane %v2837, %v2918
    %v2920 = vlaneseq
    %v2921 = vshrl.u32 %v2920, 7
    %v2922 = vsub.s32 2, %v2921
    %v2923 = vrot.slane %v2838, %v2922
    %v2924 = vmul.f32 %v2906, %v2911
    %v2925 = vmul.f32 %v2906, %v2915
    %v2926 = vmul.f32 %v2906, %v2919
    %v2927 = vmul.f32 %v2906, %v2923
    %v2928 = vadd.f32 %v2897, %v2924
    %v2929 = vadd.f32 %v2898, %v2925
    %v2930 = vadd.f32 %v2899, %v2926
    %v2931 = vadd.f32 %v2900, %v2927
    %s2932 = scalar_lea.vmem [#allocation4], 172
    %v2933 = vld [vmem:[%s2932] sm:$0xf]
    %2935 = vset.pattern.permute.xlu0 0
    %2936 = vperm.xlu0 %2935, %v2933
    %v2937 = vpop.permute.xlu0 %2936
    %v2939 = vlaneseq
    %v2940 = vshrl.u32 %v2939, 7
    %v2941 = vsub.s32 3, %v2940
    %v2942 = vrot.slane %v2835, %v2941
    %v2943 = vlaneseq
    %v2944 = vshrl.u32 %v2943, 7
    %v2945 = vsub.s32 3, %v2944
    %v2946 = vrot.slane %v2836, %v2945
    %v2947 = vlaneseq
    %v2948 = vshrl.u32 %v2947, 7
    %v2949 = vsub.s32 3, %v2948
    %v2950 = vrot.slane %v2837, %v2949
    %v2951 = vlaneseq
    %v2952 = vshrl.u32 %v2951, 7
    %v2953 = vsub.s32 3, %v2952
    %v2954 = vrot.slane %v2838, %v2953
    %v2955 = vmul.f32 %v2937, %v2942
    %v2956 = vmul.f32 %v2937, %v2946
    %v2957 = vmul.f32 %v2937, %v2950
    %v2958 = vmul.f32 %v2937, %v2954
    %v2959 = vadd.f32 %v2928, %v2955
    %v2960 = vadd.f32 %v2929, %v2956
    %v2961 = vadd.f32 %v2930, %v2957
    %v2962 = vadd.f32 %v2931, %v2958
    %s2963 = scalar_lea.vmem [#allocation4], 176
    %v2964 = vld [vmem:[%s2963] sm:$0xf]
    %2966 = vset.pattern.permute.xlu0 0
    %2967 = vperm.xlu0 %2966, %v2964
    %v2968 = vpop.permute.xlu0 %2967
    %v2970 = vlaneseq
    %v2971 = vshrl.u32 %v2970, 7
    %v2972 = vsub.s32 4, %v2971
    %v2973 = vrot.slane %v2835, %v2972
    %v2974 = vlaneseq
    %v2975 = vshrl.u32 %v2974, 7
    %v2976 = vsub.s32 4, %v2975
    %v2977 = vrot.slane %v2836, %v2976
    %v2978 = vlaneseq
    %v2979 = vshrl.u32 %v2978, 7
    %v2980 = vsub.s32 4, %v2979
    %v2981 = vrot.slane %v2837, %v2980
    %v2982 = vlaneseq
    %v2983 = vshrl.u32 %v2982, 7
    %v2984 = vsub.s32 4, %v2983
    %v2985 = vrot.slane %v2838, %v2984
    %v2986 = vmul.f32 %v2968, %v2973
    %v2987 = vmul.f32 %v2968, %v2977
    %v2988 = vmul.f32 %v2968, %v2981
    %v2989 = vmul.f32 %v2968, %v2985
    %v2990 = vadd.f32 %v2959, %v2986
    %v2991 = vadd.f32 %v2960, %v2987
    %v2992 = vadd.f32 %v2961, %v2988
    %v2993 = vadd.f32 %v2962, %v2989
    %s2994 = scalar_lea.vmem [#allocation4], 180
    %v2995 = vld [vmem:[%s2994] sm:$0xf]
    %2997 = vset.pattern.permute.xlu0 0
    %2998 = vperm.xlu0 %2997, %v2995
    %v2999 = vpop.permute.xlu0 %2998
    %v3001 = vlaneseq
    %v3002 = vshrl.u32 %v3001, 7
    %v3003 = vsub.s32 5, %v3002
    %v3004 = vrot.slane %v2835, %v3003
    %v3005 = vlaneseq
    %v3006 = vshrl.u32 %v3005, 7
    %v3007 = vsub.s32 5, %v3006
    %v3008 = vrot.slane %v2836, %v3007
    %v3009 = vlaneseq
    %v3010 = vshrl.u32 %v3009, 7
    %v3011 = vsub.s32 5, %v3010
    %v3012 = vrot.slane %v2837, %v3011
    %v3013 = vlaneseq
    %v3014 = vshrl.u32 %v3013, 7
    %v3015 = vsub.s32 5, %v3014
    %v3016 = vrot.slane %v2838, %v3015
    %v3017 = vmul.f32 %v2999, %v3004
    %v3018 = vmul.f32 %v2999, %v3008
    %v3019 = vmul.f32 %v2999, %v3012
    %v3020 = vmul.f32 %v2999, %v3016
    %v3021 = vadd.f32 %v2990, %v3017
    %v3022 = vadd.f32 %v2991, %v3018
    %v3023 = vadd.f32 %v2992, %v3019
    %v3024 = vadd.f32 %v2993, %v3020
    %s3025 = scalar_lea.vmem [#allocation4], 184
    %v3026 = vld [vmem:[%s3025] sm:$0xf]
    %3028 = vset.pattern.permute.xlu0 0
    %3029 = vperm.xlu0 %3028, %v3026
    %v3030 = vpop.permute.xlu0 %3029
    %v3032 = vlaneseq
    %v3033 = vshrl.u32 %v3032, 7
    %v3034 = vsub.s32 6, %v3033
    %v3035 = vrot.slane %v2835, %v3034
    %v3036 = vlaneseq
    %v3037 = vshrl.u32 %v3036, 7
    %v3038 = vsub.s32 6, %v3037
    %v3039 = vrot.slane %v2836, %v3038
    %v3040 = vlaneseq
    %v3041 = vshrl.u32 %v3040, 7
    %v3042 = vsub.s32 6, %v3041
    %v3043 = vrot.slane %v2837, %v3042
    %v3044 = vlaneseq
    %v3045 = vshrl.u32 %v3044, 7
    %v3046 = vsub.s32 6, %v3045
    %v3047 = vrot.slane %v2838, %v3046
    %v3048 = vmul.f32 %v3030, %v3035
    %v3049 = vmul.f32 %v3030, %v3039
    %v3050 = vmul.f32 %v3030, %v3043
    %v3051 = vmul.f32 %v3030, %v3047
    %v3052 = vadd.f32 %v3021, %v3048
    %v3053 = vadd.f32 %v3022, %v3049
    %v3054 = vadd.f32 %v3023, %v3050
    %v3055 = vadd.f32 %v3024, %v3051
    %s3056 = scalar_lea.vmem [#allocation4], 188
    %v3057 = vld [vmem:[%s3056] sm:$0xf]
    %3059 = vset.pattern.permute.xlu0 0
    %3060 = vperm.xlu0 %3059, %v3057
    %v3061 = vpop.permute.xlu0 %3060
    %v3063 = vlaneseq
    %v3064 = vshrl.u32 %v3063, 7
    %v3065 = vsub.s32 7, %v3064
    %v3066 = vrot.slane %v2835, %v3065
    %v3067 = vlaneseq
    %v3068 = vshrl.u32 %v3067, 7
    %v3069 = vsub.s32 7, %v3068
    %v3070 = vrot.slane %v2836, %v3069
    %v3071 = vlaneseq
    %v3072 = vshrl.u32 %v3071, 7
    %v3073 = vsub.s32 7, %v3072
    %v3074 = vrot.slane %v2837, %v3073
    %v3075 = vlaneseq
    %v3076 = vshrl.u32 %v3075, 7
    %v3077 = vsub.s32 7, %v3076
    %v3078 = vrot.slane %v2838, %v3077
    %v3079 = vmul.f32 %v3061, %v3066
    %v3080 = vmul.f32 %v3061, %v3070
    %v3081 = vmul.f32 %v3061, %v3074
    %v3082 = vmul.f32 %v3061, %v3078
    %v3083 = vadd.f32 %v3052, %v3079
    %v3084 = vadd.f32 %v3053, %v3080
    %v3085 = vadd.f32 %v3054, %v3081
    %v3086 = vadd.f32 %v3055, %v3082
    %3087 = vrot.lane.b32.xlu0 %v1510, 113
    %v3088 = vpop.permute.xlu0 %3087
    %3089 = vrot.lane.b32.xlu0 %v1512, 113
    %v3090 = vpop.permute.xlu0 %3089
    %3091 = vrot.lane.b32.xlu0 %v1511, 113
    %v3092 = vpop.permute.xlu0 %3091
    %3093 = vrot.lane.b32.xlu0 %v1513, 113
    %v3094 = vpop.permute.xlu0 %3093
    %v3095 = vsel %vm1075, %v3088, %v3092
    %v3096 = vsel %vm1075, %v3090, %v3094
    %v3097 = vsel %vm1075, %v3092, %v3088
    %v3098 = vsel %vm1075, %v3094, %v3090
    %v3099 = vsel %vm1082, %v3095, 0.0
    %v3100 = vsel %vm1083, %v3097, 0.0
    %v3101 = vsel %vm1082, %v3096, 0.0
    %v3102 = vsel %vm1083, %v3098, 0.0
    %s3103 = scalar_lea.vmem [#allocation4], 192
    %v3104 = vld [vmem:[%s3103] sm:$0xf]
    %3106 = vset.pattern.permute.xlu0 0
    %3107 = vperm.xlu0 %3106, %v3104
    %v3108 = vpop.permute.xlu0 %3107
    %v3110 = vlaneseq
    %v3111 = vshrl.u32 %v3110, 7
    %v3112 = vsub.s32 0, %v3111
    %v3113 = vrot.slane %v3099, %v3112
    %v3114 = vlaneseq
    %v3115 = vshrl.u32 %v3114, 7
    %v3116 = vsub.s32 0, %v3115
    %v3117 = vrot.slane %v3100, %v3116
    %v3118 = vlaneseq
    %v3119 = vshrl.u32 %v3118, 7
    %v3120 = vsub.s32 0, %v3119
    %v3121 = vrot.slane %v3101, %v3120
    %v3122 = vlaneseq
    %v3123 = vshrl.u32 %v3122, 7
    %v3124 = vsub.s32 0, %v3123
    %v3125 = vrot.slane %v3102, %v3124
    %v3126 = vmul.f32 %v3108, %v3113
    %v3127 = vmul.f32 %v3108, %v3117
    %v3128 = vmul.f32 %v3108, %v3121
    %v3129 = vmul.f32 %v3108, %v3125
    %v3130 = vadd.f32 %v3126, 0.0
    %v3131 = vadd.f32 %v3127, 0.0
    %v3132 = vadd.f32 %v3128, 0.0
    %v3133 = vadd.f32 %v3129, 0.0
    %s3134 = scalar_lea.vmem [#allocation4], 196
    %v3135 = vld [vmem:[%s3134] sm:$0xf]
    %3137 = vset.pattern.permute.xlu0 0
    %3138 = vperm.xlu0 %3137, %v3135
    %v3139 = vpop.permute.xlu0 %3138
    %v3141 = vlaneseq
    %v3142 = vshrl.u32 %v3141, 7
    %v3143 = vsub.s32 1, %v3142
    %v3144 = vrot.slane %v3099, %v3143
    %v3145 = vlaneseq
    %v3146 = vshrl.u32 %v3145, 7
    %v3147 = vsub.s32 1, %v3146
    %v3148 = vrot.slane %v3100, %v3147
    %v3149 = vlaneseq
    %v3150 = vshrl.u32 %v3149, 7
    %v3151 = vsub.s32 1, %v3150
    %v3152 = vrot.slane %v3101, %v3151
    %v3153 = vlaneseq
    %v3154 = vshrl.u32 %v3153, 7
    %v3155 = vsub.s32 1, %v3154
    %v3156 = vrot.slane %v3102, %v3155
    %v3157 = vmul.f32 %v3139, %v3144
    %v3158 = vmul.f32 %v3139, %v3148
    %v3159 = vmul.f32 %v3139, %v3152
    %v3160 = vmul.f32 %v3139, %v3156
    %v3161 = vadd.f32 %v3130, %v3157
    %v3162 = vadd.f32 %v3131, %v3158
    %v3163 = vadd.f32 %v3132, %v3159
    %v3164 = vadd.f32 %v3133, %v3160
    %s3165 = scalar_lea.vmem [#allocation4], 200
    %v3166 = vld [vmem:[%s3165] sm:$0xf]
    %3168 = vset.pattern.permute.xlu0 0
    %3169 = vperm.xlu0 %3168, %v3166
    %v3170 = vpop.permute.xlu0 %3169
    %v3172 = vlaneseq
    %v3173 = vshrl.u32 %v3172, 7
    %v3174 = vsub.s32 2, %v3173
    %v3175 = vrot.slane %v3099, %v3174
    %v3176 = vlaneseq
    %v3177 = vshrl.u32 %v3176, 7
    %v3178 = vsub.s32 2, %v3177
    %v3179 = vrot.slane %v3100, %v3178
    %v3180 = vlaneseq
    %v3181 = vshrl.u32 %v3180, 7
    %v3182 = vsub.s32 2, %v3181
    %v3183 = vrot.slane %v3101, %v3182
    %v3184 = vlaneseq
    %v3185 = vshrl.u32 %v3184, 7
    %v3186 = vsub.s32 2, %v3185
    %v3187 = vrot.slane %v3102, %v3186
    %v3188 = vmul.f32 %v3170, %v3175
    %v3189 = vmul.f32 %v3170, %v3179
    %v3190 = vmul.f32 %v3170, %v3183
    %v3191 = vmul.f32 %v3170, %v3187
    %v3192 = vadd.f32 %v3161, %v3188
    %v3193 = vadd.f32 %v3162, %v3189
    %v3194 = vadd.f32 %v3163, %v3190
    %v3195 = vadd.f32 %v3164, %v3191
    %s3196 = scalar_lea.vmem [#allocation4], 204
    %v3197 = vld [vmem:[%s3196] sm:$0xf]
    %3199 = vset.pattern.permute.xlu0 0
    %3200 = vperm.xlu0 %3199, %v3197
    %v3201 = vpop.permute.xlu0 %3200
    %v3203 = vlaneseq
    %v3204 = vshrl.u32 %v3203, 7
    %v3205 = vsub.s32 3, %v3204
    %v3206 = vrot.slane %v3099, %v3205
    %v3207 = vlaneseq
    %v3208 = vshrl.u32 %v3207, 7
    %v3209 = vsub.s32 3, %v3208
    %v3210 = vrot.slane %v3100, %v3209
    %v3211 = vlaneseq
    %v3212 = vshrl.u32 %v3211, 7
    %v3213 = vsub.s32 3, %v3212
    %v3214 = vrot.slane %v3101, %v3213
    %v3215 = vlaneseq
    %v3216 = vshrl.u32 %v3215, 7
    %v3217 = vsub.s32 3, %v3216
    %v3218 = vrot.slane %v3102, %v3217
    %v3219 = vmul.f32 %v3201, %v3206
    %v3220 = vmul.f32 %v3201, %v3210
    %v3221 = vmul.f32 %v3201, %v3214
    %v3222 = vmul.f32 %v3201, %v3218
    %v3223 = vadd.f32 %v3192, %v3219
    %v3224 = vadd.f32 %v3193, %v3220
    %v3225 = vadd.f32 %v3194, %v3221
    %v3226 = vadd.f32 %v3195, %v3222
    %s3227 = scalar_lea.vmem [#allocation4], 208
    %v3228 = vld [vmem:[%s3227] sm:$0xf]
    %3230 = vset.pattern.permute.xlu0 0
    %3231 = vperm.xlu0 %3230, %v3228
    %v3232 = vpop.permute.xlu0 %3231
    %v3234 = vlaneseq
    %v3235 = vshrl.u32 %v3234, 7
    %v3236 = vsub.s32 4, %v3235
    %v3237 = vrot.slane %v3099, %v3236
    %v3238 = vlaneseq
    %v3239 = vshrl.u32 %v3238, 7
    %v3240 = vsub.s32 4, %v3239
    %v3241 = vrot.slane %v3100, %v3240
    %v3242 = vlaneseq
    %v3243 = vshrl.u32 %v3242, 7
    %v3244 = vsub.s32 4, %v3243
    %v3245 = vrot.slane %v3101, %v3244
    %v3246 = vlaneseq
    %v3247 = vshrl.u32 %v3246, 7
    %v3248 = vsub.s32 4, %v3247
    %v3249 = vrot.slane %v3102, %v3248
    %v3250 = vmul.f32 %v3232, %v3237
    %v3251 = vmul.f32 %v3232, %v3241
    %v3252 = vmul.f32 %v3232, %v3245
    %v3253 = vmul.f32 %v3232, %v3249
    %v3254 = vadd.f32 %v3223, %v3250
    %v3255 = vadd.f32 %v3224, %v3251
    %v3256 = vadd.f32 %v3225, %v3252
    %v3257 = vadd.f32 %v3226, %v3253
    %s3258 = scalar_lea.vmem [#allocation4], 212
    %v3259 = vld [vmem:[%s3258] sm:$0xf]
    %3261 = vset.pattern.permute.xlu0 0
    %3262 = vperm.xlu0 %3261, %v3259
    %v3263 = vpop.permute.xlu0 %3262
    %v3265 = vlaneseq
    %v3266 = vshrl.u32 %v3265, 7
    %v3267 = vsub.s32 5, %v3266
    %v3268 = vrot.slane %v3099, %v3267
    %v3269 = vlaneseq
    %v3270 = vshrl.u32 %v3269, 7
    %v3271 = vsub.s32 5, %v3270
    %v3272 = vrot.slane %v3100, %v3271
    %v3273 = vlaneseq
    %v3274 = vshrl.u32 %v3273, 7
    %v3275 = vsub.s32 5, %v3274
    %v3276 = vrot.slane %v3101, %v3275
    %v3277 = vlaneseq
    %v3278 = vshrl.u32 %v3277, 7
    %v3279 = vsub.s32 5, %v3278
    %v3280 = vrot.slane %v3102, %v3279
    %v3281 = vmul.f32 %v3263, %v3268
    %v3282 = vmul.f32 %v3263, %v3272
    %v3283 = vmul.f32 %v3263, %v3276
    %v3284 = vmul.f32 %v3263, %v3280
    %v3285 = vadd.f32 %v3254, %v3281
    %v3286 = vadd.f32 %v3255, %v3282
    %v3287 = vadd.f32 %v3256, %v3283
    %v3288 = vadd.f32 %v3257, %v3284
    %s3289 = scalar_lea.vmem [#allocation4], 216
    %v3290 = vld [vmem:[%s3289] sm:$0xf]
    %3292 = vset.pattern.permute.xlu0 0
    %3293 = vperm.xlu0 %3292, %v3290
    %v3294 = vpop.permute.xlu0 %3293
    %v3296 = vlaneseq
    %v3297 = vshrl.u32 %v3296, 7
    %v3298 = vsub.s32 6, %v3297
    %v3299 = vrot.slane %v3099, %v3298
    %v3300 = vlaneseq
    %v3301 = vshrl.u32 %v3300, 7
    %v3302 = vsub.s32 6, %v3301
    %v3303 = vrot.slane %v3100, %v3302
    %v3304 = vlaneseq
    %v3305 = vshrl.u32 %v3304, 7
    %v3306 = vsub.s32 6, %v3305
    %v3307 = vrot.slane %v3101, %v3306
    %v3308 = vlaneseq
    %v3309 = vshrl.u32 %v3308, 7
    %v3310 = vsub.s32 6, %v3309
    %v3311 = vrot.slane %v3102, %v3310
    %v3312 = vmul.f32 %v3294, %v3299
    %v3313 = vmul.f32 %v3294, %v3303
    %v3314 = vmul.f32 %v3294, %v3307
    %v3315 = vmul.f32 %v3294, %v3311
    %v3316 = vadd.f32 %v3285, %v3312
    %v3317 = vadd.f32 %v3286, %v3313
    %v3318 = vadd.f32 %v3287, %v3314
    %v3319 = vadd.f32 %v3288, %v3315
    %s3320 = scalar_lea.vmem [#allocation4], 220
    %v3321 = vld [vmem:[%s3320] sm:$0xf]
    %3323 = vset.pattern.permute.xlu0 0
    %3324 = vperm.xlu0 %3323, %v3321
    %v3325 = vpop.permute.xlu0 %3324
    %v3327 = vlaneseq
    %v3328 = vshrl.u32 %v3327, 7
    %v3329 = vsub.s32 7, %v3328
    %v3330 = vrot.slane %v3099, %v3329
    %v3331 = vlaneseq
    %v3332 = vshrl.u32 %v3331, 7
    %v3333 = vsub.s32 7, %v3332
    %v3334 = vrot.slane %v3100, %v3333
    %v3335 = vlaneseq
    %v3336 = vshrl.u32 %v3335, 7
    %v3337 = vsub.s32 7, %v3336
    %v3338 = vrot.slane %v3101, %v3337
    %v3339 = vlaneseq
    %v3340 = vshrl.u32 %v3339, 7
    %v3341 = vsub.s32 7, %v3340
    %v3342 = vrot.slane %v3102, %v3341
    %v3343 = vmul.f32 %v3325, %v3330
    %v3344 = vmul.f32 %v3325, %v3334
    %v3345 = vmul.f32 %v3325, %v3338
    %v3346 = vmul.f32 %v3325, %v3342
    %v3347 = vadd.f32 %v3316, %v3343
    %v3348 = vadd.f32 %v3317, %v3344
    %v3349 = vadd.f32 %v3318, %v3345
    %v3350 = vadd.f32 %v3319, %v3346
    %3351 = vrot.lane.b32.xlu0 %v1510, 112
    %v3352 = vpop.permute.xlu0 %3351
    %3353 = vrot.lane.b32.xlu0 %v1512, 112
    %v3354 = vpop.permute.xlu0 %3353
    %3355 = vrot.lane.b32.xlu0 %v1511, 112
    %v3356 = vpop.permute.xlu0 %3355
    %3357 = vrot.lane.b32.xlu0 %v1513, 112
    %v3358 = vpop.permute.xlu0 %3357
    %v3359 = vsel %vm1220, %v3352, %v3356
    %v3360 = vsel %vm1220, %v3354, %v3358
    %v3361 = vsel %vm1220, %v3356, %v3352
    %v3362 = vsel %vm1220, %v3358, %v3354
    %v3363 = vsel %vm1227, %v3359, 0.0
    %v3364 = vsel %vm1228, %v3361, 0.0
    %v3365 = vsel %vm1227, %v3360, 0.0
    %v3366 = vsel %vm1228, %v3362, 0.0
    %s3367 = scalar_lea.vmem [#allocation4], 224
    %v3368 = vld [vmem:[%s3367] sm:$0xf]
    %3370 = vset.pattern.permute.xlu0 0
    %3371 = vperm.xlu0 %3370, %v3368
    %v3372 = vpop.permute.xlu0 %3371
    %v3374 = vlaneseq
    %v3375 = vshrl.u32 %v3374, 7
    %v3376 = vsub.s32 0, %v3375
    %v3377 = vrot.slane %v3363, %v3376
    %v3378 = vlaneseq
    %v3379 = vshrl.u32 %v3378, 7
    %v3380 = vsub.s32 0, %v3379
    %v3381 = vrot.slane %v3364, %v3380
    %v3382 = vlaneseq
    %v3383 = vshrl.u32 %v3382, 7
    %v3384 = vsub.s32 0, %v3383
    %v3385 = vrot.slane %v3365, %v3384
    %v3386 = vlaneseq
    %v3387 = vshrl.u32 %v3386, 7
    %v3388 = vsub.s32 0, %v3387
    %v3389 = vrot.slane %v3366, %v3388
    %v3390 = vmul.f32 %v3372, %v3377
    %v3391 = vmul.f32 %v3372, %v3381
    %v3392 = vmul.f32 %v3372, %v3385
    %v3393 = vmul.f32 %v3372, %v3389
    %v3394 = vadd.f32 %v3347, %v3390
    %v3395 = vadd.f32 %v3348, %v3391
    %v3396 = vadd.f32 %v3349, %v3392
    %v3397 = vadd.f32 %v3350, %v3393
    %s3398 = scalar_lea.vmem [#allocation4], 228
    %v3399 = vld [vmem:[%s3398] sm:$0xf]
    %3401 = vset.pattern.permute.xlu0 0
    %3402 = vperm.xlu0 %3401, %v3399
    %v3403 = vpop.permute.xlu0 %3402
    %v3405 = vlaneseq
    %v3406 = vshrl.u32 %v3405, 7
    %v3407 = vsub.s32 1, %v3406
    %v3408 = vrot.slane %v3363, %v3407
    %v3409 = vlaneseq
    %v3410 = vshrl.u32 %v3409, 7
    %v3411 = vsub.s32 1, %v3410
    %v3412 = vrot.slane %v3364, %v3411
    %v3413 = vlaneseq
    %v3414 = vshrl.u32 %v3413, 7
    %v3415 = vsub.s32 1, %v3414
    %v3416 = vrot.slane %v3365, %v3415
    %v3417 = vlaneseq
    %v3418 = vshrl.u32 %v3417, 7
    %v3419 = vsub.s32 1, %v3418
    %v3420 = vrot.slane %v3366, %v3419
    %v3421 = vmul.f32 %v3403, %v3408
    %v3422 = vmul.f32 %v3403, %v3412
    %v3423 = vmul.f32 %v3403, %v3416
    %v3424 = vmul.f32 %v3403, %v3420
    %v3425 = vadd.f32 %v3394, %v3421
    %v3426 = vadd.f32 %v3395, %v3422
    %v3427 = vadd.f32 %v3396, %v3423
    %v3428 = vadd.f32 %v3397, %v3424
    %s3429 = scalar_lea.vmem [#allocation4], 232
    %v3430 = vld [vmem:[%s3429] sm:$0xf]
    %3432 = vset.pattern.permute.xlu0 0
    %3433 = vperm.xlu0 %3432, %v3430
    %v3434 = vpop.permute.xlu0 %3433
    %v3436 = vlaneseq
    %v3437 = vshrl.u32 %v3436, 7
    %v3438 = vsub.s32 2, %v3437
    %v3439 = vrot.slane %v3363, %v3438
    %v3440 = vlaneseq
    %v3441 = vshrl.u32 %v3440, 7
    %v3442 = vsub.s32 2, %v3441
    %v3443 = vrot.slane %v3364, %v3442
    %v3444 = vlaneseq
    %v3445 = vshrl.u32 %v3444, 7
    %v3446 = vsub.s32 2, %v3445
    %v3447 = vrot.slane %v3365, %v3446
    %v3448 = vlaneseq
    %v3449 = vshrl.u32 %v3448, 7
    %v3450 = vsub.s32 2, %v3449
    %v3451 = vrot.slane %v3366, %v3450
    %v3452 = vmul.f32 %v3434, %v3439
    %v3453 = vmul.f32 %v3434, %v3443
    %v3454 = vmul.f32 %v3434, %v3447
    %v3455 = vmul.f32 %v3434, %v3451
    %v3456 = vadd.f32 %v3425, %v3452
    %v3457 = vadd.f32 %v3426, %v3453
    %v3458 = vadd.f32 %v3427, %v3454
    %v3459 = vadd.f32 %v3428, %v3455
    %s3460 = scalar_lea.vmem [#allocation4], 236
    %v3461 = vld [vmem:[%s3460] sm:$0xf]
    %3463 = vset.pattern.permute.xlu0 0
    %3464 = vperm.xlu0 %3463, %v3461
    %v3465 = vpop.permute.xlu0 %3464
    %v3467 = vlaneseq
    %v3468 = vshrl.u32 %v3467, 7
    %v3469 = vsub.s32 3, %v3468
    %v3470 = vrot.slane %v3363, %v3469
    %v3471 = vlaneseq
    %v3472 = vshrl.u32 %v3471, 7
    %v3473 = vsub.s32 3, %v3472
    %v3474 = vrot.slane %v3364, %v3473
    %v3475 = vlaneseq
    %v3476 = vshrl.u32 %v3475, 7
    %v3477 = vsub.s32 3, %v3476
    %v3478 = vrot.slane %v3365, %v3477
    %v3479 = vlaneseq
    %v3480 = vshrl.u32 %v3479, 7
    %v3481 = vsub.s32 3, %v3480
    %v3482 = vrot.slane %v3366, %v3481
    %v3483 = vmul.f32 %v3465, %v3470
    %v3484 = vmul.f32 %v3465, %v3474
    %v3485 = vmul.f32 %v3465, %v3478
    %v3486 = vmul.f32 %v3465, %v3482
    %v3487 = vadd.f32 %v3456, %v3483
    %v3488 = vadd.f32 %v3457, %v3484
    %v3489 = vadd.f32 %v3458, %v3485
    %v3490 = vadd.f32 %v3459, %v3486
    %s3491 = scalar_lea.vmem [#allocation4], 240
    %v3492 = vld [vmem:[%s3491] sm:$0xf]
    %3494 = vset.pattern.permute.xlu0 0
    %3495 = vperm.xlu0 %3494, %v3492
    %v3496 = vpop.permute.xlu0 %3495
    %v3498 = vlaneseq
    %v3499 = vshrl.u32 %v3498, 7
    %v3500 = vsub.s32 4, %v3499
    %v3501 = vrot.slane %v3363, %v3500
    %v3502 = vlaneseq
    %v3503 = vshrl.u32 %v3502, 7
    %v3504 = vsub.s32 4, %v3503
    %v3505 = vrot.slane %v3364, %v3504
    %v3506 = vlaneseq
    %v3507 = vshrl.u32 %v3506, 7
    %v3508 = vsub.s32 4, %v3507
    %v3509 = vrot.slane %v3365, %v3508
    %v3510 = vlaneseq
    %v3511 = vshrl.u32 %v3510, 7
    %v3512 = vsub.s32 4, %v3511
    %v3513 = vrot.slane %v3366, %v3512
    %v3514 = vmul.f32 %v3496, %v3501
    %v3515 = vmul.f32 %v3496, %v3505
    %v3516 = vmul.f32 %v3496, %v3509
    %v3517 = vmul.f32 %v3496, %v3513
    %v3518 = vadd.f32 %v3487, %v3514
    %v3519 = vadd.f32 %v3488, %v3515
    %v3520 = vadd.f32 %v3489, %v3516
    %v3521 = vadd.f32 %v3490, %v3517
    %s3522 = scalar_lea.vmem [#allocation4], 244
    %v3523 = vld [vmem:[%s3522] sm:$0xf]
    %3525 = vset.pattern.permute.xlu0 0
    %3526 = vperm.xlu0 %3525, %v3523
    %v3527 = vpop.permute.xlu0 %3526
    %v3529 = vlaneseq
    %v3530 = vshrl.u32 %v3529, 7
    %v3531 = vsub.s32 5, %v3530
    %v3532 = vrot.slane %v3363, %v3531
    %v3533 = vlaneseq
    %v3534 = vshrl.u32 %v3533, 7
    %v3535 = vsub.s32 5, %v3534
    %v3536 = vrot.slane %v3364, %v3535
    %v3537 = vlaneseq
    %v3538 = vshrl.u32 %v3537, 7
    %v3539 = vsub.s32 5, %v3538
    %v3540 = vrot.slane %v3365, %v3539
    %v3541 = vlaneseq
    %v3542 = vshrl.u32 %v3541, 7
    %v3543 = vsub.s32 5, %v3542
    %v3544 = vrot.slane %v3366, %v3543
    %v3545 = vmul.f32 %v3527, %v3532
    %v3546 = vmul.f32 %v3527, %v3536
    %v3547 = vmul.f32 %v3527, %v3540
    %v3548 = vmul.f32 %v3527, %v3544
    %v3549 = vadd.f32 %v3518, %v3545
    %v3550 = vadd.f32 %v3519, %v3546
    %v3551 = vadd.f32 %v3520, %v3547
    %v3552 = vadd.f32 %v3521, %v3548
    %s3553 = scalar_lea.vmem [#allocation4], 248
    %v3554 = vld [vmem:[%s3553] sm:$0xf]
    %3556 = vset.pattern.permute.xlu0 0
    %3557 = vperm.xlu0 %3556, %v3554
    %v3558 = vpop.permute.xlu0 %3557
    %v3560 = vlaneseq
    %v3561 = vshrl.u32 %v3560, 7
    %v3562 = vsub.s32 6, %v3561
    %v3563 = vrot.slane %v3363, %v3562
    %v3564 = vlaneseq
    %v3565 = vshrl.u32 %v3564, 7
    %v3566 = vsub.s32 6, %v3565
    %v3567 = vrot.slane %v3364, %v3566
    %v3568 = vlaneseq
    %v3569 = vshrl.u32 %v3568, 7
    %v3570 = vsub.s32 6, %v3569
    %v3571 = vrot.slane %v3365, %v3570
    %v3572 = vlaneseq
    %v3573 = vshrl.u32 %v3572, 7
    %v3574 = vsub.s32 6, %v3573
    %v3575 = vrot.slane %v3366, %v3574
    %v3576 = vmul.f32 %v3558, %v3563
    %v3577 = vmul.f32 %v3558, %v3567
    %v3578 = vmul.f32 %v3558, %v3571
    %v3579 = vmul.f32 %v3558, %v3575
    %v3580 = vadd.f32 %v3549, %v3576
    %v3581 = vadd.f32 %v3550, %v3577
    %v3582 = vadd.f32 %v3551, %v3578
    %v3583 = vadd.f32 %v3552, %v3579
    %s3584 = scalar_lea.vmem [#allocation4], 252
    %v3585 = vld [vmem:[%s3584] sm:$0xf]
    %3587 = vset.pattern.permute.xlu0 0
    %3588 = vperm.xlu0 %3587, %v3585
    %v3589 = vpop.permute.xlu0 %3588
    %v3591 = vlaneseq
    %v3592 = vshrl.u32 %v3591, 7
    %v3593 = vsub.s32 7, %v3592
    %v3594 = vrot.slane %v3363, %v3593
    %v3595 = vlaneseq
    %v3596 = vshrl.u32 %v3595, 7
    %v3597 = vsub.s32 7, %v3596
    %v3598 = vrot.slane %v3364, %v3597
    %v3599 = vlaneseq
    %v3600 = vshrl.u32 %v3599, 7
    %v3601 = vsub.s32 7, %v3600
    %v3602 = vrot.slane %v3365, %v3601
    %v3603 = vlaneseq
    %v3604 = vshrl.u32 %v3603, 7
    %v3605 = vsub.s32 7, %v3604
    %v3606 = vrot.slane %v3366, %v3605
    %v3607 = vmul.f32 %v3589, %v3594
    %v3608 = vmul.f32 %v3589, %v3598
    %v3609 = vmul.f32 %v3589, %v3602
    %v3610 = vmul.f32 %v3589, %v3606
    %v3611 = vadd.f32 %v3580, %v3607
    %v3612 = vadd.f32 %v3581, %v3608
    %v3613 = vadd.f32 %v3582, %v3609
    %v3614 = vadd.f32 %v3583, %v3610
    %3615 = vrot.lane.b32.xlu0 %v1510, 111
    %v3616 = vpop.permute.xlu0 %3615
    %3617 = vrot.lane.b32.xlu0 %v1512, 111
    %v3618 = vpop.permute.xlu0 %3617
    %3619 = vrot.lane.b32.xlu0 %v1511, 111
    %v3620 = vpop.permute.xlu0 %3619
    %3621 = vrot.lane.b32.xlu0 %v1513, 111
    %v3622 = vpop.permute.xlu0 %3621
    %v3623 = vsel %vm1365, %v3616, %v3620
    %v3624 = vsel %vm1365, %v3618, %v3622
    %v3625 = vsel %vm1365, %v3620, %v3616
    %v3626 = vsel %vm1365, %v3622, %v3618
    %v3627 = vsel %vm1372, %v3623, 0.0
    %v3628 = vsel %vm1373, %v3625, 0.0
    %v3629 = vsel %vm1372, %v3624, 0.0
    %v3630 = vsel %vm1373, %v3626, 0.0
    %s3631 = scalar_lea.vmem [#allocation4], 256
    %v3632 = vld [vmem:[%s3631] sm:$0xf]
    %3634 = vset.pattern.permute.xlu0 0
    %3635 = vperm.xlu0 %3634, %v3632
    %v3636 = vpop.permute.xlu0 %3635
    %v3638 = vlaneseq
    %v3639 = vshrl.u32 %v3638, 7
    %v3640 = vsub.s32 0, %v3639
    %v3641 = vrot.slane %v3627, %v3640
    %v3642 = vlaneseq
    %v3643 = vshrl.u32 %v3642, 7
    %v3644 = vsub.s32 0, %v3643
    %v3645 = vrot.slane %v3628, %v3644
    %v3646 = vlaneseq
    %v3647 = vshrl.u32 %v3646, 7
    %v3648 = vsub.s32 0, %v3647
    %v3649 = vrot.slane %v3629, %v3648
    %v3650 = vlaneseq
    %v3651 = vshrl.u32 %v3650, 7
    %v3652 = vsub.s32 0, %v3651
    %v3653 = vrot.slane %v3630, %v3652
    %v3654 = vmul.f32 %v3636, %v3641
    %v3655 = vmul.f32 %v3636, %v3645
    %v3656 = vmul.f32 %v3636, %v3649
    %v3657 = vmul.f32 %v3636, %v3653
    %v3658 = vadd.f32 %v3611, %v3654
    %v3659 = vadd.f32 %v3612, %v3655
    %v3660 = vadd.f32 %v3613, %v3656
    %v3661 = vadd.f32 %v3614, %v3657
    %s3662 = scalar_lea.vmem [#allocation4], 260
    %v3663 = vld [vmem:[%s3662] sm:$0xf]
    %3665 = vset.pattern.permute.xlu0 0
    %3666 = vperm.xlu0 %3665, %v3663
    %v3667 = vpop.permute.xlu0 %3666
    %v3669 = vlaneseq
    %v3670 = vshrl.u32 %v3669, 7
    %v3671 = vsub.s32 1, %v3670
    %v3672 = vrot.slane %v3627, %v3671
    %v3673 = vlaneseq
    %v3674 = vshrl.u32 %v3673, 7
    %v3675 = vsub.s32 1, %v3674
    %v3676 = vrot.slane %v3628, %v3675
    %v3677 = vlaneseq
    %v3678 = vshrl.u32 %v3677, 7
    %v3679 = vsub.s32 1, %v3678
    %v3680 = vrot.slane %v3629, %v3679
    %v3681 = vlaneseq
    %v3682 = vshrl.u32 %v3681, 7
    %v3683 = vsub.s32 1, %v3682
    %v3684 = vrot.slane %v3630, %v3683
    %v3685 = vmul.f32 %v3667, %v3672
    %v3686 = vmul.f32 %v3667, %v3676
    %v3687 = vmul.f32 %v3667, %v3680
    %v3688 = vmul.f32 %v3667, %v3684
    %v3689 = vadd.f32 %v3658, %v3685
    %v3690 = vadd.f32 %v3659, %v3686
    %v3691 = vadd.f32 %v3660, %v3687
    %v3692 = vadd.f32 %v3661, %v3688
    %s3693 = scalar_lea.vmem [#allocation4], 264
    %v3694 = vld [vmem:[%s3693] sm:$0xf]
    %3696 = vset.pattern.permute.xlu0 0
    %3697 = vperm.xlu0 %3696, %v3694
    %v3698 = vpop.permute.xlu0 %3697
    %v3700 = vlaneseq
    %v3701 = vshrl.u32 %v3700, 7
    %v3702 = vsub.s32 2, %v3701
    %v3703 = vrot.slane %v3627, %v3702
    %v3704 = vlaneseq
    %v3705 = vshrl.u32 %v3704, 7
    %v3706 = vsub.s32 2, %v3705
    %v3707 = vrot.slane %v3628, %v3706
    %v3708 = vlaneseq
    %v3709 = vshrl.u32 %v3708, 7
    %v3710 = vsub.s32 2, %v3709
    %v3711 = vrot.slane %v3629, %v3710
    %v3712 = vlaneseq
    %v3713 = vshrl.u32 %v3712, 7
    %v3714 = vsub.s32 2, %v3713
    %v3715 = vrot.slane %v3630, %v3714
    %v3716 = vmul.f32 %v3698, %v3703
    %v3717 = vmul.f32 %v3698, %v3707
    %v3718 = vmul.f32 %v3698, %v3711
    %v3719 = vmul.f32 %v3698, %v3715
    %v3720 = vadd.f32 %v3689, %v3716
    %v3721 = vadd.f32 %v3690, %v3717
    %v3722 = vadd.f32 %v3691, %v3718
    %v3723 = vadd.f32 %v3692, %v3719
    %s3724 = scalar_lea.vmem [#allocation4], 268
    %v3725 = vld [vmem:[%s3724] sm:$0xf]
    %3727 = vset.pattern.permute.xlu0 0
    %3728 = vperm.xlu0 %3727, %v3725
    %v3729 = vpop.permute.xlu0 %3728
    %v3731 = vlaneseq
    %v3732 = vshrl.u32 %v3731, 7
    %v3733 = vsub.s32 3, %v3732
    %v3734 = vrot.slane %v3627, %v3733
    %v3735 = vlaneseq
    %v3736 = vshrl.u32 %v3735, 7
    %v3737 = vsub.s32 3, %v3736
    %v3738 = vrot.slane %v3628, %v3737
    %v3739 = vlaneseq
    %v3740 = vshrl.u32 %v3739, 7
    %v3741 = vsub.s32 3, %v3740
    %v3742 = vrot.slane %v3629, %v3741
    %v3743 = vlaneseq
    %v3744 = vshrl.u32 %v3743, 7
    %v3745 = vsub.s32 3, %v3744
    %v3746 = vrot.slane %v3630, %v3745
    %v3747 = vmul.f32 %v3729, %v3734
    %v3748 = vmul.f32 %v3729, %v3738
    %v3749 = vmul.f32 %v3729, %v3742
    %v3750 = vmul.f32 %v3729, %v3746
    %v3751 = vadd.f32 %v3720, %v3747
    %v3752 = vadd.f32 %v3721, %v3748
    %v3753 = vadd.f32 %v3722, %v3749
    %v3754 = vadd.f32 %v3723, %v3750
    %s3755 = scalar_lea.vmem [#allocation4], 272
    %v3756 = vld [vmem:[%s3755] sm:$0xf]
    %3758 = vset.pattern.permute.xlu0 0
    %3759 = vperm.xlu0 %3758, %v3756
    %v3760 = vpop.permute.xlu0 %3759
    %v3762 = vlaneseq
    %v3763 = vshrl.u32 %v3762, 7
    %v3764 = vsub.s32 4, %v3763
    %v3765 = vrot.slane %v3627, %v3764
    %v3766 = vlaneseq
    %v3767 = vshrl.u32 %v3766, 7
    %v3768 = vsub.s32 4, %v3767
    %v3769 = vrot.slane %v3628, %v3768
    %v3770 = vlaneseq
    %v3771 = vshrl.u32 %v3770, 7
    %v3772 = vsub.s32 4, %v3771
    %v3773 = vrot.slane %v3629, %v3772
    %v3774 = vlaneseq
    %v3775 = vshrl.u32 %v3774, 7
    %v3776 = vsub.s32 4, %v3775
    %v3777 = vrot.slane %v3630, %v3776
    %v3778 = vmul.f32 %v3760, %v3765
    %v3779 = vmul.f32 %v3760, %v3769
    %v3780 = vmul.f32 %v3760, %v3773
    %v3781 = vmul.f32 %v3760, %v3777
    %v3782 = vadd.f32 %v3751, %v3778
    %v3783 = vadd.f32 %v3752, %v3779
    %v3784 = vadd.f32 %v3753, %v3780
    %v3785 = vadd.f32 %v3754, %v3781
    %s3786 = scalar_lea.vmem [#allocation4], 276
    %v3787 = vld [vmem:[%s3786] sm:$0xf]
    %3789 = vset.pattern.permute.xlu0 0
    %3790 = vperm.xlu0 %3789, %v3787
    %v3791 = vpop.permute.xlu0 %3790
    %v3793 = vlaneseq
    %v3794 = vshrl.u32 %v3793, 7
    %v3795 = vsub.s32 5, %v3794
    %v3796 = vrot.slane %v3627, %v3795
    %v3797 = vlaneseq
    %v3798 = vshrl.u32 %v3797, 7
    %v3799 = vsub.s32 5, %v3798
    %v3800 = vrot.slane %v3628, %v3799
    %v3801 = vlaneseq
    %v3802 = vshrl.u32 %v3801, 7
    %v3803 = vsub.s32 5, %v3802
    %v3804 = vrot.slane %v3629, %v3803
    %v3805 = vlaneseq
    %v3806 = vshrl.u32 %v3805, 7
    %v3807 = vsub.s32 5, %v3806
    %v3808 = vrot.slane %v3630, %v3807
    %v3809 = vmul.f32 %v3791, %v3796
    %v3810 = vmul.f32 %v3791, %v3800
    %v3811 = vmul.f32 %v3791, %v3804
    %v3812 = vmul.f32 %v3791, %v3808
    %v3813 = vadd.f32 %v3782, %v3809
    %v3814 = vadd.f32 %v3783, %v3810
    %v3815 = vadd.f32 %v3784, %v3811
    %v3816 = vadd.f32 %v3785, %v3812
    %s3817 = scalar_lea.vmem [#allocation4], 280
    %v3818 = vld [vmem:[%s3817] sm:$0xf]
    %3820 = vset.pattern.permute.xlu0 0
    %3821 = vperm.xlu0 %3820, %v3818
    %v3822 = vpop.permute.xlu0 %3821
    %v3824 = vlaneseq
    %v3825 = vshrl.u32 %v3824, 7
    %v3826 = vsub.s32 6, %v3825
    %v3827 = vrot.slane %v3627, %v3826
    %v3828 = vlaneseq
    %v3829 = vshrl.u32 %v3828, 7
    %v3830 = vsub.s32 6, %v3829
    %v3831 = vrot.slane %v3628, %v3830
    %v3832 = vlaneseq
    %v3833 = vshrl.u32 %v3832, 7
    %v3834 = vsub.s32 6, %v3833
    %v3835 = vrot.slane %v3629, %v3834
    %v3836 = vlaneseq
    %v3837 = vshrl.u32 %v3836, 7
    %v3838 = vsub.s32 6, %v3837
    %v3839 = vrot.slane %v3630, %v3838
    %v3840 = vmul.f32 %v3822, %v3827
    %v3841 = vmul.f32 %v3822, %v3831
    %v3842 = vmul.f32 %v3822, %v3835
    %v3843 = vmul.f32 %v3822, %v3839
    %v3844 = vadd.f32 %v3813, %v3840
    %v3845 = vadd.f32 %v3814, %v3841
    %v3846 = vadd.f32 %v3815, %v3842
    %v3847 = vadd.f32 %v3816, %v3843
    %s3848 = scalar_lea.vmem [#allocation4], 284
    %v3849 = vld [vmem:[%s3848] sm:$0xf]
    %3851 = vset.pattern.permute.xlu0 0
    %3852 = vperm.xlu0 %3851, %v3849
    %v3853 = vpop.permute.xlu0 %3852
    %v3855 = vlaneseq
    %v3856 = vshrl.u32 %v3855, 7
    %v3857 = vsub.s32 7, %v3856
    %v3858 = vrot.slane %v3627, %v3857
    %v3859 = vlaneseq
    %v3860 = vshrl.u32 %v3859, 7
    %v3861 = vsub.s32 7, %v3860
    %v3862 = vrot.slane %v3628, %v3861
    %v3863 = vlaneseq
    %v3864 = vshrl.u32 %v3863, 7
    %v3865 = vsub.s32 7, %v3864
    %v3866 = vrot.slane %v3629, %v3865
    %v3867 = vlaneseq
    %v3868 = vshrl.u32 %v3867, 7
    %v3869 = vsub.s32 7, %v3868
    %v3870 = vrot.slane %v3630, %v3869
    %v3871 = vmul.f32 %v3853, %v3858
    %v3872 = vmul.f32 %v3853, %v3862
    %v3873 = vmul.f32 %v3853, %v3866
    %v3874 = vmul.f32 %v3853, %v3870
    %v3875 = vadd.f32 %v3844, %v3871
    %v3876 = vadd.f32 %v3845, %v3872
    %v3877 = vadd.f32 %v3846, %v3873
    %v3878 = vadd.f32 %v3847, %v3874
    %v3879 = vadd.f32 %v2307, %v3083
    %v3880 = vadd.f32 %v2308, %v3084
    %v3881 = vadd.f32 %v2309, %v3085
    %v3882 = vadd.f32 %v2310, %v3086
    %v3883 = vadd.f32 %v3879, %v3875
    %v3884 = vadd.f32 %v3880, %v3876
    %v3885 = vadd.f32 %v3881, %v3877
    %v3886 = vadd.f32 %v3882, %v3878
    %v3887 = vmax.f32 %v3883, 0.0
    %v3888 = vmax.f32 %v3884, 0.0
    %v3889 = vmax.f32 %v3885, 0.0
    %v3890 = vmax.f32 %v3886, 0.0
    %v3895 = vcombine.low %v3887, %v3888
    %v3896 = vcombine.low %v3889, %v3890
    %3899 = vst [vmem:[%s5] sm:$0xff] %v3895
    %3900 = vst [vmem:[%s5 + $0x8] sm:$0xff] %v3896
    // Predicated region
    $region30: #{custom_model_forward.1} parent=1 // pred_check
      _
    $region31: #{custom_model_forward.1} parent=1 // pred_check_branch
      %3902 = sbr.rel (0) target = $region33
    $region32: #{custom_model_forward.1} parent=1 // pred_region
      _
    $region33: #{custom_model_forward.1} parent=1 // pred_fallthru
      _
    // Predicated region
    $region34: #{custom_model_forward.1} parent=1 // pred_check
      _
    $region35: #{custom_model_forward.1} parent=1 // pred_check_branch
      %3904 = sbr.rel (0) target = $region37
    $region36: #{custom_model_forward.1} parent=1 // pred_region
      _
    $region37: #{custom_model_forward.1} parent=1 // pred_fallthru
      _
    %3905 = vsyncpa [#allocation3], 1
    %3906 = vsyncpa [#allocation5], 1

</llo_original>
